<compile_context>
chip_gen: v7x
topology: tpu7x:2x2x1
jax: 0.10.0
libtpu: 0.0.40
codegen_flags: <defaults>
</compile_context>

<pallas_src>
import functools

import jax
import jax.numpy as jnp
from jax.experimental import pallas as pl
from jax.experimental.pallas import tpu as pltpu

LN_EPS = 1e-6                      # timm ViT uses LayerNorm(eps=1e-6)
_FULL_K_MAX = 8192                 # any ViT K (<= 4*embed_dim) fits VMEM in bf16


def _round_up(x, m):
    return (x + m - 1) // m * m


def _vmem_limit_bytes():
    """~75% of physical VMEM, capped at 100 MiB (v5e/v6e: ~96 MiB, v7x: ~48 MiB)."""
    cap = 64 * 1024 * 1024
    try:
        info = pltpu.get_tpu_info()
        cap = int(getattr(info, "vmem_capacity_bytes", cap) or cap)
    except Exception:
        pass
    return int(min(cap - cap // 4, 100 * 1024 * 1024))


_VMEM_LIMIT = _vmem_limit_bytes()
_BIG_VMEM = _VMEM_LIMIT > 72 * 1024 * 1024   # 128-MiB gens (v5e/v6e) vs v7x (64 MiB)
_TM = 512 if _BIG_VMEM else 256              # token-row tile target
_TN = 4096 if _BIG_VMEM else 3072            # output-feature tile target (full-N for qkv/fc1)
_TK = 2048 if _BIG_VMEM else 1024            # only used when K > _FULL_K_MAX


def _pick_tile(dim, target, align, prefer=None):
    """Largest tile <= target that divides dim, preferring `prefer`-multiples
    (MXU-friendly 256 on v6e/v7x), falling back to `align`-multiples, then full dim."""
    if dim <= target:
        return dim
    steps = [prefer, align] if (prefer and prefer > align) else [align]
    for step in steps:
        t = (target // step) * step
        while t >= step:
            if dim % t == 0:
                return t
            t -= step
    return dim


# ---------------------------------------------------------------------------
# Exact-GELU (erf) lowering probe — fall back to tanh approximation if needed.
# ---------------------------------------------------------------------------

_EXACT_GELU = None


def _gelu_exact_ok():
    global _EXACT_GELU
    if _EXACT_GELU is None:
        try:
            def _k(x_ref, o_ref):
                o_ref[...] = jax.lax.erf(x_ref[...])
            probe = pl.pallas_call(
                _k, out_shape=jax.ShapeDtypeStruct((8, 128), jnp.float32))
            jax.jit(probe).lower(jnp.zeros((8, 128), jnp.float32)).compile()
            _EXACT_GELU = True
        except Exception:
            # TODO(synk): tanh-GELU fallback (~1e-3 off timm's exact erf nn.GELU).
            _EXACT_GELU = False
    return _EXACT_GELU


# ---------------------------------------------------------------------------
# GEMM with fused bias / GELU / residual / LayerNorm epilogue (full-K by default)
# ---------------------------------------------------------------------------

def _gemm_kernel(*refs, activation, gelu_exact, has_residual, with_ln, k_tiled):
    it = iter(refs)
    x_ref = next(it)
    w_ref = next(it)
    b_ref = next(it)
    res_ref = next(it) if has_residual else None
    g_ref = next(it) if with_ln else None
    bt_ref = next(it) if with_ln else None
    o_ref = next(it)
    ln_ref = next(it) if with_ln else None
    acc_ref = next(it) if k_tiled else None

    def epilogue(y):                       # y: f32
        y = y + b_ref[...].astype(jnp.float32)
        if activation == "gelu":
            y = jax.nn.gelu(y, approximate=not gelu_exact)
        if has_residual:
            y = y + res_ref[...].astype(jnp.float32)
        o_ref[...] = y.astype(o_ref.dtype)
        if with_ln:
            mean = jnp.mean(y, axis=-1, keepdims=True)
            var = jnp.mean((y - mean) ** 2, axis=-1, keepdims=True)
            xn = (y - mean) * jax.lax.rsqrt(var + LN_EPS)
            ln_ref[...] = (xn * g_ref[...].astype(jnp.float32)
                           + bt_ref[...].astype(jnp.float32)).astype(ln_ref.dtype)

    if not k_tiled:
        # bf16 x bf16 -> f32 on the MXU, single K step, no VMEM accumulator.
        epilogue(jnp.dot(x_ref[...], w_ref[...],
                         preferred_element_type=jnp.float32))
    else:
        @pl.when(pl.program_id(2) == 0)
        def _init():
            acc_ref[...] = jnp.zeros_like(acc_ref)

        acc_ref[...] += jnp.dot(x_ref[...], w_ref[...],
                                preferred_element_type=jnp.float32)

        @pl.when(pl.program_id(2) == pl.num_programs(2) - 1)
        def _finalize():
            epilogue(acc_ref[...])


def gemm(x, w, b, *, residual=None, ln=None, activation=None,
         out_dtype=None, ln_dtype=None, tm=None, tn=None, tk=None):
    """out = act(x @ w + b) [+ residual]; if ln=(gamma, beta) also returns
    LayerNorm(out) (cast to ln_dtype) as a second output."""
    M, K = x.shape
    K2, N = w.shape
    assert K == K2
    out_dtype = out_dtype or x.dtype
    ln_dtype = ln_dtype or x.dtype
    has_residual = residual is not None
    with_ln = ln is not None
    gelu_exact = _gelu_exact_ok() if activation == "gelu" else False

    tm = tm or _TM
    tn = N if with_ln else (tn or _TN)     # LN epilogue needs the full feature row
    bm = _pick_tile(M, tm, 8)
    bn = _pick_tile(N, tn, 128, prefer=256)
    bk = K if K <= _FULL_K_MAX else _pick_tile(K, tk or _TK, 128, prefer=256)
    k_tiled = bk != K

    if k_tiled:
        grid = (M // bm, N // bn, K // bk)
        x_map = lambda i, j, k: (i, k)
        w_map = lambda i, j, k: (k, j)
        o_map = lambda i, j, k: (i, j)
        row_map = lambda i, j, k: (0, j)
        sems = ("parallel", "parallel", "arbitrary")
        scratch = [pltpu.VMEM((bm, bn), jnp.float32)]
    else:
        grid = (M // bm, N // bn)
        x_map = lambda i, j: (i, 0)
        w_map = lambda i, j: (0, j)
        o_map = lambda i, j: (i, j)
        row_map = lambda i, j: (0, j)
        sems = ("parallel", "parallel")
        scratch = []

    in_specs = [
        pl.BlockSpec((bm, bk), x_map),
        pl.BlockSpec((bk, bn), w_map),
        pl.BlockSpec((1, bn), row_map),
    ]
    args = [x, w, b.reshape(1, N)]
    if has_residual:
        in_specs.append(pl.BlockSpec((bm, bn), o_map))
        args.append(residual)
    if with_ln:
        gamma, beta = ln
        in_specs.append(pl.BlockSpec((1, bn), row_map))
        in_specs.append(pl.BlockSpec((1, bn), row_map))
        args += [gamma.reshape(1, N), beta.reshape(1, N)]

    out_tile = pl.BlockSpec((bm, bn), o_map)
    if with_ln:
        out_shape = (jax.ShapeDtypeStruct((M, N), out_dtype),
                     jax.ShapeDtypeStruct((M, N), ln_dtype))
        out_specs = (out_tile, out_tile)
    else:
        out_shape = jax.ShapeDtypeStruct((M, N), out_dtype)
        out_specs = out_tile

    # Alias the residual stream onto the primary output (same shape & dtype).
    io_aliases = {}
    if has_residual and residual.shape == (M, N) and residual.dtype == jnp.dtype(out_dtype):
        io_aliases = {3: 0}

    bytes_accessed = (
        x.size * x.dtype.itemsize * (N // bn)        # x re-streamed per N tile
        + w.size * w.dtype.itemsize * (M // bm)      # w re-streamed per M tile
        + (residual.size * residual.dtype.itemsize if has_residual else 0)
        + M * N * jnp.dtype(out_dtype).itemsize
        + (M * N * jnp.dtype(ln_dtype).itemsize if with_ln else 0)
    )
    cost = pl.CostEstimate(
        flops=2 * M * N * K,
        transcendentals=(M * N if activation == "gelu" else 0),
        bytes_accessed=int(bytes_accessed),
    )

    return pl.pallas_call(
        functools.partial(_gemm_kernel, activation=activation,
                          gelu_exact=gelu_exact, has_residual=has_residual,
                          with_ln=with_ln, k_tiled=k_tiled),
        out_shape=out_shape,
        grid=grid,
        in_specs=in_specs,
        out_specs=out_specs,
        scratch_shapes=scratch,
        input_output_aliases=io_aliases,
        compiler_params=pltpu.CompilerParams(
            dimension_semantics=sems,
            vmem_limit_bytes=_VMEM_LIMIT,
        ),
        cost_estimate=cost,
    )(*args)


# ---------------------------------------------------------------------------
# Fused "embed assemble": patch tokens + pos-embed, cls row, padding, LayerNorm1
# Sequence layout per batch: [patch_0 .. patch_{N-1}, cls, zero-pad ...]
# ---------------------------------------------------------------------------

def _embed_ln_kernel(tok_ref, base_ref, g_ref, b_ref, seq_ref, h_ref, *, n_tok):
    g = g_ref[...].astype(jnp.float32)
    b = b_ref[...].astype(jnp.float32)

    def ln(v):
        mean = jnp.mean(v, axis=-1, keepdims=True)
        var = jnp.mean((v - mean) ** 2, axis=-1, keepdims=True)
        return (v - mean) * jax.lax.rsqrt(var + LN_EPS) * g + b

    sp = base_ref.shape[0]
    t = tok_ref[0].astype(jnp.float32) + base_ref[0:n_tok, :]   # patches + pos
    seq_ref[0, 0:n_tok, :] = t
    h_ref[0, 0:n_tok, :] = ln(t).astype(h_ref.dtype)
    rest = base_ref[n_tok:sp, :]                                # cls+pos row, zero pad
    seq_ref[0, n_tok:sp, :] = rest
    h_ref[0, n_tok:sp, :] = ln(rest).astype(h_ref.dtype)


def embed_assemble(tok, base, gamma, beta, *, ln_dtype=jnp.bfloat16):
    """tok: (B, N, D) patch embeddings; base: (Sp, D) = [pos[1:], cls+pos[0], 0-pad].
    Returns (seq_flat f32 (B*Sp, D), ln1(seq) in ln_dtype (B*Sp, D))."""
    B, N, D = tok.shape
    Sp = base.shape[0]
    seq, h = pl.pallas_call(
        functools.partial(_embed_ln_kernel, n_tok=N),
        out_shape=(jax.ShapeDtypeStruct((B, Sp, D), jnp.float32),
                   jax.ShapeDtypeStruct((B, Sp, D), ln_dtype)),
        grid=(B,),
        in_specs=[
            pl.BlockSpec((1, N, D), lambda b: (b, 0, 0)),
            pl.BlockSpec((Sp, D), lambda b: (0, 0)),
            pl.BlockSpec((1, D), lambda b: (0, 0)),
            pl.BlockSpec((1, D), lambda b: (0, 0)),
        ],
        out_specs=(pl.BlockSpec((1, Sp, D), lambda b: (b, 0, 0)),
                   pl.BlockSpec((1, Sp, D), lambda b: (b, 0, 0))),
        compiler_params=pltpu.CompilerParams(
            dimension_semantics=("parallel",),
            vmem_limit_bytes=_VMEM_LIMIT,
        ),
    )(tok, base, gamma.reshape(1, D), beta.reshape(1, D))
    return seq.reshape(B * Sp, D), h.reshape(B * Sp, D)


# ---------------------------------------------------------------------------
# Multi-head self-attention: grid over (batch, head), head-contiguous blocks.
# Softmax scale is folded into the q columns of qkv_w at init.
# ---------------------------------------------------------------------------

def _attention_kernel(qkv_ref, o_ref, *, s_valid):
    # qkv_ref block: (3, 1, 1, Sp, Dh) -> q/k/v are lane-dense (Sp, Dh) slabs.
    q = qkv_ref[0, 0, 0]
    k = qkv_ref[1, 0, 0]
    v = qkv_ref[2, 0, 0]
    sp = q.shape[0]

    s = jax.lax.dot_general(q, k, (((1,), (1,)), ((), ())),
                            preferred_element_type=jnp.float32)
    if s_valid < sp:
        key_ids = jax.lax.broadcasted_iota(jnp.int32, (sp, sp), 1)
        s = jnp.where(key_ids < s_valid, s, -1e30)      # mask padded keys (f32)
    s = s - jnp.max(s, axis=-1, keepdims=True)
    p = jnp.exp(s)
    p = p * pl.reciprocal(jnp.sum(p, axis=-1, keepdims=True), approx=True)
    o_ref[0, 0] = jnp.dot(p.astype(v.dtype), v,
                          preferred_element_type=jnp.float32).astype(o_ref.dtype)


def attention(qkv, *, s_valid):
    """qkv: (3, B, heads, Sp, Dh) head-contiguous; returns (B, heads, Sp, Dh)."""
    _, B, heads, Sp, Dh = qkv.shape
    cost = pl.CostEstimate(
        flops=4 * B * heads * Sp * Sp * Dh,
        transcendentals=B * heads * Sp * Sp,
        bytes_accessed=int(qkv.size * qkv.dtype.itemsize
                           + B * heads * Sp * Dh * qkv.dtype.itemsize),
    )
    return pl.pallas_call(
        functools.partial(_attention_kernel, s_valid=s_valid),
        out_shape=jax.ShapeDtypeStruct((B, heads, Sp, Dh), qkv.dtype),
        grid=(B, heads),
        in_specs=[pl.BlockSpec((3, 1, 1, Sp, Dh), lambda b, h: (0, b, h, 0, 0))],
        out_specs=pl.BlockSpec((1, 1, Sp, Dh), lambda b, h: (b, h, 0, 0)),
        compiler_params=pltpu.CompilerParams(
            dimension_semantics=("parallel", "parallel"),
            vmem_limit_bytes=_VMEM_LIMIT,
        ),
        cost_estimate=cost,
    )(qkv)


# ---------------------------------------------------------------------------
# Parameter init (deterministic, synthetic) and forward pass
# ---------------------------------------------------------------------------

def init_params(key, *, in_chans, img_size, patch_size, embed_dim, depth,
                num_heads, mlp_ratio=4.0):
    # TODO(synk): timm pretrained weights are not loadable here; synthetic init.
    # (Real timm qkv weights/biases would need the same [t,h,d]->[h,t,d] column
    # permutation and 1/sqrt(Dh) q-scale fold applied below.)
    D = embed_dim
    Dh = D // num_heads
    hidden = int(D * mlp_ratio)
    Kp = in_chans * patch_size * patch_size
    n_patches = (img_size // patch_size) ** 2
    S = n_patches + 1
    Sp = _round_up(S, 8)                 # token axis padded once to a sublane multiple
    mm = jnp.bfloat16                    # matmul operand dtype (MXU); epilogues stay f32

    def nrm(k, shape):
        return jax.random.normal(k, shape, jnp.float32) * 0.02

    keys = jax.random.split(key, 3 + depth)
    cls_token = nrm(keys[1], (1, D))
    pos_embed = nrm(keys[2], (S, D))
    # Fused embed constant: rows 0..N-1 = pos of patch tokens, row N = cls + pos[0],
    # rows N+1..Sp-1 = zero padding (masked in attention, dropped at the end).
    embed_base = jnp.concatenate(
        [pos_embed[1:], cls_token + pos_embed[:1],
         jnp.zeros((Sp - S, D), jnp.float32)], axis=0)

    params = {
        # Conv2d(C, D, kernel=P, stride=P) expressed as a (C*P*P, D) matmul weight.
        "patch_w": nrm(keys[0], (Kp, D)).astype(mm),
        "patch_b": jnp.zeros((D,), jnp.float32),
        "embed_base": embed_base,
        "norm_g": jnp.ones((D,), jnp.float32),
        "norm_b": jnp.zeros((D,), jnp.float32),
        "blocks": [],
    }
    scale = Dh ** -0.5
    for i in range(depth):
        bk = jax.random.split(keys[3 + i], 4)
        # Output-feature layout of qkv_w is permuted from timm's [t, h, d] to
        # head-major [h, t, d] so attention gets head-contiguous blocks; the
        # softmax 1/sqrt(Dh) scale is folded into the q columns.
        qkv_w = nrm(bk[0], (D, 3, num_heads, Dh))
        qkv_w = qkv_w.at[:, 0].multiply(scale)
        qkv_w = qkv_w.transpose(0, 2, 1, 3).reshape(D, 3 * D)
        params["blocks"].append({
            "ln1_g": jnp.ones((D,), jnp.float32),
            "ln1_b": jnp.zeros((D,), jnp.float32),
            "qkv_w": qkv_w.astype(mm),
            "qkv_b": jnp.zeros((3 * D,), jnp.float32),
            "proj_w": nrm(bk[1], (D, D)).astype(mm),
            "proj_b": jnp.zeros((D,), jnp.float32),
            "ln2_g": jnp.ones((D,), jnp.float32),
            "ln2_b": jnp.zeros((D,), jnp.float32),
            "fc1_w": nrm(bk[2], (D, hidden)).astype(mm),
            "fc1_b": jnp.zeros((hidden,), jnp.float32),
            "fc2_w": nrm(bk[3], (hidden, D)).astype(mm),
            "fc2_b": jnp.zeros((D,), jnp.float32),
        })
    return params


@functools.partial(jax.jit, static_argnames=("patch_size", "num_heads"))
def vit_feature_extractor(x, params, *, patch_size, num_heads):
    """Equivalent of ViTFeatureExtractor.forward: ViT features minus CLS token,
    reshaped to a (B, embed_dim, H/P, W/P) feature map."""
    B, C, H, W = x.shape
    P = patch_size
    D = params["patch_w"].shape[1]
    Hf, Wf = H // P, W // P
    N = Hf * Wf
    S = N + 1
    base = params["embed_base"]            # (Sp, D) f32
    Sp = base.shape[0]
    heads = num_heads
    Dh = D // heads

    # --- patch embedding (Conv2d k=P, s=P == unfold + GEMM), bf16 MXU operands ---
    patches = (
        x.reshape(B, C, Hf, P, Wf, P)
        .transpose(0, 2, 4, 1, 3, 5)                       # (B, Hf, Wf, C, P, P)
        .reshape(B * N, C * P * P)
    ).astype(jnp.bfloat16)
    tok = gemm(patches, params["patch_w"], params["patch_b"],
               out_dtype=jnp.float32).reshape(B, N, D)

    # --- fused: tokens + pos-embed, cls row, pad to Sp, LayerNorm of block 0 ---
    blk0 = params["blocks"][0]
    seq_flat, h = embed_assemble(tok, base, blk0["ln1_g"], blk0["ln1_b"])
    # seq_flat: (B*Sp, D) f32 residual stream;  h: (B*Sp, D) bf16 = LN1(seq)

    blocks = params["blocks"]
    depth = len(blocks)
    for i, blk in enumerate(blocks):
        # --- attention sub-block ---
        qkv = gemm(h, blk["qkv_w"], blk["qkv_b"])                    # (B*Sp, 3D) bf16
        qkv = (qkv.reshape(B, Sp, heads, 3, Dh)
                  .transpose(3, 0, 2, 1, 4))                         # (3, B, heads, Sp, Dh)
        attn = attention(qkv, s_valid=S)                             # (B, heads, Sp, Dh)
        attn = attn.transpose(0, 2, 1, 3).reshape(B * Sp, D)         # head-major features
        # proj GEMM + residual add + LN2 fused; residual aliased onto output 0
        seq_flat, h = gemm(attn, blk["proj_w"], blk["proj_b"],
                           residual=seq_flat, ln=(blk["ln2_g"], blk["ln2_b"]),
                           out_dtype=jnp.float32, ln_dtype=jnp.bfloat16)

        # --- MLP sub-block ---
        m = gemm(h, blk["fc1_w"], blk["fc1_b"], activation="gelu")   # (B*Sp, hidden) bf16
        if i + 1 < depth:
            next_ln = (blocks[i + 1]["ln1_g"], blocks[i + 1]["ln1_b"])
            nd = jnp.bfloat16
        else:
            next_ln = (params["norm_g"], params["norm_b"])           # final norm
            nd = jnp.float32
        # fc2 GEMM + residual add + next LN (or final norm) fused in the epilogue
        seq_flat, h = gemm(m, blk["fc2_w"], blk["fc2_b"],
                           residual=seq_flat, ln=next_ln,
                           out_dtype=jnp.float32, ln_dtype=nd)

    # h == norm(seq); patch tokens are rows 0..N-1, cls is row N, rest is padding.
    out = h.reshape(B, Sp, D)[:, :N, :]                              # (B, N, D) f32
    features = out.transpose(0, 2, 1).reshape(B, D, Hf, Wf)          # (B, D, Hf, Wf)
    return features


if __name__ == "__main__":
    # Small, ViT-consistent shapes: B=2, C=3, H=W=16, patch=4 -> 4x4 patch grid,
    # embed_dim=32, 4 heads, depth=2, mlp hidden=128.
    B, C, H, W = 2, 3, 16, 16
    PATCH, EMBED, HEADS, DEPTH = 4, 32, 4, 2

    root = jax.random.PRNGKey(0)
    k_x, k_p = jax.random.split(root)
    x = jax.random.normal(k_x, (B, C, H, W), jnp.float32)
    params = init_params(
        k_p, in_chans=C, img_size=H, patch_size=PATCH,
        embed_dim=EMBED, depth=DEPTH, num_heads=HEADS, mlp_ratio=4.0,
    )

    feats = vit_feature_extractor(x, params, patch_size=PATCH, num_heads=HEADS)
    feats = jax.block_until_ready(feats)

    assert feats.shape == (B, EMBED, H // PATCH, W // PATCH), feats.shape
    assert feats.dtype == jnp.float32
    assert bool(jnp.all(jnp.isfinite(feats)))
    print("KERNEL_OK")
</pallas_src>

<mosaic_0001>
module attributes {stable_mosaic.version = 11 : i64} {
  func.func @_gemm_kernel(%arg0: i32, %arg1: i32, %arg2: memref<32x48xbf16, #tpu.memory_space<vmem>>, %arg3: memref<48x32xbf16, #tpu.memory_space<vmem>>, %arg4: memref<1x32xf32, #tpu.memory_space<vmem>>, %arg5: memref<32x32xf32, #tpu.memory_space<vmem>>) attributes {dimension_semantics = [#tpu.dimension_semantics<parallel>, #tpu.dimension_semantics<parallel>], iteration_bounds = array<i64: 1, 1>, scalar_prefetch = 0 : i64, scratch_operands = 0 : i64, tpu.core_type = #tpu.core_type<tc>, window_params = [{transform_indices = @transform_0, window_bounds = array<i64: 32, 48>}, {transform_indices = @transform_1, window_bounds = array<i64: 48, 32>}, {transform_indices = @transform_2, window_bounds = array<i64: 1, 32>}, {transform_indices = @transform_3, window_bounds = array<i64: 32, 32>}]} {
    %c0 = arith.constant 0 : index
    %c0_0 = arith.constant 0 : index
    %0 = vector.load %arg2[%c0, %c0_0] : memref<32x48xbf16, #tpu.memory_space<vmem>>, vector<32x48xbf16>
    %c0_1 = arith.constant 0 : index
    %c0_2 = arith.constant 0 : index
    %1 = vector.load %arg3[%c0_1, %c0_2] : memref<48x32xbf16, #tpu.memory_space<vmem>>, vector<48x32xbf16>
    %cst = arith.constant dense<0.000000e+00> : vector<32x32xf32>
    %2 = tpu.matmul %0, %1, %cst {dimension_numbers = #tpu.dot_dimension_numbers<[1], [0], [0], [1], [0, 0, 1, 1], [], []>} : vector<32x48xbf16>, vector<48x32xbf16>, vector<32x32xf32> -> vector<32x32xf32>
    %c0_3 = arith.constant 0 : index
    %c0_4 = arith.constant 0 : index
    %3 = vector.load %arg4[%c0_3, %c0_4] : memref<1x32xf32, #tpu.memory_space<vmem>>, vector<1x32xf32>
    %4 = vector.broadcast %3 : vector<1x32xf32> to vector<32x32xf32>
    %5 = arith.addf %2, %4 : vector<32x32xf32>
    %c0_5 = arith.constant 0 : index
    %c0_6 = arith.constant 0 : index
    %6 = vector.load %arg5[%c0_5, %c0_6] : memref<32x32xf32, #tpu.memory_space<vmem>>, vector<32x32xf32>
    tpu.vector_store %arg5[%c0_5, %c0_6], %5 {strides = array<i32>} : memref<32x32xf32, #tpu.memory_space<vmem>>, vector<32x32xf32>,
    return
  }
  func.func @transform_0(%arg0: i32, %arg1: i32) -> (i32, i32) {
    %c0_i32 = arith.constant 0 : i32
    %c0_i32_0 = arith.constant 0 : i32
    return %arg0, %c0_i32 : i32, i32
  }
  func.func @transform_1(%arg0: i32, %arg1: i32) -> (i32, i32) {
    %c0_i32 = arith.constant 0 : i32
    %c0_i32_0 = arith.constant 0 : i32
    return %c0_i32, %arg1 : i32, i32
  }
  func.func @transform_2(%arg0: i32, %arg1: i32) -> (i32, i32) {
    %c0_i32 = arith.constant 0 : i32
    %c0_i32_0 = arith.constant 0 : i32
    return %c0_i32, %arg1 : i32, i32
  }
  func.func @transform_3(%arg0: i32, %arg1: i32) -> (i32, i32) {
    %c0_i32 = arith.constant 0 : i32
    return %arg0, %arg1 : i32, i32
  }
}

module attributes {stable_mosaic.version = 11 : i64} {
  func.func @_gemm_kernel(%arg0: i32, %arg1: i32, %arg2: memref<48x32xbf16, #tpu.memory_space<vmem>>, %arg3: memref<32x96xbf16, #tpu.memory_space<vmem>>, %arg4: memref<1x96xf32, #tpu.memory_space<vmem>>, %arg5: memref<48x96xbf16, #tpu.memory_space<vmem>>) attributes {dimension_semantics = [#tpu.dimension_semantics<parallel>, #tpu.dimension_semantics<parallel>], iteration_bounds = array<i64: 1, 1>, scalar_prefetch = 0 : i64, scratch_operands = 0 : i64, tpu.core_type = #tpu.core_type<tc>, window_params = [{transform_indices = @transform_0, window_bounds = array<i64: 48, 32>}, {transform_indices = @transform_1, window_bounds = array<i64: 32, 96>}, {transform_indices = @transform_2, window_bounds = array<i64: 1, 96>}, {transform_indices = @transform_3, window_bounds = array<i64: 48, 96>}]} {
    %c0 = arith.constant 0 : index
    %c0_0 = arith.constant 0 : index
    %0 = vector.load %arg2[%c0, %c0_0] : memref<48x32xbf16, #tpu.memory_space<vmem>>, vector<48x32xbf16>
    %c0_1 = arith.constant 0 : index
    %c0_2 = arith.constant 0 : index
    %1 = vector.load %arg3[%c0_1, %c0_2] : memref<32x96xbf16, #tpu.memory_space<vmem>>, vector<32x96xbf16>
    %cst = arith.constant dense<0.000000e+00> : vector<48x96xf32>
    %2 = tpu.matmul %0, %1, %cst {dimension_numbers = #tpu.dot_dimension_numbers<[1], [0], [0], [1], [0, 0, 1, 1], [], []>} : vector<48x32xbf16>, vector<32x96xbf16>, vector<48x96xf32> -> vector<48x96xf32>
    %c0_3 = arith.constant 0 : index
    %c0_4 = arith.constant 0 : index
    %3 = vector.load %arg4[%c0_3, %c0_4] : memref<1x96xf32, #tpu.memory_space<vmem>>, vector<1x96xf32>
    %4 = vector.broadcast %3 : vector<1x96xf32> to vector<48x96xf32>
    %5 = arith.addf %2, %4 : vector<48x96xf32>
    %6 = arith.truncf %5 : vector<48x96xf32> to vector<48x96xbf16>
    %c0_5 = arith.constant 0 : index
    %c0_6 = arith.constant 0 : index
    %7 = vector.load %arg5[%c0_5, %c0_6] : memref<48x96xbf16, #tpu.memory_space<vmem>>, vector<48x96xbf16>
    tpu.vector_store %arg5[%c0_5, %c0_6], %6 {strides = array<i32>} : memref<48x96xbf16, #tpu.memory_space<vmem>>, vector<48x96xbf16>,
    return
  }
  func.func @transform_0(%arg0: i32, %arg1: i32) -> (i32, i32) {
    %c0_i32 = arith.constant 0 : i32
    %c0_i32_0 = arith.constant 0 : i32
    return %arg0, %c0_i32 : i32, i32
  }
  func.func @transform_1(%arg0: i32, %arg1: i32) -> (i32, i32) {
    %c0_i32 = arith.constant 0 : i32
    %c0_i32_0 = arith.constant 0 : i32
    return %c0_i32, %arg1 : i32, i32
  }
  func.func @transform_2(%arg0: i32, %arg1: i32) -> (i32, i32) {
    %c0_i32 = arith.constant 0 : i32
    %c0_i32_0 = arith.constant 0 : i32
    return %c0_i32, %arg1 : i32, i32
  }
  func.func @transform_3(%arg0: i32, %arg1: i32) -> (i32, i32) {
    %c0_i32 = arith.constant 0 : i32
    return %arg0, %arg1 : i32, i32
  }
}

module attributes {stable_mosaic.version = 11 : i64} {
  func.func @_embed_ln_kernel(%arg0: i32, %arg1: memref<1x16x32xf32, #tpu.memory_space<vmem>>, %arg2: memref<24x32xf32, #tpu.memory_space<vmem>>, %arg3: memref<1x32xf32, #tpu.memory_space<vmem>>, %arg4: memref<1x32xf32, #tpu.memory_space<vmem>>, %arg5: memref<1x24x32xf32, #tpu.memory_space<vmem>>, %arg6: memref<1x24x32xbf16, #tpu.memory_space<vmem>>) attributes {dimension_semantics = [#tpu.dimension_semantics<parallel>], iteration_bounds = array<i64: 2>, scalar_prefetch = 0 : i64, scratch_operands = 0 : i64, tpu.core_type = #tpu.core_type<tc>, window_params = [{transform_indices = @transform_0, window_bounds = array<i64: 1, 16, 32>}, {pipeline_mode = #tpu.pipeline_mode<synchronous>, transform_indices = @transform_1, window_bounds = array<i64: 24, 32>}, {pipeline_mode = #tpu.pipeline_mode<synchronous>, transform_indices = @transform_2, window_bounds = array<i64: 1, 32>}, {pipeline_mode = #tpu.pipeline_mode<synchronous>, transform_indices = @transform_3, window_bounds = array<i64: 1, 32>}, {transform_indices = @transform_4, window_bounds = array<i64: 1, 24, 32>}, {transform_indices = @transform_5, window_bounds = array<i64: 1, 24, 32>}]} {
    %c0 = arith.constant 0 : index
    %c0_0 = arith.constant 0 : index
    %0 = vector.load %arg3[%c0, %c0_0] : memref<1x32xf32, #tpu.memory_space<vmem>>, vector<1x32xf32>
    %c0_1 = arith.constant 0 : index
    %c0_2 = arith.constant 0 : index
    %1 = vector.load %arg4[%c0_1, %c0_2] : memref<1x32xf32, #tpu.memory_space<vmem>>, vector<1x32xf32>
    %c0_3 = arith.constant 0 : index
    %c0_4 = arith.constant 0 : index
    %c0_5 = arith.constant 0 : index
    %2 = vector.load %arg1[%c0_3, %c0_4, %c0_5] : memref<1x16x32xf32, #tpu.memory_space<vmem>>, vector<1x16x32xf32>
    %3 = vector.shape_cast %2 : vector<1x16x32xf32> to vector<16x32xf32>
    %c0_6 = arith.constant 0 : index
    %c0_7 = arith.constant 0 : index
    %4 = vector.load %arg2[%c0_6, %c0_7] : memref<24x32xf32, #tpu.memory_space<vmem>>, vector<16x32xf32>
    %5 = arith.addf %3, %4 : vector<16x32xf32>
    %c0_8 = arith.constant 0 : index
    %c0_9 = arith.constant 0 : index
    %c0_10 = arith.constant 0 : index
    %6 = vector.load %arg5[%c0_8, %c0_9, %c0_10] : memref<1x24x32xf32, #tpu.memory_space<vmem>>, vector<1x16x32xf32>
    %7 = vector.shape_cast %6 : vector<1x16x32xf32> to vector<16x32xf32>
    %8 = vector.shape_cast %5 : vector<16x32xf32> to vector<1x16x32xf32>
    tpu.vector_store %arg5[%c0_8, %c0_9, %c0_10], %8 {strides = array<i32>} : memref<1x24x32xf32, #tpu.memory_space<vmem>>, vector<1x16x32xf32>,
    %cst = arith.constant dense<0.000000e+00> : vector<16xf32>
    %9 = vector.multi_reduction <add>, %5, %cst [1] : vector<16x32xf32> to vector<16xf32>
    %10 = vector.shape_cast %9 : vector<16xf32> to vector<16x1xf32>
    %cst_11 = arith.constant 3.200000e+01 : f32
    %11 = vector.broadcast %cst_11 : f32 to vector<16x1xf32>
    %12 = arith.divf %10, %11 : vector<16x1xf32>
    %13 = vector.broadcast %12 : vector<16x1xf32> to vector<16x32xf32>
    %14 = arith.subf %5, %13 : vector<16x32xf32>
    %15 = arith.mulf %14, %14 : vector<16x32xf32>
    %cst_12 = arith.constant dense<0.000000e+00> : vector<16xf32>
    %16 = vector.multi_reduction <add>, %15, %cst_12 [1] : vector<16x32xf32> to vector<16xf32>
    %17 = vector.shape_cast %16 : vector<16xf32> to vector<16x1xf32>
    %cst_13 = arith.constant 3.200000e+01 : f32
    %18 = vector.broadcast %cst_13 : f32 to vector<16x1xf32>
    %19 = arith.divf %17, %18 : vector<16x1xf32>
    %20 = vector.broadcast %12 : vector<16x1xf32> to vector<16x32xf32>
    %21 = arith.subf %5, %20 : vector<16x32xf32>
    %cst_14 = arith.constant 9.99999997E-7 : f32
    %22 = vector.broadcast %cst_14 : f32 to vector<16x1xf32>
    %23 = arith.addf %19, %22 : vector<16x1xf32>
    %24 = math.rsqrt %23 : vector<16x1xf32>
    %25 = vector.broadcast %24 : vector<16x1xf32> to vector<16x32xf32>
    %26 = arith.mulf %21, %25 : vector<16x32xf32>
    %27 = vector.broadcast %0 : vector<1x32xf32> to vector<16x32xf32>
    %28 = arith.mulf %26, %27 : vector<16x32xf32>
    %29 = vector.broadcast %1 : vector<1x32xf32> to vector<16x32xf32>
    %30 = arith.addf %28, %29 : vector<16x32xf32>
    %31 = arith.truncf %30 : vector<16x32xf32> to vector<16x32xbf16>
    %c0_15 = arith.constant 0 : index
    %c0_16 = arith.constant 0 : index
    %c0_17 = arith.constant 0 : index
    %32 = vector.load %arg6[%c0_15, %c0_16, %c0_17] : memref<1x24x32xbf16, #tpu.memory_space<vmem>>, vector<1x16x32xbf16>
    %33 = vector.shape_cast %32 : vector<1x16x32xbf16> to vector<16x32xbf16>
    %34 = vector.shape_cast %31 : vector<16x32xbf16> to vector<1x16x32xbf16>
    tpu.vector_store %arg6[%c0_15, %c0_16, %c0_17], %34 {strides = array<i32>} : memref<1x24x32xbf16, #tpu.memory_space<vmem>>, vector<1x16x32xbf16>,
    %c16 = arith.constant 16 : index
    %c0_18 = arith.constant 0 : index
    %35 = vector.load %arg2[%c16, %c0_18] : memref<24x32xf32, #tpu.memory_space<vmem>>, vector<8x32xf32>
    %c0_19 = arith.constant 0 : index
    %c16_20 = arith.constant 16 : index
    %c0_21 = arith.constant 0 : index
    %36 = vector.load %arg5[%c0_19, %c16_20, %c0_21] : memref<1x24x32xf32, #tpu.memory_space<vmem>>, vector<1x8x32xf32>
    %37 = vector.shape_cast %36 : vector<1x8x32xf32> to vector<8x32xf32>
    %38 = vector.shape_cast %35 : vector<8x32xf32> to vector<1x8x32xf32>
    tpu.vector_store %arg5[%c0_19, %c16_20, %c0_21], %38 {strides = array<i32>} : memref<1x24x32xf32, #tpu.memory_space<vmem>>, vector<1x8x32xf32>,
    %cst_22 = arith.constant dense<0.000000e+00> : vector<8xf32>
    %39 = vector.multi_reduction <add>, %35, %cst_22 [1] : vector<8x32xf32> to vector<8xf32>
    %40 = vector.shape_cast %39 : vector<8xf32> to vector<8x1xf32>
    %cst_23 = arith.constant 3.200000e+01 : f32
    %41 = vector.broadcast %cst_23 : f32 to vector<8x1xf32>
    %42 = arith.divf %40, %41 : vector<8x1xf32>
    %43 = vector.broadcast %42 : vector<8x1xf32> to vector<8x32xf32>
    %44 = arith.subf %35, %43 : vector<8x32xf32>
    %45 = arith.mulf %44, %44 : vector<8x32xf32>
    %cst_24 = arith.constant dense<0.000000e+00> : vector<8xf32>
    %46 = vector.multi_reduction <add>, %45, %cst_24 [1] : vector<8x32xf32> to vector<8xf32>
    %47 = vector.shape_cast %46 : vector<8xf32> to vector<8x1xf32>
    %cst_25 = arith.constant 3.200000e+01 : f32
    %48 = vector.broadcast %cst_25 : f32 to vector<8x1xf32>
    %49 = arith.divf %47, %48 : vector<8x1xf32>
    %50 = vector.broadcast %42 : vector<8x1xf32> to vector<8x32xf32>
    %51 = arith.subf %35, %50 : vector<8x32xf32>
    %cst_26 = arith.constant 9.99999997E-7 : f32
    %52 = vector.broadcast %cst_26 : f32 to vector<8x1xf32>
    %53 = arith.addf %49, %52 : vector<8x1xf32>
    %54 = math.rsqrt %53 : vector<8x1xf32>
    %55 = vector.broadcast %54 : vector<8x1xf32> to vector<8x32xf32>
    %56 = arith.mulf %51, %55 : vector<8x32xf32>
    %57 = vector.broadcast %0 : vector<1x32xf32> to vector<8x32xf32>
    %58 = arith.mulf %56, %57 : vector<8x32xf32>
    %59 = vector.broadcast %1 : vector<1x32xf32> to vector<8x32xf32>
    %60 = arith.addf %58, %59 : vector<8x32xf32>
    %61 = arith.truncf %60 : vector<8x32xf32> to vector<8x32xbf16>
    %c0_27 = arith.constant 0 : index
    %c16_28 = arith.constant 16 : index
    %c0_29 = arith.constant 0 : index
    %62 = vector.load %arg6[%c0_27, %c16_28, %c0_29] : memref<1x24x32xbf16, #tpu.memory_space<vmem>>, vector<1x8x32xbf16>
    %63 = vector.shape_cast %62 : vector<1x8x32xbf16> to vector<8x32xbf16>
    %64 = vector.shape_cast %61 : vector<8x32xbf16> to vector<1x8x32xbf16>
    tpu.vector_store %arg6[%c0_27, %c16_28, %c0_29], %64 {strides = array<i32>} : memref<1x24x32xbf16, #tpu.memory_space<vmem>>, vector<1x8x32xbf16>,
    return
  }
  func.func @transform_0(%arg0: i32) -> (i32, i32, i32) {
    %c0_i32 = arith.constant 0 : i32
    %c0_i32_0 = arith.constant 0 : i32
    %c0_i32_1 = arith.constant 0 : i32
    return %arg0, %c0_i32, %c0_i32_0 : i32, i32, i32
  }
  func.func @transform_1(%arg0: i32) -> (i32, i32) {
    %c0_i32 = arith.constant 0 : i32
    %c0_i32_0 = arith.constant 0 : i32
    %c0_i32_1 = arith.constant 0 : i32
    return %c0_i32, %c0_i32_0 : i32, i32
  }
  func.func @transform_2(%arg0: i32) -> (i32, i32) {
    %c0_i32 = arith.constant 0 : i32
    %c0_i32_0 = arith.constant 0 : i32
    %c0_i32_1 = arith.constant 0 : i32
    return %c0_i32, %c0_i32_0 : i32, i32
  }
  func.func @transform_3(%arg0: i32) -> (i32, i32) {
    %c0_i32 = arith.constant 0 : i32
    %c0_i32_0 = arith.constant 0 : i32
    %c0_i32_1 = arith.constant 0 : i32
    return %c0_i32, %c0_i32_0 : i32, i32
  }
  func.func @transform_4(%arg0: i32) -> (i32, i32, i32) {
    %c0_i32 = arith.constant 0 : i32
    %c0_i32_0 = arith.constant 0 : i32
    %c0_i32_1 = arith.constant 0 : i32
    return %arg0, %c0_i32, %c0_i32_0 : i32, i32, i32
  }
  func.func @transform_5(%arg0: i32) -> (i32, i32, i32) {
    %c0_i32 = arith.constant 0 : i32
    %c0_i32_0 = arith.constant 0 : i32
    %c0_i32_1 = arith.constant 0 : i32
    return %arg0, %c0_i32, %c0_i32_0 : i32, i32, i32
  }
}

module attributes {stable_mosaic.version = 11 : i64} {
  func.func @_attention_kernel(%arg0: i32, %arg1: i32, %arg2: memref<3x1x1x24x8xbf16, #tpu.memory_space<vmem>>, %arg3: memref<1x1x24x8xbf16, #tpu.memory_space<vmem>>) attributes {dimension_semantics = [#tpu.dimension_semantics<parallel>, #tpu.dimension_semantics<parallel>], iteration_bounds = array<i64: 2, 4>, scalar_prefetch = 0 : i64, scratch_operands = 0 : i64, tpu.core_type = #tpu.core_type<tc>, window_params = [{transform_indices = @transform_0, window_bounds = array<i64: 3, 1, 1, 24, 8>}, {transform_indices = @transform_1, window_bounds = array<i64: 1, 1, 24, 8>}]} {
    %c0 = arith.constant 0 : index
    %c0_0 = arith.constant 0 : index
    %c0_1 = arith.constant 0 : index
    %c0_2 = arith.constant 0 : index
    %c0_3 = arith.constant 0 : index
    %0 = vector.load %arg2[%c0, %c0_0, %c0_1, %c0_2, %c0_3] : memref<3x1x1x24x8xbf16, #tpu.memory_space<vmem>>, vector<1x1x1x24x8xbf16>
    %1 = vector.shape_cast %0 : vector<1x1x1x24x8xbf16> to vector<24x8xbf16>
    %c1 = arith.constant 1 : index
    %c0_4 = arith.constant 0 : index
    %c0_5 = arith.constant 0 : index
    %c0_6 = arith.constant 0 : index
    %c0_7 = arith.constant 0 : index
    %2 = vector.load %arg2[%c1, %c0_4, %c0_5, %c0_6, %c0_7] : memref<3x1x1x24x8xbf16, #tpu.memory_space<vmem>>, vector<1x1x1x24x8xbf16>
    %3 = vector.shape_cast %2 : vector<1x1x1x24x8xbf16> to vector<24x8xbf16>
    %c2 = arith.constant 2 : index
    %c0_8 = arith.constant 0 : index
    %c0_9 = arith.constant 0 : index
    %c0_10 = arith.constant 0 : index
    %c0_11 = arith.constant 0 : index
    %4 = vector.load %arg2[%c2, %c0_8, %c0_9, %c0_10, %c0_11] : memref<3x1x1x24x8xbf16, #tpu.memory_space<vmem>>, vector<1x1x1x24x8xbf16>
    %5 = vector.shape_cast %4 : vector<1x1x1x24x8xbf16> to vector<24x8xbf16>
    %cst = arith.constant dense<0.000000e+00> : vector<24x24xf32>
    %6 = tpu.matmul %1, %3, %cst {dimension_numbers = #tpu.dot_dimension_numbers<[1], [1], [0], [0], [0, 0, 1, 0], [], []>} : vector<24x8xbf16>, vector<24x8xbf16>, vector<24x24xf32> -> vector<24x24xf32>
    %7 = tpu.iota {dimensions = array<i32: 1>} : vector<24x24xi32>
    %c17_i32 = arith.constant 17 : i32
    %8 = vector.broadcast %c17_i32 : i32 to vector<24x24xi32>
    %9 = arith.cmpi slt, %7, %8 : vector<24x24xi32>
    %cst_12 = arith.constant -1.000000e+30 : f32
    %10 = vector.broadcast %cst_12 : f32 to vector<24x24xf32>
    %11 = arith.select %9, %6, %10 : vector<24x24xi1>, vector<24x24xf32>
    %cst_13 = arith.constant dense<0xFF800000> : vector<24xf32>
    %12 = vector.multi_reduction <maximumf>, %11, %cst_13 [1] : vector<24x24xf32> to vector<24xf32>
    %13 = vector.shape_cast %12 : vector<24xf32> to vector<24x1xf32>
    %14 = vector.broadcast %13 : vector<24x1xf32> to vector<24x24xf32>
    %15 = arith.subf %11, %14 : vector<24x24xf32>
    %16 = math.exp %15 : vector<24x24xf32>
    %cst_14 = arith.constant dense<0.000000e+00> : vector<24xf32>
    %17 = vector.multi_reduction <add>, %16, %cst_14 [1] : vector<24x24xf32> to vector<24xf32>
    %18 = vector.shape_cast %17 : vector<24xf32> to vector<24x1xf32>
    %19 = tpu.reciprocal %18 {approx = true} : vector<24x1xf32> -> vector<24x1xf32>
    %20 = vector.broadcast %19 : vector<24x1xf32> to vector<24x24xf32>
    %21 = arith.mulf %16, %20 : vector<24x24xf32>
    %22 = arith.truncf %21 : vector<24x24xf32> to vector<24x24xbf16>
    %cst_15 = arith.constant dense<0.000000e+00> : vector<24x8xf32>
    %23 = tpu.matmul %22, %5, %cst_15 {dimension_numbers = #tpu.dot_dimension_numbers<[1], [0], [0], [1], [0, 0, 1, 1], [], []>} : vector<24x24xbf16>, vector<24x8xbf16>, vector<24x8xf32> -> vector<24x8xf32>
    %24 = arith.truncf %23 : vector<24x8xf32> to vector<24x8xbf16>
    %c0_16 = arith.constant 0 : index
    %c0_17 = arith.constant 0 : index
    %c0_18 = arith.constant 0 : index
    %c0_19 = arith.constant 0 : index
    %25 = vector.load %arg3[%c0_16, %c0_17, %c0_18, %c0_19] : memref<1x1x24x8xbf16, #tpu.memory_space<vmem>>, vector<1x1x24x8xbf16>
    %26 = vector.shape_cast %25 : vector<1x1x24x8xbf16> to vector<24x8xbf16>
    %27 = vector.shape_cast %24 : vector<24x8xbf16> to vector<1x1x24x8xbf16>
    tpu.vector_store %arg3[%c0_16, %c0_17, %c0_18, %c0_19], %27 {strides = array<i32>} : memref<1x1x24x8xbf16, #tpu.memory_space<vmem>>, vector<1x1x24x8xbf16>,
    return
  }
  func.func @transform_0(%arg0: i32, %arg1: i32) -> (i32, i32, i32, i32, i32) {
    %c0_i32 = arith.constant 0 : i32
    %c0_i32_0 = arith.constant 0 : i32
    %c0_i32_1 = arith.constant 0 : i32
    %c0_i32_2 = arith.constant 0 : i32
    return %c0_i32, %arg0, %arg1, %c0_i32_0, %c0_i32_1 : i32, i32, i32, i32, i32
  }
  func.func @transform_1(%arg0: i32, %arg1: i32) -> (i32, i32, i32, i32) {
    %c0_i32 = arith.constant 0 : i32
    %c0_i32_0 = arith.constant 0 : i32
    %c0_i32_1 = arith.constant 0 : i32
    return %arg0, %arg1, %c0_i32, %c0_i32_0 : i32, i32, i32, i32
  }
}

module attributes {stable_mosaic.version = 11 : i64} {
  func.func @_gemm_kernel(%arg0: i32, %arg1: i32, %arg2: memref<48x32xbf16, #tpu.memory_space<vmem>>, %arg3: memref<32x128xbf16, #tpu.memory_space<vmem>>, %arg4: memref<1x128xf32, #tpu.memory_space<vmem>>, %arg5: memref<48x128xbf16, #tpu.memory_space<vmem>>) attributes {dimension_semantics = [#tpu.dimension_semantics<parallel>, #tpu.dimension_semantics<parallel>], iteration_bounds = array<i64: 1, 1>, scalar_prefetch = 0 : i64, scratch_operands = 0 : i64, tpu.core_type = #tpu.core_type<tc>, window_params = [{transform_indices = @transform_0, window_bounds = array<i64: 48, 32>}, {transform_indices = @transform_1, window_bounds = array<i64: 32, 128>}, {transform_indices = @transform_2, window_bounds = array<i64: 1, 128>}, {transform_indices = @transform_3, window_bounds = array<i64: 48, 128>}]} {
    %c0 = arith.constant 0 : index
    %c0_0 = arith.constant 0 : index
    %0 = vector.load %arg2[%c0, %c0_0] : memref<48x32xbf16, #tpu.memory_space<vmem>>, vector<48x32xbf16>
    %c0_1 = arith.constant 0 : index
    %c0_2 = arith.constant 0 : index
    %1 = vector.load %arg3[%c0_1, %c0_2] : memref<32x128xbf16, #tpu.memory_space<vmem>>, vector<32x128xbf16>
    %cst = arith.constant dense<0.000000e+00> : vector<48x128xf32>
    %2 = tpu.matmul %0, %1, %cst {dimension_numbers = #tpu.dot_dimension_numbers<[1], [0], [0], [1], [0, 0, 1, 1], [], []>} : vector<48x32xbf16>, vector<32x128xbf16>, vector<48x128xf32> -> vector<48x128xf32>
    %c0_3 = arith.constant 0 : index
    %c0_4 = arith.constant 0 : index
    %3 = vector.load %arg4[%c0_3, %c0_4] : memref<1x128xf32, #tpu.memory_space<vmem>>, vector<1x128xf32>
    %4 = vector.broadcast %3 : vector<1x128xf32> to vector<48x128xf32>
    %5 = arith.addf %2, %4 : vector<48x128xf32>
    %6 = arith.mulf %5, %5 : vector<48x128xf32>
    %7 = arith.mulf %5, %6 : vector<48x128xf32>
    %cst_5 = arith.constant 4.471500e-02 : f32
    %8 = vector.broadcast %cst_5 : f32 to vector<48x128xf32>
    %9 = arith.mulf %8, %7 : vector<48x128xf32>
    %10 = arith.addf %5, %9 : vector<48x128xf32>
    %cst_6 = arith.constant 0.797884583 : f32
    %11 = vector.broadcast %cst_6 : f32 to vector<48x128xf32>
    %12 = arith.mulf %11, %10 : vector<48x128xf32>
    %13 = math.tanh %12 : vector<48x128xf32>
    %cst_7 = arith.constant 1.000000e+00 : f32
    %14 = vector.broadcast %cst_7 : f32 to vector<48x128xf32>
    %15 = arith.addf %14, %13 : vector<48x128xf32>
    %cst_8 = arith.constant 5.000000e-01 : f32
    %16 = vector.broadcast %cst_8 : f32 to vector<48x128xf32>
    %17 = arith.mulf %16, %15 : vector<48x128xf32>
    %18 = arith.mulf %5, %17 : vector<48x128xf32>
    %19 = arith.truncf %18 : vector<48x128xf32> to vector<48x128xbf16>
    %c0_9 = arith.constant 0 : index
    %c0_10 = arith.constant 0 : index
    %20 = vector.load %arg5[%c0_9, %c0_10] : memref<48x128xbf16, #tpu.memory_space<vmem>>, vector<48x128xbf16>
    tpu.vector_store %arg5[%c0_9, %c0_10], %19 {strides = array<i32>} : memref<48x128xbf16, #tpu.memory_space<vmem>>, vector<48x128xbf16>,
    return
  }
  func.func @transform_0(%arg0: i32, %arg1: i32) -> (i32, i32) {
    %c0_i32 = arith.constant 0 : i32
    %c0_i32_0 = arith.constant 0 : i32
    return %arg0, %c0_i32 : i32, i32
  }
  func.func @transform_1(%arg0: i32, %arg1: i32) -> (i32, i32) {
    %c0_i32 = arith.constant 0 : i32
    %c0_i32_0 = arith.constant 0 : i32
    return %c0_i32, %arg1 : i32, i32
  }
  func.func @transform_2(%arg0: i32, %arg1: i32) -> (i32, i32) {
    %c0_i32 = arith.constant 0 : i32
    %c0_i32_0 = arith.constant 0 : i32
    return %c0_i32, %arg1 : i32, i32
  }
  func.func @transform_3(%arg0: i32, %arg1: i32) -> (i32, i32) {
    %c0_i32 = arith.constant 0 : i32
    return %arg0, %arg1 : i32, i32
  }
}

module attributes {stable_mosaic.version = 11 : i64} {
  func.func @_gemm_kernel(%arg0: i32, %arg1: i32, %arg2: memref<48x32xbf16, #tpu.memory_space<vmem>>, %arg3: memref<32x32xbf16, #tpu.memory_space<vmem>>, %arg4: memref<1x32xf32, #tpu.memory_space<vmem>>, %arg5: memref<48x32xf32, #tpu.memory_space<vmem>>, %arg6: memref<1x32xf32, #tpu.memory_space<vmem>>, %arg7: memref<1x32xf32, #tpu.memory_space<vmem>>, %arg8: memref<48x32xf32, #tpu.memory_space<vmem>>, %arg9: memref<48x32xbf16, #tpu.memory_space<vmem>>) attributes {dimension_semantics = [#tpu.dimension_semantics<parallel>, #tpu.dimension_semantics<parallel>], iteration_bounds = array<i64: 1, 1>, scalar_prefetch = 0 : i64, scratch_operands = 0 : i64, tpu.core_type = #tpu.core_type<tc>, window_params = [{transform_indices = @transform_0, window_bounds = array<i64: 48, 32>}, {transform_indices = @transform_1, window_bounds = array<i64: 32, 32>}, {transform_indices = @transform_2, window_bounds = array<i64: 1, 32>}, {transform_indices = @transform_3, window_bounds = array<i64: 48, 32>}, {transform_indices = @transform_4, window_bounds = array<i64: 1, 32>}, {transform_indices = @transform_5, window_bounds = array<i64: 1, 32>}, {transform_indices = @transform_6, window_bounds = array<i64: 48, 32>}, {transform_indices = @transform_7, window_bounds = array<i64: 48, 32>}]} {
    %c0 = arith.constant 0 : index
    %c0_0 = arith.constant 0 : index
    %0 = vector.load %arg2[%c0, %c0_0] : memref<48x32xbf16, #tpu.memory_space<vmem>>, vector<48x32xbf16>
    %c0_1 = arith.constant 0 : index
    %c0_2 = arith.constant 0 : index
    %1 = vector.load %arg3[%c0_1, %c0_2] : memref<32x32xbf16, #tpu.memory_space<vmem>>, vector<32x32xbf16>
    %cst = arith.constant dense<0.000000e+00> : vector<48x32xf32>
    %2 = tpu.matmul %0, %1, %cst {dimension_numbers = #tpu.dot_dimension_numbers<[1], [0], [0], [1], [0, 0, 1, 1], [], []>} : vector<48x32xbf16>, vector<32x32xbf16>, vector<48x32xf32> -> vector<48x32xf32>
    %c0_3 = arith.constant 0 : index
    %c0_4 = arith.constant 0 : index
    %3 = vector.load %arg4[%c0_3, %c0_4] : memref<1x32xf32, #tpu.memory_space<vmem>>, vector<1x32xf32>
    %4 = vector.broadcast %3 : vector<1x32xf32> to vector<48x32xf32>
    %5 = arith.addf %2, %4 : vector<48x32xf32>
    %c0_5 = arith.constant 0 : index
    %c0_6 = arith.constant 0 : index
    %6 = vector.load %arg5[%c0_5, %c0_6] : memref<48x32xf32, #tpu.memory_space<vmem>>, vector<48x32xf32>
    %7 = arith.addf %5, %6 : vector<48x32xf32>
    %c0_7 = arith.constant 0 : index
    %c0_8 = arith.constant 0 : index
    %8 = vector.load %arg8[%c0_7, %c0_8] : memref<48x32xf32, #tpu.memory_space<vmem>>, vector<48x32xf32>
    tpu.vector_store %arg8[%c0_7, %c0_8], %7 {strides = array<i32>} : memref<48x32xf32, #tpu.memory_space<vmem>>, vector<48x32xf32>,
    %cst_9 = arith.constant dense<0.000000e+00> : vector<48xf32>
    %9 = vector.multi_reduction <add>, %7, %cst_9 [1] : vector<48x32xf32> to vector<48xf32>
    %10 = vector.shape_cast %9 : vector<48xf32> to vector<48x1xf32>
    %cst_10 = arith.constant 3.200000e+01 : f32
    %11 = vector.broadcast %cst_10 : f32 to vector<48x1xf32>
    %12 = arith.divf %10, %11 : vector<48x1xf32>
    %13 = vector.broadcast %12 : vector<48x1xf32> to vector<48x32xf32>
    %14 = arith.subf %7, %13 : vector<48x32xf32>
    %15 = arith.mulf %14, %14 : vector<48x32xf32>
    %cst_11 = arith.constant dense<0.000000e+00> : vector<48xf32>
    %16 = vector.multi_reduction <add>, %15, %cst_11 [1] : vector<48x32xf32> to vector<48xf32>
    %17 = vector.shape_cast %16 : vector<48xf32> to vector<48x1xf32>
    %cst_12 = arith.constant 3.200000e+01 : f32
    %18 = vector.broadcast %cst_12 : f32 to vector<48x1xf32>
    %19 = arith.divf %17, %18 : vector<48x1xf32>
    %20 = vector.broadcast %12 : vector<48x1xf32> to vector<48x32xf32>
    %21 = arith.subf %7, %20 : vector<48x32xf32>
    %cst_13 = arith.constant 9.99999997E-7 : f32
    %22 = vector.broadcast %cst_13 : f32 to vector<48x1xf32>
    %23 = arith.addf %19, %22 : vector<48x1xf32>
    %24 = math.rsqrt %23 : vector<48x1xf32>
    %25 = vector.broadcast %24 : vector<48x1xf32> to vector<48x32xf32>
    %26 = arith.mulf %21, %25 : vector<48x32xf32>
    %c0_14 = arith.constant 0 : index
    %c0_15 = arith.constant 0 : index
    %27 = vector.load %arg6[%c0_14, %c0_15] : memref<1x32xf32, #tpu.memory_space<vmem>>, vector<1x32xf32>
    %28 = vector.broadcast %27 : vector<1x32xf32> to vector<48x32xf32>
    %29 = arith.mulf %26, %28 : vector<48x32xf32>
    %c0_16 = arith.constant 0 : index
    %c0_17 = arith.constant 0 : index
    %30 = vector.load %arg7[%c0_16, %c0_17] : memref<1x32xf32, #tpu.memory_space<vmem>>, vector<1x32xf32>
    %31 = vector.broadcast %30 : vector<1x32xf32> to vector<48x32xf32>
    %32 = arith.addf %29, %31 : vector<48x32xf32>
    %33 = arith.truncf %32 : vector<48x32xf32> to vector<48x32xbf16>
    %c0_18 = arith.constant 0 : index
    %c0_19 = arith.constant 0 : index
    %34 = vector.load %arg9[%c0_18, %c0_19] : memref<48x32xbf16, #tpu.memory_space<vmem>>, vector<48x32xbf16>
    tpu.vector_store %arg9[%c0_18, %c0_19], %33 {strides = array<i32>} : memref<48x32xbf16, #tpu.memory_space<vmem>>, vector<48x32xbf16>,
    return
  }
  func.func @transform_0(%arg0: i32, %arg1: i32) -> (i32, i32) {
    %c0_i32 = arith.constant 0 : i32
    %c0_i32_0 = arith.constant 0 : i32
    return %arg0, %c0_i32 : i32, i32
  }
  func.func @transform_1(%arg0: i32, %arg1: i32) -> (i32, i32) {
    %c0_i32 = arith.constant 0 : i32
    %c0_i32_0 = arith.constant 0 : i32
    return %c0_i32, %arg1 : i32, i32
  }
  func.func @transform_2(%arg0: i32, %arg1: i32) -> (i32, i32) {
    %c0_i32 = arith.constant 0 : i32
    %c0_i32_0 = arith.constant 0 : i32
    return %c0_i32, %arg1 : i32, i32
  }
  func.func @transform_3(%arg0: i32, %arg1: i32) -> (i32, i32) {
    %c0_i32 = arith.constant 0 : i32
    return %arg0, %arg1 : i32, i32
  }
  func.func @transform_4(%arg0: i32, %arg1: i32) -> (i32, i32) {
    %c0_i32 = arith.constant 0 : i32
    %c0_i32_0 = arith.constant 0 : i32
    return %c0_i32, %arg1 : i32, i32
  }
  func.func @transform_5(%arg0: i32, %arg1: i32) -> (i32, i32) {
    %c0_i32 = arith.constant 0 : i32
    %c0_i32_0 = arith.constant 0 : i32
    return %c0_i32, %arg1 : i32, i32
  }
  func.func @transform_6(%arg0: i32, %arg1: i32) -> (i32, i32) {
    %c0_i32 = arith.constant 0 : i32
    return %arg0, %arg1 : i32, i32
  }
  func.func @transform_7(%arg0: i32, %arg1: i32) -> (i32, i32) {
    %c0_i32 = arith.constant 0 : i32
    return %arg0, %arg1 : i32, i32
  }
}

module attributes {stable_mosaic.version = 11 : i64} {
  func.func @_gemm_kernel(%arg0: i32, %arg1: i32, %arg2: memref<48x128xbf16, #tpu.memory_space<vmem>>, %arg3: memref<128x32xbf16, #tpu.memory_space<vmem>>, %arg4: memref<1x32xf32, #tpu.memory_space<vmem>>, %arg5: memref<48x32xf32, #tpu.memory_space<vmem>>, %arg6: memref<1x32xf32, #tpu.memory_space<vmem>>, %arg7: memref<1x32xf32, #tpu.memory_space<vmem>>, %arg8: memref<48x32xf32, #tpu.memory_space<vmem>>, %arg9: memref<48x32xbf16, #tpu.memory_space<vmem>>) attributes {dimension_semantics = [#tpu.dimension_semantics<parallel>, #tpu.dimension_semantics<parallel>], iteration_bounds = array<i64: 1, 1>, scalar_prefetch = 0 : i64, scratch_operands = 0 : i64, tpu.core_type = #tpu.core_type<tc>, window_params = [{transform_indices = @transform_0, window_bounds = array<i64: 48, 128>}, {transform_indices = @transform_1, window_bounds = array<i64: 128, 32>}, {transform_indices = @transform_2, window_bounds = array<i64: 1, 32>}, {transform_indices = @transform_3, window_bounds = array<i64: 48, 32>}, {transform_indices = @transform_4, window_bounds = array<i64: 1, 32>}, {transform_indices = @transform_5, window_bounds = array<i64: 1, 32>}, {transform_indices = @transform_6, window_bounds = array<i64: 48, 32>}, {transform_indices = @transform_7, window_bounds = array<i64: 48, 32>}]} {
    %c0 = arith.constant 0 : index
    %c0_0 = arith.constant 0 : index
    %0 = vector.load %arg2[%c0, %c0_0] : memref<48x128xbf16, #tpu.memory_space<vmem>>, vector<48x128xbf16>
    %c0_1 = arith.constant 0 : index
    %c0_2 = arith.constant 0 : index
    %1 = vector.load %arg3[%c0_1, %c0_2] : memref<128x32xbf16, #tpu.memory_space<vmem>>, vector<128x32xbf16>
    %cst = arith.constant dense<0.000000e+00> : vector<48x32xf32>
    %2 = tpu.matmul %0, %1, %cst {dimension_numbers = #tpu.dot_dimension_numbers<[1], [0], [0], [1], [0, 0, 1, 1], [], []>} : vector<48x128xbf16>, vector<128x32xbf16>, vector<48x32xf32> -> vector<48x32xf32>
    %c0_3 = arith.constant 0 : index
    %c0_4 = arith.constant 0 : index
    %3 = vector.load %arg4[%c0_3, %c0_4] : memref<1x32xf32, #tpu.memory_space<vmem>>, vector<1x32xf32>
    %4 = vector.broadcast %3 : vector<1x32xf32> to vector<48x32xf32>
    %5 = arith.addf %2, %4 : vector<48x32xf32>
    %c0_5 = arith.constant 0 : index
    %c0_6 = arith.constant 0 : index
    %6 = vector.load %arg5[%c0_5, %c0_6] : memref<48x32xf32, #tpu.memory_space<vmem>>, vector<48x32xf32>
    %7 = arith.addf %5, %6 : vector<48x32xf32>
    %c0_7 = arith.constant 0 : index
    %c0_8 = arith.constant 0 : index
    %8 = vector.load %arg8[%c0_7, %c0_8] : memref<48x32xf32, #tpu.memory_space<vmem>>, vector<48x32xf32>
    tpu.vector_store %arg8[%c0_7, %c0_8], %7 {strides = array<i32>} : memref<48x32xf32, #tpu.memory_space<vmem>>, vector<48x32xf32>,
    %cst_9 = arith.constant dense<0.000000e+00> : vector<48xf32>
    %9 = vector.multi_reduction <add>, %7, %cst_9 [1] : vector<48x32xf32> to vector<48xf32>
    %10 = vector.shape_cast %9 : vector<48xf32> to vector<48x1xf32>
    %cst_10 = arith.constant 3.200000e+01 : f32
    %11 = vector.broadcast %cst_10 : f32 to vector<48x1xf32>
    %12 = arith.divf %10, %11 : vector<48x1xf32>
    %13 = vector.broadcast %12 : vector<48x1xf32> to vector<48x32xf32>
    %14 = arith.subf %7, %13 : vector<48x32xf32>
    %15 = arith.mulf %14, %14 : vector<48x32xf32>
    %cst_11 = arith.constant dense<0.000000e+00> : vector<48xf32>
    %16 = vector.multi_reduction <add>, %15, %cst_11 [1] : vector<48x32xf32> to vector<48xf32>
    %17 = vector.shape_cast %16 : vector<48xf32> to vector<48x1xf32>
    %cst_12 = arith.constant 3.200000e+01 : f32
    %18 = vector.broadcast %cst_12 : f32 to vector<48x1xf32>
    %19 = arith.divf %17, %18 : vector<48x1xf32>
    %20 = vector.broadcast %12 : vector<48x1xf32> to vector<48x32xf32>
    %21 = arith.subf %7, %20 : vector<48x32xf32>
    %cst_13 = arith.constant 9.99999997E-7 : f32
    %22 = vector.broadcast %cst_13 : f32 to vector<48x1xf32>
    %23 = arith.addf %19, %22 : vector<48x1xf32>
    %24 = math.rsqrt %23 : vector<48x1xf32>
    %25 = vector.broadcast %24 : vector<48x1xf32> to vector<48x32xf32>
    %26 = arith.mulf %21, %25 : vector<48x32xf32>
    %c0_14 = arith.constant 0 : index
    %c0_15 = arith.constant 0 : index
    %27 = vector.load %arg6[%c0_14, %c0_15] : memref<1x32xf32, #tpu.memory_space<vmem>>, vector<1x32xf32>
    %28 = vector.broadcast %27 : vector<1x32xf32> to vector<48x32xf32>
    %29 = arith.mulf %26, %28 : vector<48x32xf32>
    %c0_16 = arith.constant 0 : index
    %c0_17 = arith.constant 0 : index
    %30 = vector.load %arg7[%c0_16, %c0_17] : memref<1x32xf32, #tpu.memory_space<vmem>>, vector<1x32xf32>
    %31 = vector.broadcast %30 : vector<1x32xf32> to vector<48x32xf32>
    %32 = arith.addf %29, %31 : vector<48x32xf32>
    %33 = arith.truncf %32 : vector<48x32xf32> to vector<48x32xbf16>
    %c0_18 = arith.constant 0 : index
    %c0_19 = arith.constant 0 : index
    %34 = vector.load %arg9[%c0_18, %c0_19] : memref<48x32xbf16, #tpu.memory_space<vmem>>, vector<48x32xbf16>
    tpu.vector_store %arg9[%c0_18, %c0_19], %33 {strides = array<i32>} : memref<48x32xbf16, #tpu.memory_space<vmem>>, vector<48x32xbf16>,
    return
  }
  func.func @transform_0(%arg0: i32, %arg1: i32) -> (i32, i32) {
    %c0_i32 = arith.constant 0 : i32
    %c0_i32_0 = arith.constant 0 : i32
    return %arg0, %c0_i32 : i32, i32
  }
  func.func @transform_1(%arg0: i32, %arg1: i32) -> (i32, i32) {
    %c0_i32 = arith.constant 0 : i32
    %c0_i32_0 = arith.constant 0 : i32
    return %c0_i32, %arg1 : i32, i32
  }
  func.func @transform_2(%arg0: i32, %arg1: i32) -> (i32, i32) {
    %c0_i32 = arith.constant 0 : i32
    %c0_i32_0 = arith.constant 0 : i32
    return %c0_i32, %arg1 : i32, i32
  }
  func.func @transform_3(%arg0: i32, %arg1: i32) -> (i32, i32) {
    %c0_i32 = arith.constant 0 : i32
    return %arg0, %arg1 : i32, i32
  }
  func.func @transform_4(%arg0: i32, %arg1: i32) -> (i32, i32) {
    %c0_i32 = arith.constant 0 : i32
    %c0_i32_0 = arith.constant 0 : i32
    return %c0_i32, %arg1 : i32, i32
  }
  func.func @transform_5(%arg0: i32, %arg1: i32) -> (i32, i32) {
    %c0_i32 = arith.constant 0 : i32
    %c0_i32_0 = arith.constant 0 : i32
    return %c0_i32, %arg1 : i32, i32
  }
  func.func @transform_6(%arg0: i32, %arg1: i32) -> (i32, i32) {
    %c0_i32 = arith.constant 0 : i32
    return %arg0, %arg1 : i32, i32
  }
  func.func @transform_7(%arg0: i32, %arg1: i32) -> (i32, i32) {
    %c0_i32 = arith.constant 0 : i32
    return %arg0, %arg1 : i32, i32
  }
}

module attributes {stable_mosaic.version = 11 : i64} {
  func.func @_gemm_kernel(%arg0: i32, %arg1: i32, %arg2: memref<48x128xbf16, #tpu.memory_space<vmem>>, %arg3: memref<128x32xbf16, #tpu.memory_space<vmem>>, %arg4: memref<1x32xf32, #tpu.memory_space<vmem>>, %arg5: memref<48x32xf32, #tpu.memory_space<vmem>>, %arg6: memref<1x32xf32, #tpu.memory_space<vmem>>, %arg7: memref<1x32xf32, #tpu.memory_space<vmem>>, %arg8: memref<48x32xf32, #tpu.memory_space<vmem>>, %arg9: memref<48x32xf32, #tpu.memory_space<vmem>>) attributes {dimension_semantics = [#tpu.dimension_semantics<parallel>, #tpu.dimension_semantics<parallel>], iteration_bounds = array<i64: 1, 1>, scalar_prefetch = 0 : i64, scratch_operands = 0 : i64, tpu.core_type = #tpu.core_type<tc>, window_params = [{transform_indices = @transform_0, window_bounds = array<i64: 48, 128>}, {transform_indices = @transform_1, window_bounds = array<i64: 128, 32>}, {transform_indices = @transform_2, window_bounds = array<i64: 1, 32>}, {transform_indices = @transform_3, window_bounds = array<i64: 48, 32>}, {transform_indices = @transform_4, window_bounds = array<i64: 1, 32>}, {transform_indices = @transform_5, window_bounds = array<i64: 1, 32>}, {transform_indices = @transform_6, window_bounds = array<i64: 48, 32>}, {transform_indices = @transform_7, window_bounds = array<i64: 48, 32>}]} {
    %c0 = arith.constant 0 : index
    %c0_0 = arith.constant 0 : index
    %0 = vector.load %arg2[%c0, %c0_0] : memref<48x128xbf16, #tpu.memory_space<vmem>>, vector<48x128xbf16>
    %c0_1 = arith.constant 0 : index
    %c0_2 = arith.constant 0 : index
    %1 = vector.load %arg3[%c0_1, %c0_2] : memref<128x32xbf16, #tpu.memory_space<vmem>>, vector<128x32xbf16>
    %cst = arith.constant dense<0.000000e+00> : vector<48x32xf32>
    %2 = tpu.matmul %0, %1, %cst {dimension_numbers = #tpu.dot_dimension_numbers<[1], [0], [0], [1], [0, 0, 1, 1], [], []>} : vector<48x128xbf16>, vector<128x32xbf16>, vector<48x32xf32> -> vector<48x32xf32>
    %c0_3 = arith.constant 0 : index
    %c0_4 = arith.constant 0 : index
    %3 = vector.load %arg4[%c0_3, %c0_4] : memref<1x32xf32, #tpu.memory_space<vmem>>, vector<1x32xf32>
    %4 = vector.broadcast %3 : vector<1x32xf32> to vector<48x32xf32>
    %5 = arith.addf %2, %4 : vector<48x32xf32>
    %c0_5 = arith.constant 0 : index
    %c0_6 = arith.constant 0 : index
    %6 = vector.load %arg5[%c0_5, %c0_6] : memref<48x32xf32, #tpu.memory_space<vmem>>, vector<48x32xf32>
    %7 = arith.addf %5, %6 : vector<48x32xf32>
    %c0_7 = arith.constant 0 : index
    %c0_8 = arith.constant 0 : index
    %8 = vector.load %arg8[%c0_7, %c0_8] : memref<48x32xf32, #tpu.memory_space<vmem>>, vector<48x32xf32>
    tpu.vector_store %arg8[%c0_7, %c0_8], %7 {strides = array<i32>} : memref<48x32xf32, #tpu.memory_space<vmem>>, vector<48x32xf32>,
    %cst_9 = arith.constant dense<0.000000e+00> : vector<48xf32>
    %9 = vector.multi_reduction <add>, %7, %cst_9 [1] : vector<48x32xf32> to vector<48xf32>
    %10 = vector.shape_cast %9 : vector<48xf32> to vector<48x1xf32>
    %cst_10 = arith.constant 3.200000e+01 : f32
    %11 = vector.broadcast %cst_10 : f32 to vector<48x1xf32>
    %12 = arith.divf %10, %11 : vector<48x1xf32>
    %13 = vector.broadcast %12 : vector<48x1xf32> to vector<48x32xf32>
    %14 = arith.subf %7, %13 : vector<48x32xf32>
    %15 = arith.mulf %14, %14 : vector<48x32xf32>
    %cst_11 = arith.constant dense<0.000000e+00> : vector<48xf32>
    %16 = vector.multi_reduction <add>, %15, %cst_11 [1] : vector<48x32xf32> to vector<48xf32>
    %17 = vector.shape_cast %16 : vector<48xf32> to vector<48x1xf32>
    %cst_12 = arith.constant 3.200000e+01 : f32
    %18 = vector.broadcast %cst_12 : f32 to vector<48x1xf32>
    %19 = arith.divf %17, %18 : vector<48x1xf32>
    %20 = vector.broadcast %12 : vector<48x1xf32> to vector<48x32xf32>
    %21 = arith.subf %7, %20 : vector<48x32xf32>
    %cst_13 = arith.constant 9.99999997E-7 : f32
    %22 = vector.broadcast %cst_13 : f32 to vector<48x1xf32>
    %23 = arith.addf %19, %22 : vector<48x1xf32>
    %24 = math.rsqrt %23 : vector<48x1xf32>
    %25 = vector.broadcast %24 : vector<48x1xf32> to vector<48x32xf32>
    %26 = arith.mulf %21, %25 : vector<48x32xf32>
    %c0_14 = arith.constant 0 : index
    %c0_15 = arith.constant 0 : index
    %27 = vector.load %arg6[%c0_14, %c0_15] : memref<1x32xf32, #tpu.memory_space<vmem>>, vector<1x32xf32>
    %28 = vector.broadcast %27 : vector<1x32xf32> to vector<48x32xf32>
    %29 = arith.mulf %26, %28 : vector<48x32xf32>
    %c0_16 = arith.constant 0 : index
    %c0_17 = arith.constant 0 : index
    %30 = vector.load %arg7[%c0_16, %c0_17] : memref<1x32xf32, #tpu.memory_space<vmem>>, vector<1x32xf32>
    %31 = vector.broadcast %30 : vector<1x32xf32> to vector<48x32xf32>
    %32 = arith.addf %29, %31 : vector<48x32xf32>
    %c0_18 = arith.constant 0 : index
    %c0_19 = arith.constant 0 : index
    %33 = vector.load %arg9[%c0_18, %c0_19] : memref<48x32xf32, #tpu.memory_space<vmem>>, vector<48x32xf32>
    tpu.vector_store %arg9[%c0_18, %c0_19], %32 {strides = array<i32>} : memref<48x32xf32, #tpu.memory_space<vmem>>, vector<48x32xf32>,
    return
  }
  func.func @transform_0(%arg0: i32, %arg1: i32) -> (i32, i32) {
    %c0_i32 = arith.constant 0 : i32
    %c0_i32_0 = arith.constant 0 : i32
    return %arg0, %c0_i32 : i32, i32
  }
  func.func @transform_1(%arg0: i32, %arg1: i32) -> (i32, i32) {
    %c0_i32 = arith.constant 0 : i32
    %c0_i32_0 = arith.constant 0 : i32
    return %c0_i32, %arg1 : i32, i32
  }
  func.func @transform_2(%arg0: i32, %arg1: i32) -> (i32, i32) {
    %c0_i32 = arith.constant 0 : i32
    %c0_i32_0 = arith.constant 0 : i32
    return %c0_i32, %arg1 : i32, i32
  }
  func.func @transform_3(%arg0: i32, %arg1: i32) -> (i32, i32) {
    %c0_i32 = arith.constant 0 : i32
    return %arg0, %arg1 : i32, i32
  }
  func.func @transform_4(%arg0: i32, %arg1: i32) -> (i32, i32) {
    %c0_i32 = arith.constant 0 : i32
    %c0_i32_0 = arith.constant 0 : i32
    return %c0_i32, %arg1 : i32, i32
  }
  func.func @transform_5(%arg0: i32, %arg1: i32) -> (i32, i32) {
    %c0_i32 = arith.constant 0 : i32
    %c0_i32_0 = arith.constant 0 : i32
    return %c0_i32, %arg1 : i32, i32
  }
  func.func @transform_6(%arg0: i32, %arg1: i32) -> (i32, i32) {
    %c0_i32 = arith.constant 0 : i32
    return %arg0, %arg1 : i32, i32
  }
  func.func @transform_7(%arg0: i32, %arg1: i32) -> (i32, i32) {
    %c0_i32 = arith.constant 0 : i32
    return %arg0, %arg1 : i32, i32
  }
}

</mosaic_0001>

<llo_original>
// kernel: vit_feature_extractor.12
$region0: #{vit_feature_extractor.12}
  #allocation0 [shape = 'u32[]', space=smem, size = 0x4, offset = 0x4, fixed_abs, tag = 'smem constant byte address 0x4 - core index']
  #allocation1 [shape = 'u32[144,128]{1,0:T(1,128)}', space=vmem, size = 0x12000, scoped, tag = 'internal scratch']
  %s0 = inlined_call_operand.vmem [shape: bf16[32,48], index: 0, kind: input, shape index: {}]
  %s1 = inlined_call_operand.vmem [shape: bf16[48,32], index: 1, kind: input, shape index: {}]
  %s2 = inlined_call_operand.vmem [shape: f32[1,32], index: 2, kind: input, shape index: {}]
  %s3 = inlined_call_operand.vmem [shape: f32[32,32], index: 3, kind: output, shape index: {}]
  %s4 = sld [smem:[#allocation0]]
  $region22: #{vit_feature_extractor.12} parent=0
    _
  %s6 = ssub.s32 1, %s4
  %s7 = scalar_select 0, %s6, %s4
  // Predicated region
  $region2: #{vit_feature_extractor.12} parent=0 // pred_check
    _
  $region3: #{vit_feature_extractor.12} parent=0 // pred_check_branch
    %9 = sbr.rel (0) target = $region5
  $region4: #{vit_feature_extractor.12} parent=0 // pred_region
    _
  $region5: #{vit_feature_extractor.12} parent=0 // pred_fallthru
    _
  // Predicated region
  $region6: #{vit_feature_extractor.12} parent=0 // pred_check
    _
  $region7: #{vit_feature_extractor.12} parent=0 // pred_check_branch
    %11 = sbr.rel (0) target = $region9
  $region8: #{vit_feature_extractor.12} parent=0 // pred_region
    _
  $region9: #{vit_feature_extractor.12} parent=0 // pred_fallthru
    _
  // Predicated region
  $region10: #{vit_feature_extractor.12} parent=0 // pred_check
    _
  $region11: #{vit_feature_extractor.12} parent=0 // pred_check_branch
    %13 = sbr.rel (0) target = $region13
  $region12: #{vit_feature_extractor.12} parent=0 // pred_region
    _
  $region13: #{vit_feature_extractor.12} parent=0 // pred_fallthru
    _
  %v15 = vld [vmem:[%s0] sm:$0xf]
  %v16 = vld [vmem:[%s0 + $0x4] sm:$0xf]
  %v17 = vld [vmem:[%s0 + $0x8] sm:$0xf]
  %v18 = vld [vmem:[%s0 + $0xc] sm:$0xf]
  %v19 = vld [vmem:[%s1] sm:$0xf]
  %v20 = vld [vmem:[%s1 + $0x4] sm:$0xf]
  %v21 = vld [vmem:[%s1 + $0x8] sm:$0xf]
  %v22 = vld [vmem:[%s1 + $0xc] sm:$0xf]
  %v23 = vld [vmem:[%s1 + $0x10] sm:$0xf]
  %v24 = vld [vmem:[%s1 + $0x14] sm:$0xf]
  %v25 = vld [vmem:[%s2] sm:$0x1]
  %v27 = vlaneseq
  %v28 = vshrl.u32 %v27, 7
  %v29 = vsub.s32 0, %v28
  %v30 = vrot.slane %v25, %v29
  %v36 = vunpack.c.l.b16 %v15
  %v37 = vunpack.c.l.b16 %v16
  %v38 = vunpack.c.l.b16 %v17
  %v39 = vunpack.c.l.b16 %v18
  %v40 = vpack.c.b16 %v37, %v36
  %v41 = vpack.c.b16 %v39, %v38
  %v48 = vunpack.c.l.b16 %v19
  %v49 = vunpack.c.l.b16 %v20
  %v50 = vunpack.c.l.b16 %v21
  %v51 = vunpack.c.l.b16 %v22
  %v52 = vunpack.c.l.b16 %v23
  %v53 = vunpack.c.l.b16 %v24
  %v54 = vpack.c.b16 %v49, %v48
  %v55 = vpack.c.b16 %v51, %v50
  %v56 = vpack.c.b16 %v53, %v52
  %vm60 = vcmask 392192
  %v62 = vsel %vm60, %v40, 0
  %v65 = vsel %vm60, %v41, 0
  %67 = vmatprep.subr.bf16.mxu0 0
  %68 = vmatpush1.bf16.msra.mxu0 %v54
  %69 = vmatprep.subr.bf16.mxu0 0
  %70 = vmatpush1.bf16.msra.mxu0 %v55
  %71 = vmatprep.subr.bf16.mxu0 0
  %72 = vmatpush1.bf16.msra.mxu0 %v56
  %73 = vmatprep.subr.bf16.mxu0 0
  %74 = vmatpush1.bf16.msra.mxu0 0
  %75 = vmatprep.subr.bf16.mxu0 0
  %76 = vmatpush1.bf16.msra.mxu0 0
  %77 = vmatprep.subr.bf16.mxu0 0
  %78 = vmatpush1.bf16.msra.mxu0 0
  %79 = vmatprep.subr.bf16.mxu0 0
  %80 = vmatpush1.bf16.msra.mxu0 0
  %81 = vmatprep.subr.bf16.mxu0 0
  %82 = vmatpush1.bf16.msra.mxu0 0
  %83 = vmatprep.subr.bf16.mxu0 0
  %84 = vmatpush1.bf16.msra.mxu0 0
  %85 = vmatprep.subr.bf16.mxu0 0
  %86 = vmatpush1.bf16.msra.mxu0 0
  %87 = vmatprep.subr.bf16.mxu0 0
  %88 = vmatpush1.bf16.msra.mxu0 0
  %89 = vmatprep.subr.bf16.mxu0 0
  %90 = vmatpush1.bf16.msra.mxu0 0
  %91 = vmatprep.subr.bf16.mxu0 0
  %92 = vmatpush1.bf16.msra.mxu0 0
  %93 = vmatprep.subr.bf16.mxu0 0
  %94 = vmatpush1.bf16.msra.mxu0 0
  %95 = vmatprep.subr.bf16.mxu0 0
  %96 = vmatpush1.bf16.msra.mxu0 0
  %97 = vmatprep.subr.bf16.mxu0 0
  %98 = vmatpush1.bf16.msra.mxu0 0
  %99 = vmatprep.mubr.bf16.mxu0 0
  %100 = vmatmul.mubr.bf16.gmra.mrb[0].mxu0 %v62
  %v101 = vpop.f32.mrb[0].mxu0
  %v102 = vadd.f32 %v30, %v101
  %v103 = vpop.f32.mrb[0].mxu0
  %v104 = vpop.f32.mrb[0].mxu0
  %v105 = vadd.f32 %v30, %v104
  %v106 = vpop.f32.mrb[0].mxu0
  %107 = vmatprep.mubr.bf16.mxu0 0
  %108 = vmatmul.mubr.bf16.gmra.mrb[0].mxu0 %v65
  %v109 = vpop.f32.mrb[0].mxu0
  %v110 = vadd.f32 %v30, %v109
  %v111 = vpop.f32.mrb[0].mxu0
  %v112 = vpop.f32.mrb[0].mxu0
  %v113 = vadd.f32 %v30, %v112
  %v114 = vpop.f32.mrb[0].mxu0
  %115 = vdwg.mxu0
  %vm116 = vcmask 261120
  %117 = vst.msk [vmem:[%s3] sm:$0xff] %vm116, %v102
  %118 = vst.msk [vmem:[%s3 + $0x8] sm:$0xff] %vm116, %v105
  %119 = vst.msk [vmem:[%s3 + $0x10] sm:$0xff] %vm116, %v110
  %120 = vst.msk [vmem:[%s3 + $0x18] sm:$0xff] %vm116, %v113
  // Predicated region
  $region14: #{vit_feature_extractor.12} parent=0 // pred_check
    _
  $region15: #{vit_feature_extractor.12} parent=0 // pred_check_branch
    %122 = sbr.rel (0) target = $region17
  $region16: #{vit_feature_extractor.12} parent=0 // pred_region
    _
  $region17: #{vit_feature_extractor.12} parent=0 // pred_fallthru
    _
  // Predicated region
  $region18: #{vit_feature_extractor.12} parent=0 // pred_check
    _
  $region19: #{vit_feature_extractor.12} parent=0 // pred_check_branch
    %124 = sbr.rel (0) target = $region21
  $region20: #{vit_feature_extractor.12} parent=0 // pred_region
    _
  $region21: #{vit_feature_extractor.12} parent=0 // pred_fallthru
    _

// kernel: vit_feature_extractor.14
$region0: #{vit_feature_extractor.14}
  #allocation0 [shape = 'u32[]', space=smem, size = 0x4, offset = 0x4, fixed_abs, tag = 'smem constant byte address 0x4 - core index']
  #allocation1 [shape = 'u32[144,128]{1,0:T(1,128)}', space=vmem, size = 0x12000, scoped, tag = 'internal scratch']
  %s0 = inlined_call_operand.vmem [shape: bf16[48,32], index: 0, kind: input, shape index: {}]
  %s1 = inlined_call_operand.vmem [shape: bf16[32,96], index: 1, kind: input, shape index: {}]
  %s2 = inlined_call_operand.vmem [shape: f32[1,96], index: 2, kind: input, shape index: {}]
  %s3 = inlined_call_operand.vmem [shape: bf16[48,96], index: 3, kind: output, shape index: {}]
  %s4 = sld [smem:[#allocation0]]
  $region22: #{vit_feature_extractor.14} parent=0
    _
  %s6 = ssub.s32 1, %s4
  %s7 = scalar_select 0, %s6, %s4
  // Predicated region
  $region2: #{vit_feature_extractor.14} parent=0 // pred_check
    _
  $region3: #{vit_feature_extractor.14} parent=0 // pred_check_branch
    %9 = sbr.rel (0) target = $region5
  $region4: #{vit_feature_extractor.14} parent=0 // pred_region
    _
  $region5: #{vit_feature_extractor.14} parent=0 // pred_fallthru
    _
  // Predicated region
  $region6: #{vit_feature_extractor.14} parent=0 // pred_check
    _
  $region7: #{vit_feature_extractor.14} parent=0 // pred_check_branch
    %11 = sbr.rel (0) target = $region9
  $region8: #{vit_feature_extractor.14} parent=0 // pred_region
    _
  $region9: #{vit_feature_extractor.14} parent=0 // pred_fallthru
    _
  // Predicated region
  $region10: #{vit_feature_extractor.14} parent=0 // pred_check
    _
  $region11: #{vit_feature_extractor.14} parent=0 // pred_check_branch
    %13 = sbr.rel (0) target = $region13
  $region12: #{vit_feature_extractor.14} parent=0 // pred_region
    _
  $region13: #{vit_feature_extractor.14} parent=0 // pred_fallthru
    _
  %v15 = vld [vmem:[%s0] sm:$0xf]
  %v16 = vld [vmem:[%s0 + $0x4] sm:$0xf]
  %v17 = vld [vmem:[%s0 + $0x8] sm:$0xf]
  %v18 = vld [vmem:[%s0 + $0xc] sm:$0xf]
  %v19 = vld [vmem:[%s0 + $0x10] sm:$0xf]
  %v20 = vld [vmem:[%s0 + $0x14] sm:$0xf]
  %v21 = vld [vmem:[%s1] sm:$0xf]
  %v22 = vld [vmem:[%s1 + $0x4] sm:$0xf]
  %v23 = vld [vmem:[%s1 + $0x8] sm:$0xf]
  %v24 = vld [vmem:[%s1 + $0xc] sm:$0xf]
  %v25 = vld [vmem:[%s2] sm:$0x1]
  %v27 = vlaneseq
  %v28 = vshrl.u32 %v27, 7
  %v29 = vsub.s32 0, %v28
  %v30 = vrot.slane %v25, %v29
  %v38 = vunpack.c.l.b16 %v15
  %v39 = vunpack.c.l.b16 %v16
  %v40 = vunpack.c.l.b16 %v17
  %v41 = vunpack.c.l.b16 %v18
  %v42 = vunpack.c.l.b16 %v19
  %v43 = vunpack.c.l.b16 %v20
  %v44 = vpack.c.b16 %v39, %v38
  %v45 = vpack.c.b16 %v41, %v40
  %v46 = vpack.c.b16 %v43, %v42
  %v51 = vunpack.c.l.b16 %v21
  %v52 = vunpack.c.l.b16 %v22
  %v53 = vunpack.c.l.b16 %v23
  %v54 = vunpack.c.l.b16 %v24
  %v55 = vpack.c.b16 %v52, %v51
  %v56 = vpack.c.b16 %v54, %v53
  %vm59 = vcmask 261120
  %v61 = vsel %vm59, %v44, 0
  %v64 = vsel %vm59, %v45, 0
  %v67 = vsel %vm59, %v46, 0
  %69 = vmatprep.subr.bf16.mxu0 0
  %70 = vmatpush1.bf16.msra.mxu0 %v55
  %71 = vmatprep.subr.bf16.mxu0 0
  %72 = vmatpush1.bf16.msra.mxu0 %v56
  %73 = vmatprep.subr.bf16.mxu0 0
  %74 = vmatpush1.bf16.msra.mxu0 0
  %75 = vmatprep.subr.bf16.mxu0 0
  %76 = vmatpush1.bf16.msra.mxu0 0
  %77 = vmatprep.subr.bf16.mxu0 0
  %78 = vmatpush1.bf16.msra.mxu0 0
  %79 = vmatprep.subr.bf16.mxu0 0
  %80 = vmatpush1.bf16.msra.mxu0 0
  %81 = vmatprep.subr.bf16.mxu0 0
  %82 = vmatpush1.bf16.msra.mxu0 0
  %83 = vmatprep.subr.bf16.mxu0 0
  %84 = vmatpush1.bf16.msra.mxu0 0
  %85 = vmatprep.subr.bf16.mxu0 0
  %86 = vmatpush1.bf16.msra.mxu0 0
  %87 = vmatprep.subr.bf16.mxu0 0
  %88 = vmatpush1.bf16.msra.mxu0 0
  %89 = vmatprep.subr.bf16.mxu0 0
  %90 = vmatpush1.bf16.msra.mxu0 0
  %91 = vmatprep.subr.bf16.mxu0 0
  %92 = vmatpush1.bf16.msra.mxu0 0
  %93 = vmatprep.subr.bf16.mxu0 0
  %94 = vmatpush1.bf16.msra.mxu0 0
  %95 = vmatprep.subr.bf16.mxu0 0
  %96 = vmatpush1.bf16.msra.mxu0 0
  %97 = vmatprep.subr.bf16.mxu0 0
  %98 = vmatpush1.bf16.msra.mxu0 0
  %99 = vmatprep.subr.bf16.mxu0 0
  %100 = vmatpush1.bf16.msra.mxu0 0
  %101 = vmatprep.mubr.bf16.mxu0 0
  %102 = vmatmul.mubr.bf16.gmra.mrb[0].mxu0 %v61
  %v103 = vpop.f32.mrb[0].mxu0
  %v104 = vadd.f32 %v30, %v103
  %v105 = vpop.f32.mrb[0].mxu0
  %v106 = vpop.f32.mrb[0].mxu0
  %v107 = vadd.f32 %v30, %v106
  %v108 = vpop.f32.mrb[0].mxu0
  %109 = vmatprep.mubr.bf16.mxu0 0
  %110 = vmatmul.mubr.bf16.gmra.mrb[0].mxu0 %v64
  %v111 = vpop.f32.mrb[0].mxu0
  %v112 = vadd.f32 %v30, %v111
  %v113 = vpop.f32.mrb[0].mxu0
  %v114 = vpop.f32.mrb[0].mxu0
  %v115 = vadd.f32 %v30, %v114
  %v116 = vpop.f32.mrb[0].mxu0
  %117 = vmatprep.mubr.bf16.mxu0 0
  %118 = vmatmul.mubr.bf16.gmra.mrb[0].mxu0 %v67
  %v119 = vpop.f32.mrb[0].mxu0
  %v120 = vadd.f32 %v30, %v119
  %v121 = vpop.f32.mrb[0].mxu0
  %v122 = vpop.f32.mrb[0].mxu0
  %v123 = vadd.f32 %v30, %v122
  %v124 = vpop.f32.mrb[0].mxu0
  %125 = vdwg.mxu0
  %v126 = vpack.c.bf16 %v107, %v104
  %v127 = vpack.c.bf16 %v115, %v112
  %v128 = vpack.c.bf16 %v123, %v120
  %v132 = vunpack.c.l.b16 %v126
  %v133 = vunpack.c.h.b16 %v126
  %v134 = vunpack.c.l.b16 %v127
  %v135 = vunpack.c.h.b16 %v127
  %v136 = vunpack.c.l.b16 %v128
  %v137 = vunpack.c.h.b16 %v128
  %v138 = vpack.c.b16 %v132, %v132
  %v139 = vpack.c.b16 %v133, %v133
  %v140 = vpack.c.b16 %v134, %v134
  %v141 = vpack.c.b16 %v135, %v135
  %v142 = vpack.c.b16 %v136, %v136
  %v143 = vpack.c.b16 %v137, %v137
  %vm150 = vcmask 781312
  %151 = vst.msk [vmem:[%s3] sm:$0xf] %vm150, %v138
  %152 = vst.msk [vmem:[%s3 + $0x4] sm:$0xf] %vm150, %v139
  %153 = vst.msk [vmem:[%s3 + $0x8] sm:$0xf] %vm150, %v140
  %154 = vst.msk [vmem:[%s3 + $0xc] sm:$0xf] %vm150, %v141
  %155 = vst.msk [vmem:[%s3 + $0x10] sm:$0xf] %vm150, %v142
  %156 = vst.msk [vmem:[%s3 + $0x14] sm:$0xf] %vm150, %v143
  // Predicated region
  $region14: #{vit_feature_extractor.14} parent=0 // pred_check
    _
  $region15: #{vit_feature_extractor.14} parent=0 // pred_check_branch
    %158 = sbr.rel (0) target = $region17
  $region16: #{vit_feature_extractor.14} parent=0 // pred_region
    _
  $region17: #{vit_feature_extractor.14} parent=0 // pred_fallthru
    _
  // Predicated region
  $region18: #{vit_feature_extractor.14} parent=0 // pred_check
    _
  $region19: #{vit_feature_extractor.14} parent=0 // pred_check_branch
    %160 = sbr.rel (0) target = $region21
  $region20: #{vit_feature_extractor.14} parent=0 // pred_region
    _
  $region21: #{vit_feature_extractor.14} parent=0 // pred_fallthru
    _

// kernel: vit_feature_extractor.13
$region0: #{vit_feature_extractor.13}
  #allocation0 [shape = 'u32[]', space=smem, size = 0x4, offset = 0x4, fixed_abs, tag = 'smem constant byte address 0x4 - core index']
  #allocation1 [shape = 'u32[144,128]{1,0:T(1,128)}', space=vmem, size = 0x12000, scoped, tag = 'internal scratch']
  %s0 = inlined_call_operand.vmem [shape: f32[2,16,32], index: 0, kind: input, shape index: {}]
  %s1 = inlined_call_operand.vmem [shape: f32[24,32], index: 1, kind: input, shape index: {}]
  %s2 = inlined_call_operand.vmem [shape: f32[1,32], index: 2, kind: input, shape index: {}]
  %s3 = inlined_call_operand.vmem [shape: f32[1,32], index: 3, kind: input, shape index: {}]
  %s4 = inlined_call_operand.vmem [shape: f32[2,24,32], index: 4, kind: output, shape index: {0}]
  %s5 = inlined_call_operand.vmem [shape: bf16[2,24,32], index: 5, kind: output, shape index: {1}]
  %6 = xla_tuple %s4, %s5
  %s7 = sld [smem:[#allocation0]]
  $region57: #{vit_feature_extractor.13} parent=0
    _
  %s9 = ssub.s32 1, %s7
  %s10 = scalar_select 0, %s9, %s7
  loop: start=0, step=1, limit=4
  $region2: #{vit_feature_extractor.13} parent=0 // loop_pre_header
    _
  $region3: #{vit_feature_extractor.13} parent=0 // loop_header
    %s12 = sphi 0, %s16
    %p13 = scmp.ge.s32.totalorder %s12, 4
    %s22 = sphi 0, %s24
    %s25 = sphi 0, %s22
    %s26 = sphi 0, %s25
    %s42 = sphi 0, %s26
    %s46 = sphi 0, %s46
    %s48 = sphi 0, %s46
    %s49 = sphi 0, %s48
    %s63 = sphi 0, %s49
    %s67 = sphi 0, %s67
    %s69 = sphi 0, %s67
    %s70 = sphi 0, %s69
    %s84 = sphi 0, %s70
    %s88 = sphi 0, %s88
    %s90 = sphi 0, %s88
    %s91 = sphi 0, %s90
    %s105 = sphi 0, %s91
    %s111 = sphi 0, %s113
    %s114 = sphi 0, %s111
    %s115 = sphi 0, %s114
    %s131 = sphi 0, %s115
    %s137 = sphi 0, %s139
    %s140 = sphi 0, %s137
    %s141 = sphi 0, %s140
    %s157 = sphi 0, %s141
  $region4: #{vit_feature_extractor.13} parent=0 // loop_header_branch
    %15 = sbr.rel (%p13) target = $region8
  $region5: #{vit_feature_extractor.13} parent=0 // loop_body
    %s17 = ssub.s32 %s12, 1
    %s18 = ssub.s32 %s12, 2
    %s19 = sadd.s32 %s12, 1
    %s20 = ssub.s32 %s12, %s19
    %p21 = scmp.eq.s32.totalorder %s20, 0
    %s23 = sadd.s32 %s22, 1
    %s24 = scalar_select %p21, %s22, %s23
    %p27 = pneg %p21
    %p28 = scmp.eq.s32.totalorder %s12, 1
    %p29 = por %p27, %p28
    %p30 = scmp.ne.s32.totalorder %s22, %s25
    %p31 = scmp.eq.s32.totalorder %s12, 0
    %p32 = por %p30, %p31
    %p33 = scmp.ne.s32.totalorder %s22, %s25
    %p34 = scmp.eq.s32.totalorder %s17, 1
    %p35 = por %p33, %p34
    %p36 = scmp.ne.s32.totalorder %s25, %s26
    %p37 = scmp.eq.s32.totalorder %s17, 0
    %p38 = por %p36, %p37
    %p39 = scmp.ne.s32.totalorder %s25, %s26
    %p40 = scmp.eq.s32.totalorder %s18, 1
    %p41 = por %p39, %p40
    %p43 = scmp.ne.s32.totalorder %s26, %s42
    %p44 = scmp.eq.s32.totalorder %s18, 0
    %p45 = por %p43, %p44
    %s47 = sadd.s32 %s46, 1
    %p50 = scmp.eq.s32.totalorder %s12, 1
    %p51 = scmp.ne.s32.totalorder %s46, %s48
    %p52 = scmp.eq.s32.totalorder %s12, 0
    %p53 = por %p51, %p52
    %p54 = scmp.ne.s32.totalorder %s46, %s48
    %p55 = scmp.eq.s32.totalorder %s17, 1
    %p56 = por %p54, %p55
    %p57 = scmp.ne.s32.totalorder %s48, %s49
    %p58 = scmp.eq.s32.totalorder %s17, 0
    %p59 = por %p57, %p58
    %p60 = scmp.ne.s32.totalorder %s48, %s49
    %p61 = scmp.eq.s32.totalorder %s18, 1
    %p62 = por %p60, %p61
    %p64 = scmp.ne.s32.totalorder %s49, %s63
    %p65 = scmp.eq.s32.totalorder %s18, 0
    %p66 = por %p64, %p65
    %s68 = sadd.s32 %s67, 1
    %p71 = scmp.eq.s32.totalorder %s12, 1
    %p72 = scmp.ne.s32.totalorder %s67, %s69
    %p73 = scmp.eq.s32.totalorder %s12, 0
    %p74 = por %p72, %p73
    %p75 = scmp.ne.s32.totalorder %s67, %s69
    %p76 = scmp.eq.s32.totalorder %s17, 1
    %p77 = por %p75, %p76
    %p78 = scmp.ne.s32.totalorder %s69, %s70
    %p79 = scmp.eq.s32.totalorder %s17, 0
    %p80 = por %p78, %p79
    %p81 = scmp.ne.s32.totalorder %s69, %s70
    %p82 = scmp.eq.s32.totalorder %s18, 1
    %p83 = por %p81, %p82
    %p85 = scmp.ne.s32.totalorder %s70, %s84
    %p86 = scmp.eq.s32.totalorder %s18, 0
    %p87 = por %p85, %p86
    %s89 = sadd.s32 %s88, 1
    %p92 = scmp.eq.s32.totalorder %s12, 1
    %p93 = scmp.ne.s32.totalorder %s88, %s90
    %p94 = scmp.eq.s32.totalorder %s12, 0
    %p95 = por %p93, %p94
    %p96 = scmp.ne.s32.totalorder %s88, %s90
    %p97 = scmp.eq.s32.totalorder %s17, 1
    %p98 = por %p96, %p97
    %p99 = scmp.ne.s32.totalorder %s90, %s91
    %p100 = scmp.eq.s32.totalorder %s17, 0
    %p101 = por %p99, %p100
    %p102 = scmp.ne.s32.totalorder %s90, %s91
    %p103 = scmp.eq.s32.totalorder %s18, 1
    %p104 = por %p102, %p103
    %p106 = scmp.ne.s32.totalorder %s91, %s105
    %p107 = scmp.eq.s32.totalorder %s18, 0
    %p108 = por %p106, %p107
    %s109 = ssub.s32 %s12, %s19
    %p110 = scmp.eq.s32.totalorder %s109, 0
    %s112 = sadd.s32 %s111, 1
    %s113 = scalar_select %p110, %s111, %s112
    %p116 = pneg %p110
    %p117 = scmp.eq.s32.totalorder %s12, 1
    %p118 = por %p116, %p117
    %p119 = scmp.ne.s32.totalorder %s111, %s114
    %p120 = scmp.eq.s32.totalorder %s12, 0
    %p121 = por %p119, %p120
    %p122 = scmp.ne.s32.totalorder %s111, %s114
    %p123 = scmp.eq.s32.totalorder %s17, 1
    %p124 = por %p122, %p123
    %p125 = scmp.ne.s32.totalorder %s114, %s115
    %p126 = scmp.eq.s32.totalorder %s17, 0
    %p127 = por %p125, %p126
    %p128 = scmp.ne.s32.totalorder %s114, %s115
    %p129 = scmp.eq.s32.totalorder %s18, 1
    %p130 = por %p128, %p129
    %p132 = scmp.ne.s32.totalorder %s115, %s131
    %p133 = scmp.eq.s32.totalorder %s18, 0
    %p134 = por %p132, %p133
    %s135 = ssub.s32 %s12, %s19
    %p136 = scmp.eq.s32.totalorder %s135, 0
    %s138 = sadd.s32 %s137, 1
    %s139 = scalar_select %p136, %s137, %s138
    %p142 = pneg %p136
    %p143 = scmp.eq.s32.totalorder %s12, 1
    %p144 = por %p142, %p143
    %p145 = scmp.ne.s32.totalorder %s137, %s140
    %p146 = scmp.eq.s32.totalorder %s12, 0
    %p147 = por %p145, %p146
    %p148 = scmp.ne.s32.totalorder %s137, %s140
    %p149 = scmp.eq.s32.totalorder %s17, 1
    %p150 = por %p148, %p149
    %p151 = scmp.ne.s32.totalorder %s140, %s141
    %p152 = scmp.eq.s32.totalorder %s17, 0
    %p153 = por %p151, %p152
    %p154 = scmp.ne.s32.totalorder %s140, %s141
    %p155 = scmp.eq.s32.totalorder %s18, 1
    %p156 = por %p154, %p155
    %p158 = scmp.ne.s32.totalorder %s141, %s157
    %p159 = scmp.eq.s32.totalorder %s18, 0
    %p160 = por %p158, %p159
    %p161 = scmp.le.s32.totalorder 1, %s12
    %p162 = scmp.lt.s32.totalorder %s12, 3
    %p163 = pnand %p161, %p162
    %p164 = pneg %p163
    // Predicated region
    $region9: #{vit_feature_extractor.13} parent=5 // pred_check
      _
    $region10: #{vit_feature_extractor.13} parent=5 // pred_check_branch
      %166 = sbr.rel (%p163) target = $region12
    $region11: #{vit_feature_extractor.13} parent=5 // pred_region
      %s167 = ssub.s32 %s12, 1
      // Predicated region
      $region13: #{vit_feature_extractor.13} parent=11 // pred_check
        %p168 = pneg %p59
      $region14: #{vit_feature_extractor.13} parent=11 // pred_check_branch
        %170 = sbr.rel (%p168) target = $region16
      $region15: #{vit_feature_extractor.13} parent=11 // pred_region
        _
      $region16: #{vit_feature_extractor.13} parent=11 // pred_fallthru
        _
      // Predicated region
      $region17: #{vit_feature_extractor.13} parent=11 // pred_check
        %p171 = pneg %p80
      $region18: #{vit_feature_extractor.13} parent=11 // pred_check_branch
        %173 = sbr.rel (%p171) target = $region20
      $region19: #{vit_feature_extractor.13} parent=11 // pred_region
        _
      $region20: #{vit_feature_extractor.13} parent=11 // pred_fallthru
        _
      // Predicated region
      $region21: #{vit_feature_extractor.13} parent=11 // pred_check
        %p174 = pneg %p101
      $region22: #{vit_feature_extractor.13} parent=11 // pred_check_branch
        %176 = sbr.rel (%p174) target = $region24
      $region23: #{vit_feature_extractor.13} parent=11 // pred_region
        _
      $region24: #{vit_feature_extractor.13} parent=11 // pred_fallthru
        _
    $region12: #{vit_feature_extractor.13} parent=5 // pred_fallthru
      _
    %p177 = scmp.lt.s32.totalorder %s12, 2
    // Predicated region
    $region25: #{vit_feature_extractor.13} parent=5 // pred_check
      %p178 = pneg %p177
    $region26: #{vit_feature_extractor.13} parent=5 // pred_check_branch
      %180 = sbr.rel (%p178) target = $region28
    $region27: #{vit_feature_extractor.13} parent=5 // pred_region
      // Predicated region
      $region29: #{vit_feature_extractor.13} parent=27 // pred_check
        %p181 = pneg %p32
      $region30: #{vit_feature_extractor.13} parent=27 // pred_check_branch
        %183 = sbr.rel (%p181) target = $region32
      $region31: #{vit_feature_extractor.13} parent=27 // pred_region
        %p184 = scmp.lt.s32.totalorder %s12, 1
        %s185 = scalar_select %p184, %s12, 1
        %s186 = smul.addr %s185, 2
        %s187 = smul.addr %s186, 8
        %s188 = scalar_lea.vmem %s0, %s187
      $region32: #{vit_feature_extractor.13} parent=27 // pred_fallthru
        _
    $region28: #{vit_feature_extractor.13} parent=5 // pred_fallthru
      _
    %p189 = scmp.le.s32.totalorder 1, %s12
    %p190 = scmp.lt.s32.totalorder %s12, 3
    %p191 = pnand %p189, %p190
    %p192 = pneg %p191
    // Predicated region
    $region33: #{vit_feature_extractor.13} parent=5 // pred_check
      _
    $region34: #{vit_feature_extractor.13} parent=5 // pred_check_branch
      %194 = sbr.rel (%p191) target = $region36
    $region35: #{vit_feature_extractor.13} parent=5 // pred_region
      %s195 = ssub.s32 %s12, 1
      %p196 = scmp.lt.s32.totalorder %s17, 1
      %s197 = scalar_select %p196, %s17, 1
      %s198 = smul.addr %s197, 2
      %s199 = smul.addr %s198, 8
      %s200 = scalar_lea.vmem %s0, %s199
      %p201 = pneg %p38
      %p202 = pneg %p35
      %p203 = pneg %p59
      %p204 = pneg %p56
      %p205 = pneg %p80
      %p206 = pneg %p77
      %p207 = pneg %p101
      %p208 = pneg %p98
      %p209 = pneg %p127
      %p210 = pneg %p124
      %p211 = scmp.lt.s32.totalorder %s17, 1
      %s212 = scalar_select %p211, %s17, 1
      %s213 = smul.addr %s212, 3
      %s214 = smul.addr %s213, 8
      %s215 = scalar_lea.vmem %s4, %s214
      %p216 = pneg %p153
      %p217 = pneg %p150
      %p218 = scmp.lt.s32.totalorder %s17, 1
      %s219 = scalar_select %p218, %s17, 1
      %s220 = smul.addr %s219, 3
      %s221 = smul.addr %s220, 4
      %s222 = scalar_lea.vmem %s5, %s221
      %p223 = scmp.lt.s32.totalorder %s17, 1
      %s224 = scalar_select %p223, %s17, 1
      %s225 = smul.addr %s224, 2
      %s226 = smul.addr %s225, 8
      %s227 = scalar_lea.vmem %s0, %s226
      %p228 = scmp.lt.s32.totalorder %s17, 1
      %s229 = scalar_select %p228, %s17, 1
      %s230 = smul.addr %s229, 3
      %s231 = smul.addr %s230, 8
      %s232 = scalar_lea.vmem %s4, %s231
      %p233 = scmp.lt.s32.totalorder %s17, 1
      %s234 = scalar_select %p233, %s17, 1
      %s235 = smul.addr %s234, 3
      %s236 = smul.addr %s235, 4
      %s237 = scalar_lea.vmem %s5, %s236
      %v238 = vld [vmem:[%s2] sm:$0x1]
      %v239 = vld [vmem:[%s3] sm:$0x1]
      %v240 = vld [vmem:[%s227] sm:$0xff]
      %v241 = vld [vmem:[%s227 + $0x8] sm:$0xff]
      %v242 = vld [vmem:[%s1] sm:$0xff]
      %v243 = vld [vmem:[%s1 + $0x8] sm:$0xff]
      %v244 = vadd.f32 %v240, %v242
      %v245 = vadd.f32 %v241, %v243
      %vm246 = vcmask 261120
      %247 = vst.msk [vmem:[%s232] sm:$0xff] %vm246, %v244
      %248 = vst.msk [vmem:[%s232 + $0x8] sm:$0xff] %vm246, %v245
      %v249 = vsel %vm246, %v244, 0.0
      %250 = vadd.xlane.f32.xlu0 %v249
      %v251 = vpop.xlane.xlu0 %250
      %v252 = vsel %vm246, %v245, 0.0
      %253 = vadd.xlane.f32.xlu0 %v252
      %v254 = vpop.xlane.xlu0 %253
      %v255 = vrcp.pop 32.0
      %v256 = vmul.f32 %v251, %v255
      %v257 = vmul.f32 %v254, %v255
      %v258 = vsub.f32 %v244, %v256
      %v259 = vsub.f32 %v245, %v257
      %v260 = vmul.f32 %v258, %v258
      %v261 = vmul.f32 %v259, %v259
      %v262 = vsel %vm246, %v260, 0.0
      %263 = vadd.xlane.f32.xlu0 %v262
      %v264 = vpop.xlane.xlu0 %263
      %v265 = vsel %vm246, %v261, 0.0
      %266 = vadd.xlane.f32.xlu0 %v265
      %v267 = vpop.xlane.xlu0 %266
      %v268 = vmul.f32 %v264, %v255
      %v269 = vmul.f32 %v267, %v255
      %v270 = vadd.f32 %v268, 1e-06
      %v271 = vadd.f32 %v269, 1e-06
      %v272 = vrsqrt.pop %v270
      %v273 = vrsqrt.pop %v271
      %v274 = vmul.f32 %v258, %v272
      %v275 = vmul.f32 %v259, %v273
      %v277 = vlaneseq
      %v278 = vshrl.u32 %v277, 7
      %v279 = vsub.s32 0, %v278
      %v280 = vrot.slane %v238, %v279
      %v282 = vmul.f32 %v274, %v280
      %v283 = vmul.f32 %v275, %v280
      %v285 = vlaneseq
      %v286 = vshrl.u32 %v285, 7
      %v287 = vsub.s32 0, %v286
      %v288 = vrot.slane %v239, %v287
      %v290 = vadd.f32 %v282, %v288
      %v291 = vadd.f32 %v283, %v288
      %v292 = vpack.c.bf16 %v291, %v290
      %v294 = vunpack.c.l.b16 %v292
      %v295 = vunpack.c.h.b16 %v292
      %v296 = vpack.c.b16 %v294, %v294
      %v297 = vpack.c.b16 %v295, %v295
      %vm300 = vcmask 257024
      %301 = vst.msk [vmem:[%s237] sm:$0xf] %vm300, %v296
      %302 = vst.msk [vmem:[%s237 + $0x4] sm:$0xf] %vm300, %v297
      %v303 = vld [vmem:[%s1 + $0x10] sm:$0xff]
      %304 = vst.msk [vmem:[%s232 + $0x10] sm:$0xff] %vm246, %v303
      %v305 = vsel %vm246, %v303, 0.0
      %306 = vadd.xlane.f32.xlu0 %v305
      %v307 = vpop.xlane.xlu0 %306
      %v308 = vmul.f32 %v307, %v255
      %v309 = vsub.f32 %v303, %v308
      %v310 = vmul.f32 %v309, %v309
      %v311 = vsel %vm246, %v310, 0.0
      %312 = vadd.xlane.f32.xlu0 %v311
      %v313 = vpop.xlane.xlu0 %312
      %v314 = vmul.f32 %v313, %v255
      %v315 = vadd.f32 %v314, 1e-06
      %v316 = vrsqrt.pop %v315
      %v317 = vmul.f32 %v309, %v316
      %v318 = vmul.f32 %v317, %v280
      %v319 = vadd.f32 %v318, %v288
      %v320 = vpack.c.bf16 %v319, %v319
      %321 = vst.msk [vmem:[%s237 + $0x8] sm:$0xf] %vm300, %v320
      %p322 = scmp.lt.s32.totalorder %s17, 1
      %s323 = scalar_select %p322, %s17, 1
      %s324 = smul.addr %s323, 3
      %s325 = smul.addr %s324, 8
      %s326 = scalar_lea.vmem %s4, %s325
      %p327 = scmp.lt.s32.totalorder %s17, 1
      %s328 = scalar_select %p327, %s17, 1
      %s329 = smul.addr %s328, 3
      %s330 = smul.addr %s329, 4
      %s331 = scalar_lea.vmem %s5, %s330
      // Predicated region
      $region37: #{vit_feature_extractor.13} parent=35 // pred_check
        %p332 = pneg %p124
      $region38: #{vit_feature_extractor.13} parent=35 // pred_check_branch
        %334 = sbr.rel (%p332) target = $region40
      $region39: #{vit_feature_extractor.13} parent=35 // pred_region
        _
      $region40: #{vit_feature_extractor.13} parent=35 // pred_fallthru
        _
      // Predicated region
      $region41: #{vit_feature_extractor.13} parent=35 // pred_check
        %p335 = pneg %p150
      $region42: #{vit_feature_extractor.13} parent=35 // pred_check_branch
        %337 = sbr.rel (%p335) target = $region44
      $region43: #{vit_feature_extractor.13} parent=35 // pred_region
        _
      $region44: #{vit_feature_extractor.13} parent=35 // pred_fallthru
        _
    $region36: #{vit_feature_extractor.13} parent=5 // pred_fallthru
      _
    %p338 = scmp.le.s32.totalorder 2, %s12
    // Predicated region
    $region45: #{vit_feature_extractor.13} parent=5 // pred_check
      %p339 = pneg %p338
    $region46: #{vit_feature_extractor.13} parent=5 // pred_check_branch
      %341 = sbr.rel (%p339) target = $region48
    $region47: #{vit_feature_extractor.13} parent=5 // pred_region
      %s342 = ssub.s32 %s12, 2
      // Predicated region
      $region49: #{vit_feature_extractor.13} parent=47 // pred_check
        %p343 = pneg %p130
      $region50: #{vit_feature_extractor.13} parent=47 // pred_check_branch
        %345 = sbr.rel (%p343) target = $region52
      $region51: #{vit_feature_extractor.13} parent=47 // pred_region
        %p346 = scmp.lt.s32.totalorder %s18, 1
        %s347 = scalar_select %p346, %s18, 1
        %s348 = smul.addr %s347, 3
        %s349 = smul.addr %s348, 8
        %s350 = scalar_lea.vmem %s4, %s349
      $region52: #{vit_feature_extractor.13} parent=47 // pred_fallthru
        _
      // Predicated region
      $region53: #{vit_feature_extractor.13} parent=47 // pred_check
        %p351 = pneg %p156
      $region54: #{vit_feature_extractor.13} parent=47 // pred_check_branch
        %353 = sbr.rel (%p351) target = $region56
      $region55: #{vit_feature_extractor.13} parent=47 // pred_region
        %p354 = scmp.lt.s32.totalorder %s18, 1
        %s355 = scalar_select %p354, %s18, 1
        %s356 = smul.addr %s355, 3
        %s357 = smul.addr %s356, 4
        %s358 = scalar_lea.vmem %s5, %s357
      $region56: #{vit_feature_extractor.13} parent=47 // pred_fallthru
        _
    $region48: #{vit_feature_extractor.13} parent=5 // pred_fallthru
      _
  $region6: #{vit_feature_extractor.13} parent=0 // loop_footer
    %s16 = sadd.s32 1, %s12
  $region7: #{vit_feature_extractor.13} parent=0 // loop_footer_branch
    %11 = sbr.rel target = $region3
  $region8: #{vit_feature_extractor.13} parent=0 // loop_exit
    _

// kernel: vit_feature_extractor.15
$region0: #{vit_feature_extractor.15}
  #allocation0 [shape = 'u32[]', space=smem, size = 0x4, offset = 0x4, fixed_abs, tag = 'smem constant byte address 0x4 - core index']
  #allocation1 [shape = 'u32[144,128]{1,0:T(1,128)}', space=vmem, size = 0x12000, scoped, tag = 'internal scratch']
  %s0 = inlined_call_operand.vmem [shape: bf16[3,2,4,24,8], index: 0, kind: input, shape index: {}]
  %s1 = inlined_call_operand.vmem [shape: bf16[2,4,24,8], index: 1, kind: output, shape index: {}]
  %s2 = sld [smem:[#allocation0]]
  $region78: #{vit_feature_extractor.15} parent=0
    _
  %s4 = ssub.s32 1, %s2
  %s5 = scalar_select 0, %s4, %s2
  $region1: #{vit_feature_extractor.15} parent=0
    #allocation2 [shape = 'u8[36864]{0}', space=vmem, size = 0x9000, scoped, tag = 'input window, operand 0']
    loop: start=0, step=1, limit=10
    $region2: #{vit_feature_extractor.15} parent=1 // loop_pre_header
      _
    $region3: #{vit_feature_extractor.15} parent=1 // loop_header
      %s7 = sphi 0, %s11
      %p8 = scmp.ge.s32.totalorder %s7, 10
      %s14 = sphi 0, %s26
      %s15 = sphi 0, %s22
      %s16 = sphi 0, %s14
      %s17 = sphi 0, %s15
      %s18 = sphi 0, %s16
      %s19 = sphi 0, %s17
      %s31 = sphi 0, %s33
      %s34 = sphi 0, %s31
      %s35 = sphi 0, %s34
      %s51 = sphi 0, %s35
      %s59 = sphi 0, %s61
      %s62 = sphi 0, %s59
      %s63 = sphi 0, %s62
      %s79 = sphi 0, %s63
    $region4: #{vit_feature_extractor.15} parent=1 // loop_header_branch
      %10 = sbr.rel (%p8) target = $region8
    $region5: #{vit_feature_extractor.15} parent=1 // loop_body
      %s12 = ssub.s32 %s7, 1
      %s13 = ssub.s32 %s7, 2
      %s20 = sadd.s32 1, %s15
      %p21 = scmp.ge.s32.totalorder %s20, 4
      %s22 = scalar_select %p21, 0, %s20
      %s23 = sadd.s32 1, %s14
      %s24 = scalar_select %p21, %s23, %s14
      %p25 = scmp.ge.s32.totalorder %s24, 2
      %s26 = scalar_select %p25, 0, %s24
      %s27 = ssub.s32 %s14, %s26
      %s28 = ssub.s32 %s15, %s22
      %s29 = sor.u32 %s27, %s28
      %p30 = scmp.eq.s32.totalorder %s29, 0
      %s32 = sadd.s32 %s31, 1
      %s33 = scalar_select %p30, %s31, %s32
      %p36 = pneg %p30
      %p37 = scmp.eq.s32.totalorder %s7, 7
      %p38 = por %p36, %p37
      %p39 = scmp.ne.s32.totalorder %s31, %s34
      %p40 = scmp.eq.s32.totalorder %s7, 0
      %p41 = por %p39, %p40
      %p42 = scmp.ne.s32.totalorder %s31, %s34
      %p43 = scmp.eq.s32.totalorder %s12, 7
      %p44 = por %p42, %p43
      %p45 = scmp.ne.s32.totalorder %s34, %s35
      %p46 = scmp.eq.s32.totalorder %s12, 0
      %p47 = por %p45, %p46
      %p48 = scmp.ne.s32.totalorder %s34, %s35
      %p49 = scmp.eq.s32.totalorder %s13, 7
      %p50 = por %p48, %p49
      %p52 = scmp.ne.s32.totalorder %s35, %s51
      %p53 = scmp.eq.s32.totalorder %s13, 0
      %p54 = por %p52, %p53
      %s55 = ssub.s32 %s14, %s26
      %s56 = ssub.s32 %s15, %s22
      %s57 = sor.u32 %s55, %s56
      %p58 = scmp.eq.s32.totalorder %s57, 0
      %s60 = sadd.s32 %s59, 1
      %s61 = scalar_select %p58, %s59, %s60
      %p64 = pneg %p58
      %p65 = scmp.eq.s32.totalorder %s7, 7
      %p66 = por %p64, %p65
      %p67 = scmp.ne.s32.totalorder %s59, %s62
      %p68 = scmp.eq.s32.totalorder %s7, 0
      %p69 = por %p67, %p68
      %p70 = scmp.ne.s32.totalorder %s59, %s62
      %p71 = scmp.eq.s32.totalorder %s12, 7
      %p72 = por %p70, %p71
      %p73 = scmp.ne.s32.totalorder %s62, %s63
      %p74 = scmp.eq.s32.totalorder %s12, 0
      %p75 = por %p73, %p74
      %p76 = scmp.ne.s32.totalorder %s62, %s63
      %p77 = scmp.eq.s32.totalorder %s13, 7
      %p78 = por %p76, %p77
      %p80 = scmp.ne.s32.totalorder %s63, %s79
      %p81 = scmp.eq.s32.totalorder %s13, 0
      %p82 = por %p80, %p81
      %p83 = scmp.le.s32.totalorder 1, %s7
      %p84 = scmp.lt.s32.totalorder %s7, 9
      %p85 = pnand %p83, %p84
      %p86 = pneg %p85
      // Predicated region
      $region9: #{vit_feature_extractor.15} parent=5 // pred_check
        _
      $region10: #{vit_feature_extractor.15} parent=5 // pred_check_branch
        %88 = sbr.rel (%p85) target = $region12
      $region11: #{vit_feature_extractor.15} parent=5 // pred_region
        %s89 = ssub.s32 %s7, 1
      $region12: #{vit_feature_extractor.15} parent=5 // pred_fallthru
        _
      %p90 = scmp.lt.s32.totalorder %s7, 8
      // Predicated region
      $region13: #{vit_feature_extractor.15} parent=5 // pred_check
        %p91 = pneg %p90
      $region14: #{vit_feature_extractor.15} parent=5 // pred_check_branch
        %93 = sbr.rel (%p91) target = $region16
      $region15: #{vit_feature_extractor.15} parent=5 // pred_region
        // Predicated region
        $region17: #{vit_feature_extractor.15} parent=15 // pred_check
          %p94 = pneg %p41
        $region18: #{vit_feature_extractor.15} parent=15 // pred_check_branch
          %96 = sbr.rel (%p94) target = $region20
        $region19: #{vit_feature_extractor.15} parent=15 // pred_region
          %s97 = sand.u32 %s31, 1
          %s98 = sand.u32 %s31, 1
          %s99 = smul.addr %s98, 36
          %s100 = scalar_lea.vmem [#allocation2], %s99
          %s101 = smul.addr %s15, 3
          %s102 = smul.addr %s14, 12
          %s103 = sadd.s32 %s101, %s102
          %s104 = smul.addr %s103, 4
          %s105 = scalar_lea.vmem %s0, %s104
          // Predicated region
          $region21: #{vit_feature_extractor.15} parent=19 // pred_check
            _
          $region22: #{vit_feature_extractor.15} parent=19 // pred_check_branch
            %107 = sbr.rel (0) target = $region24
          $region23: #{vit_feature_extractor.15} parent=19 // pred_region
            // Predicated region
            $region25: #{vit_feature_extractor.15} parent=23 // pred_check
              _
            $region26: #{vit_feature_extractor.15} parent=23 // pred_check_branch
              %109 = sbr.rel target = $region28
            $region27: #{vit_feature_extractor.15} parent=23 // pred_region
              // Predicated region
              $region40: #{vit_feature_extractor.15} parent=27 // pred_check
                _
              $region41: #{vit_feature_extractor.15} parent=27 // pred_check_branch
                %140 = sbr.rel (0) target = $region43
              $region42: #{vit_feature_extractor.15} parent=27 // pred_region
                loop: start=0, step=1, limit=1
                $region44: #{vit_feature_extractor.15} parent=42 // loop_pre_header
                  _
                $region45: #{vit_feature_extractor.15} parent=42 // loop_header
                  %s142 = sphi 0, %s146
                  %p143 = scmp.ge.s32.totalorder %s142, 1
                  %s147 = sphi %s105, %s105
                  %s148 = sphi %s100, %s100
                $region46: #{vit_feature_extractor.15} parent=42 // loop_header_branch
                  %145 = sbr.rel (%p143) target = $region50
                $region47: #{vit_feature_extractor.15} parent=42 // loop_body
                  _
                $region48: #{vit_feature_extractor.15} parent=42 // loop_footer
                  %s146 = sadd.s32 1, %s142
                $region49: #{vit_feature_extractor.15} parent=42 // loop_footer_branch
                  %141 = sbr.rel target = $region45
                $region50: #{vit_feature_extractor.15} parent=42 // loop_exit
                  _
                loop: start=0, step=1, limit=1
                $region51: #{vit_feature_extractor.15} parent=42 // loop_pre_header
                  _
                $region52: #{vit_feature_extractor.15} parent=42 // loop_header
                  %s151 = sphi 0, %s155
                  %p152 = scmp.ge.s32.totalorder %s151, 1
                  %s156 = sphi %s105, %s105
                  %s157 = sphi %s100, %s100
                $region53: #{vit_feature_extractor.15} parent=42 // loop_header_branch
                  %154 = sbr.rel (%p152) target = $region57
                $region54: #{vit_feature_extractor.15} parent=42 // loop_body
                  %v158 = vld [vmem:[%s156] sm:$0xf]
                  %159 = vst [vmem:[%s157] sm:$0xf] %v158
                  %v160 = vld [vmem:[%s156 + $0x4] sm:$0xf]
                  %161 = vst [vmem:[%s157 + $0x4] sm:$0xf] %v160
                  %v162 = vld [vmem:[%s156 + $0x8] sm:$0xf]
                  %163 = vst [vmem:[%s157 + $0x8] sm:$0xf] %v162
                  %v164 = vld [vmem:[%s156 + $0x60] sm:$0xf]
                  %165 = vst [vmem:[%s157 + $0xc] sm:$0xf] %v164
                  %v166 = vld [vmem:[%s156 + $0x64] sm:$0xf]
                  %167 = vst [vmem:[%s157 + $0x10] sm:$0xf] %v166
                  %v168 = vld [vmem:[%s156 + $0x68] sm:$0xf]
                  %169 = vst [vmem:[%s157 + $0x14] sm:$0xf] %v168
                  %v170 = vld [vmem:[%s156 + $0xc0] sm:$0xf]
                  %171 = vst [vmem:[%s157 + $0x18] sm:$0xf] %v170
                  %v172 = vld [vmem:[%s156 + $0xc4] sm:$0xf]
                  %173 = vst [vmem:[%s157 + $0x1c] sm:$0xf] %v172
                  %v174 = vld [vmem:[%s156 + $0xc8] sm:$0xf]
                  %175 = vst [vmem:[%s157 + $0x20] sm:$0xf] %v174
                $region55: #{vit_feature_extractor.15} parent=42 // loop_footer
                  %s155 = sadd.s32 1, %s151
                $region56: #{vit_feature_extractor.15} parent=42 // loop_footer_branch
                  %150 = sbr.rel target = $region52
                $region57: #{vit_feature_extractor.15} parent=42 // loop_exit
                  _
              $region43: #{vit_feature_extractor.15} parent=27 // pred_fallthru
                _
            $region28: #{vit_feature_extractor.15} parent=23 // pred_fallthru
              _
            // Predicated region
            $region29: #{vit_feature_extractor.15} parent=23 // pred_check
              _
            $region30: #{vit_feature_extractor.15} parent=23 // pred_check_branch
              %111 = sbr.rel (0) target = $region32
            $region31: #{vit_feature_extractor.15} parent=23 // pred_region
              loop: start=0, step=1, limit=1
              $region33: #{vit_feature_extractor.15} parent=31 // loop_pre_header
                _
              $region34: #{vit_feature_extractor.15} parent=31 // loop_header
                %s114 = sphi 0, %s118
                %p115 = scmp.ge.s32.totalorder %s114, 1
                %s119 = sphi %s105, %s105
                %s120 = sphi %s100, %s100
              $region35: #{vit_feature_extractor.15} parent=31 // loop_header_branch
                %117 = sbr.rel (%p115) target = $region39
              $region36: #{vit_feature_extractor.15} parent=31 // loop_body
                %v121 = vld [vmem:[%s119] sm:$0xf]
                %122 = vst [vmem:[%s120] sm:$0xf] %v121
                %v123 = vld [vmem:[%s119 + $0x4] sm:$0xf]
                %124 = vst [vmem:[%s120 + $0x4] sm:$0xf] %v123
                %v125 = vld [vmem:[%s119 + $0x8] sm:$0xf]
                %126 = vst [vmem:[%s120 + $0x8] sm:$0xf] %v125
                %v127 = vld [vmem:[%s119 + $0x60] sm:$0xf]
                %128 = vst [vmem:[%s120 + $0xc] sm:$0xf] %v127
                %v129 = vld [vmem:[%s119 + $0x64] sm:$0xf]
                %130 = vst [vmem:[%s120 + $0x10] sm:$0xf] %v129
                %v131 = vld [vmem:[%s119 + $0x68] sm:$0xf]
                %132 = vst [vmem:[%s120 + $0x14] sm:$0xf] %v131
                %v133 = vld [vmem:[%s119 + $0xc0] sm:$0xf]
                %134 = vst [vmem:[%s120 + $0x18] sm:$0xf] %v133
                %v135 = vld [vmem:[%s119 + $0xc4] sm:$0xf]
                %136 = vst [vmem:[%s120 + $0x1c] sm:$0xf] %v135
                %v137 = vld [vmem:[%s119 + $0xc8] sm:$0xf]
                %138 = vst [vmem:[%s120 + $0x20] sm:$0xf] %v137
              $region37: #{vit_feature_extractor.15} parent=31 // loop_footer
                %s118 = sadd.s32 1, %s114
              $region38: #{vit_feature_extractor.15} parent=31 // loop_footer_branch
                %113 = sbr.rel target = $region34
              $region39: #{vit_feature_extractor.15} parent=31 // loop_exit
                _
            $region32: #{vit_feature_extractor.15} parent=23 // pred_fallthru
              _
          $region24: #{vit_feature_extractor.15} parent=19 // pred_fallthru
            _
          %176 = vnop
        $region20: #{vit_feature_extractor.15} parent=15 // pred_fallthru
          _
      $region16: #{vit_feature_extractor.15} parent=5 // pred_fallthru
        _
      %p177 = scmp.le.s32.totalorder 1, %s7
      %p178 = scmp.lt.s32.totalorder %s7, 9
      %p179 = pnand %p177, %p178
      %p180 = pneg %p179
      // Predicated region
      $region58: #{vit_feature_extractor.15} parent=5 // pred_check
        _
      $region59: #{vit_feature_extractor.15} parent=5 // pred_check_branch
        %182 = sbr.rel (%p179) target = $region61
      $region60: #{vit_feature_extractor.15} parent=5 // pred_region
        %s183 = ssub.s32 %s7, 1
        %s184 = sand.u32 %s34, 1
        %s185 = sand.u32 %s34, 1
        %s186 = smul.addr %s185, 36
        %s187 = scalar_lea.vmem [#allocation2], %s186
        // Predicated region
        $region62: #{vit_feature_extractor.15} parent=60 // pred_check
          %p188 = pneg %p47
        $region63: #{vit_feature_extractor.15} parent=60 // pred_check_branch
          %190 = sbr.rel (%p188) target = $region65
        $region64: #{vit_feature_extractor.15} parent=60 // pred_region
          _
        $region65: #{vit_feature_extractor.15} parent=60 // pred_fallthru
          _
        %s191 = sand.u32 %s34, 1
        %s192 = sand.u32 %s34, 1
        %s193 = smul.addr %s192, 36
        %s194 = scalar_lea.vmem [#allocation2], %s193
        %p195 = pneg %p47
        %p196 = pneg %p44
        %p197 = pneg %p75
        %p198 = pneg %p72
        %p199 = scmp.lt.s32.totalorder %s16, 1
        %s200 = scalar_select %p199, %s16, 1
        %p201 = scmp.lt.s32.totalorder %s17, 3
        %s202 = scalar_select %p201, %s17, 3
        %s203 = smul.addr %s202, 3
        %s204 = smul.addr %s200, 12
        %s205 = sadd.s32 %s203, %s204
        %s206 = smul.addr %s205, 4
        %s207 = scalar_lea.vmem %s1, %s206
        %p208 = scmp.lt.s32.totalorder %s16, 1
        %s209 = scalar_select %p208, %s16, 1
        %p210 = scmp.lt.s32.totalorder %s17, 3
        %s211 = scalar_select %p210, %s17, 3
        %s212 = smul.addr %s211, 3
        %s213 = smul.addr %s209, 12
        %s214 = sadd.s32 %s212, %s213
        %s215 = smul.addr %s214, 4
        %s216 = scalar_lea.vmem %s1, %s215
        %v218 = vld [vmem:[%s187] sm:$0xf]
        %v219 = vld [vmem:[%s187 + $0x4] sm:$0xf]
        %v220 = vld [vmem:[%s187 + $0x8] sm:$0xf]
        %s221 = scalar_lea.vmem %s187, 12 [#allocation2]
        %v222 = vld [vmem:[%s221] sm:$0xf]
        %v223 = vld [vmem:[%s221 + $0x4] sm:$0xf]
        %v224 = vld [vmem:[%s221 + $0x8] sm:$0xf]
        %s225 = scalar_lea.vmem %s187, 24 [#allocation2]
        %v226 = vld [vmem:[%s225] sm:$0xf]
        %v227 = vld [vmem:[%s225 + $0x4] sm:$0xf]
        %v228 = vld [vmem:[%s225 + $0x8] sm:$0xf]
        %v232 = vunpack.c.l.b16 %v218
        %v233 = vunpack.c.l.b16 %v219
        %v234 = vunpack.c.l.b16 %v220
        %v235 = vpack.c.b16 %v233, %v232
        %v236 = vpack.c.b16 %v234, %v234
        %v240 = vunpack.c.l.b16 %v222
        %v241 = vunpack.c.l.b16 %v223
        %v242 = vunpack.c.l.b16 %v224
        %v243 = vpack.c.b16 %v241, %v240
        %v244 = vpack.c.b16 %v242, %v242
        %vm245 = vcmask 64512
        %v247 = vsel %vm245, %v235, 0
        %v250 = vsel %vm245, %v236, 0
        %v253 = vsel %vm245, %v243, 0
        %v256 = vsel %vm245, %v244, 0
        %258 = vmatprep.subr.bf16.mxu0 0
        %259 = vmatpush1.bf16.xpose.msra.mxu0 %v253
        %260 = vmatprep.subr.bf16.mxu0 0
        %261 = vmatpush1.bf16.xpose.msra.mxu0 %v256
        %262 = vmatprep.subr.bf16.mxu0 0
        %263 = vmatpush1.bf16.xpose.msra.mxu0 0
        %264 = vmatprep.subr.bf16.mxu0 0
        %265 = vmatpush1.bf16.xpose.msra.mxu0 0
        %266 = vmatprep.subr.bf16.mxu0 0
        %267 = vmatpush1.bf16.xpose.msra.mxu0 0
        %268 = vmatprep.subr.bf16.mxu0 0
        %269 = vmatpush1.bf16.xpose.msra.mxu0 0
        %270 = vmatprep.subr.bf16.mxu0 0
        %271 = vmatpush1.bf16.xpose.msra.mxu0 0
        %272 = vmatprep.subr.bf16.mxu0 0
        %273 = vmatpush1.bf16.xpose.msra.mxu0 0
        %274 = vmatprep.subr.bf16.mxu0 0
        %275 = vmatpush1.bf16.xpose.msra.mxu0 0
        %276 = vmatprep.subr.bf16.mxu0 0
        %277 = vmatpush1.bf16.xpose.msra.mxu0 0
        %278 = vmatprep.subr.bf16.mxu0 0
        %279 = vmatpush1.bf16.xpose.msra.mxu0 0
        %280 = vmatprep.subr.bf16.mxu0 0
        %281 = vmatpush1.bf16.xpose.msra.mxu0 0
        %282 = vmatprep.subr.bf16.mxu0 0
        %283 = vmatpush1.bf16.xpose.msra.mxu0 0
        %284 = vmatprep.subr.bf16.mxu0 0
        %285 = vmatpush1.bf16.xpose.msra.mxu0 0
        %286 = vmatprep.subr.bf16.mxu0 0
        %287 = vmatpush1.bf16.xpose.msra.mxu0 0
        %288 = vmatprep.subr.bf16.mxu0 0
        %289 = vmatpush1.bf16.xpose.msra.mxu0 0
        %290 = vmatprep.mubr.bf16.mxu0 0
        %291 = vmatmul.mubr.bf16.gmra.mrb[0].mxu0 %v247
        %v292 = vpop.f32.mrb[0].mxu0
        %v293 = vadd.f32 0.0, %v292
        %v294 = vpop.f32.mrb[0].mxu0
        %v295 = vpop.f32.mrb[0].mxu0
        %v296 = vadd.f32 0.0, %v295
        %v297 = vpop.f32.mrb[0].mxu0
        %298 = vmatprep.mubr.bf16.mxu0 0
        %299 = vmatmul.mubr.bf16.gmra.mrb[0].mxu0 %v250
        %v300 = vpop.f32.mrb[0].mxu0
        %v301 = vadd.f32 0.0, %v300
        %v302 = vpop.f32.mrb[0].mxu0
        %v303 = vpop.f32.mrb[0].mxu0
        %v304 = vpop.f32.mrb[0].mxu0
        %305 = vdwg.mxu0
        %v306 = vlaneseq
        %v307 = vand.u32 %v306, 127
        %vm308 = vcmp.lt.s32.totalorder %v307, 17
        %v309 = vsel %vm308, %v293, -1e+30
        %v310 = vsel %vm308, %v296, -1e+30
        %v311 = vsel %vm308, %v301, -1e+30
        %vm312 = vcmask 195584
        %v313 = vsel %vm312, %v309, -inf
        %314 = vmax.xlane.f32.xlu0 %v313
        %v315 = vpop.xlane.xlu0 %314
        %v316 = vsel %vm312, %v310, -inf
        %317 = vmax.xlane.f32.xlu0 %v316
        %v318 = vpop.xlane.xlu0 %317
        %v319 = vsel %vm312, %v311, -inf
        %320 = vmax.xlane.f32.xlu0 %v319
        %v321 = vpop.xlane.xlu0 %320
        %v322 = vsub.f32 %v309, %v315
        %v323 = vsub.f32 %v310, %v318
        %v324 = vsub.f32 %v311, %v321
        %v325 = vmul.f32 %v322, 1.442695
        %v326 = vpow.pop %v325
        %v327 = vmul.f32 %v323, 1.442695
        %v328 = vpow.pop %v327
        %v329 = vmul.f32 %v324, 1.442695
        %v330 = vpow.pop %v329
        %v331 = vsel %vm312, %v326, 0.0
        %332 = vadd.xlane.f32.xlu0 %v331
        %v333 = vpop.xlane.xlu0 %332
        %v334 = vsel %vm312, %v328, 0.0
        %335 = vadd.xlane.f32.xlu0 %v334
        %v336 = vpop.xlane.xlu0 %335
        %v337 = vsel %vm312, %v330, 0.0
        %338 = vadd.xlane.f32.xlu0 %v337
        %v339 = vpop.xlane.xlu0 %338
        %v340 = vrcp.pop %v333
        %v341 = vrcp.pop %v336
        %v342 = vrcp.pop %v339
        %v343 = vmul.f32 %v326, %v340
        %v344 = vmul.f32 %v328, %v341
        %v345 = vmul.f32 %v330, %v342
        %v346 = vpack.c.bf16 %v344, %v343
        %v347 = vpack.c.bf16 %v345, %v345
        %v351 = vunpack.c.l.b16 %v226
        %v352 = vunpack.c.l.b16 %v227
        %v353 = vunpack.c.l.b16 %v228
        %v354 = vpack.c.b16 %v352, %v351
        %v355 = vpack.c.b16 %v353, %v353
        %v358 = vsel %vm312, %v346, 0
        %v361 = vsel %vm312, %v347, 0
        %vm363 = vcmask 1043456
        %v365 = vsel %vm363, %v355, 0
        %367 = vmatprep.subr.bf16.mxu0 0
        %368 = vmatpush1.bf16.msra.mxu0 %v354
        %369 = vmatprep.subr.bf16.mxu0 0
        %370 = vmatpush1.bf16.msra.mxu0 %v365
        %371 = vmatprep.subr.bf16.mxu0 0
        %372 = vmatpush1.bf16.msra.mxu0 0
        %373 = vmatprep.subr.bf16.mxu0 0
        %374 = vmatpush1.bf16.msra.mxu0 0
        %375 = vmatprep.subr.bf16.mxu0 0
        %376 = vmatpush1.bf16.msra.mxu0 0
        %377 = vmatprep.subr.bf16.mxu0 0
        %378 = vmatpush1.bf16.msra.mxu0 0
        %379 = vmatprep.subr.bf16.mxu0 0
        %380 = vmatpush1.bf16.msra.mxu0 0
        %381 = vmatprep.subr.bf16.mxu0 0
        %382 = vmatpush1.bf16.msra.mxu0 0
        %383 = vmatprep.subr.bf16.mxu0 0
        %384 = vmatpush1.bf16.msra.mxu0 0
        %385 = vmatprep.subr.bf16.mxu0 0
        %386 = vmatpush1.bf16.msra.mxu0 0
        %387 = vmatprep.subr.bf16.mxu0 0
        %388 = vmatpush1.bf16.msra.mxu0 0
        %389 = vmatprep.subr.bf16.mxu0 0
        %390 = vmatpush1.bf16.msra.mxu0 0
        %391 = vmatprep.subr.bf16.mxu0 0
        %392 = vmatpush1.bf16.msra.mxu0 0
        %393 = vmatprep.subr.bf16.mxu0 0
        %394 = vmatpush1.bf16.msra.mxu0 0
        %395 = vmatprep.subr.bf16.mxu0 0
        %396 = vmatpush1.bf16.msra.mxu0 0
        %397 = vmatprep.subr.bf16.mxu0 0
        %398 = vmatpush1.bf16.msra.mxu0 0
        %399 = vmatprep.mubr.bf16.mxu0 0
        %400 = vmatmul.mubr.bf16.gmra.mrb[0].mxu0 %v358
        %v401 = vpop.f32.mrb[0].mxu0
        %v402 = vadd.f32 0.0, %v401
        %v403 = vpop.f32.mrb[0].mxu0
        %v404 = vpop.f32.mrb[0].mxu0
        %v405 = vadd.f32 0.0, %v404
        %v406 = vpop.f32.mrb[0].mxu0
        %407 = vmatprep.mubr.bf16.mxu0 0
        %408 = vmatmul.mubr.bf16.gmra.mrb[0].mxu0 %v361
        %v409 = vpop.f32.mrb[0].mxu0
        %v410 = vadd.f32 0.0, %v409
        %v411 = vpop.f32.mrb[0].mxu0
        %v412 = vpop.f32.mrb[0].mxu0
        %v413 = vpop.f32.mrb[0].mxu0
        %414 = vdwg.mxu0
        %v415 = vpack.c.bf16 %v405, %v402
        %v416 = vpack.c.bf16 %v410, %v410
        %v419 = vunpack.c.l.b16 %v415
        %v420 = vunpack.c.h.b16 %v415
        %v421 = vunpack.c.l.b16 %v416
        %v422 = vpack.c.b16 %v419, %v419
        %v423 = vpack.c.b16 %v420, %v420
        %v424 = vpack.c.b16 %v421, %v421
        %vm428 = vcmask 60416
        %429 = vst.msk [vmem:[%s216] sm:$0xf] %vm428, %v422
        %430 = vst.msk [vmem:[%s216 + $0x4] sm:$0xf] %vm428, %v423
        %431 = vst.msk [vmem:[%s216 + $0x8] sm:$0xf] %vm428, %v424
        %p432 = scmp.lt.s32.totalorder %s16, 1
        %s433 = scalar_select %p432, %s16, 1
        %p434 = scmp.lt.s32.totalorder %s17, 3
        %s435 = scalar_select %p434, %s17, 3
        %s436 = smul.addr %s435, 3
        %s437 = smul.addr %s433, 12
        %s438 = sadd.s32 %s436, %s437
        %s439 = smul.addr %s438, 4
        %s440 = scalar_lea.vmem %s1, %s439
        // Predicated region
        $region66: #{vit_feature_extractor.15} parent=60 // pred_check
          %p441 = pneg %p72
        $region67: #{vit_feature_extractor.15} parent=60 // pred_check_branch
          %443 = sbr.rel (%p441) target = $region69
        $region68: #{vit_feature_extractor.15} parent=60 // pred_region
          _
        $region69: #{vit_feature_extractor.15} parent=60 // pred_fallthru
          _
      $region61: #{vit_feature_extractor.15} parent=5 // pred_fallthru
        _
      %p444 = scmp.le.s32.totalorder 2, %s7
      // Predicated region
      $region70: #{vit_feature_extractor.15} parent=5 // pred_check
        %p445 = pneg %p444
      $region71: #{vit_feature_extractor.15} parent=5 // pred_check_branch
        %447 = sbr.rel (%p445) target = $region73
      $region72: #{vit_feature_extractor.15} parent=5 // pred_region
        %s448 = ssub.s32 %s7, 2
        // Predicated region
        $region74: #{vit_feature_extractor.15} parent=72 // pred_check
          %p449 = pneg %p78
        $region75: #{vit_feature_extractor.15} parent=72 // pred_check_branch
          %451 = sbr.rel (%p449) target = $region77
        $region76: #{vit_feature_extractor.15} parent=72 // pred_region
          %p452 = scmp.lt.s32.totalorder %s18, 1
          %s453 = scalar_select %p452, %s18, 1
          %p454 = scmp.lt.s32.totalorder %s19, 3
          %s455 = scalar_select %p454, %s19, 3
          %s456 = smul.addr %s455, 3
          %s457 = smul.addr %s453, 12
          %s458 = sadd.s32 %s456, %s457
          %s459 = smul.addr %s458, 4
          %s460 = scalar_lea.vmem %s1, %s459
        $region77: #{vit_feature_extractor.15} parent=72 // pred_fallthru
          _
      $region73: #{vit_feature_extractor.15} parent=5 // pred_fallthru
        _
    $region6: #{vit_feature_extractor.15} parent=1 // loop_footer
      %s11 = sadd.s32 1, %s7
    $region7: #{vit_feature_extractor.15} parent=1 // loop_footer_branch
      %6 = sbr.rel target = $region3
    $region8: #{vit_feature_extractor.15} parent=1 // loop_exit
      _

// kernel: vit_feature_extractor.17
$region0: #{vit_feature_extractor.17}
  #allocation0 [shape = 'u32[]', space=smem, size = 0x4, offset = 0x4, fixed_abs, tag = 'smem constant byte address 0x4 - core index']
  #allocation1 [shape = 'u32[144,128]{1,0:T(1,128)}', space=vmem, size = 0x12000, scoped, tag = 'internal scratch']
  %s0 = inlined_call_operand.vmem [shape: bf16[48,32], index: 0, kind: input, shape index: {}]
  %s1 = inlined_call_operand.vmem [shape: bf16[32,128], index: 1, kind: input, shape index: {}]
  %s2 = inlined_call_operand.vmem [shape: f32[1,128], index: 2, kind: input, shape index: {}]
  %s3 = inlined_call_operand.vmem [shape: bf16[48,128], index: 3, kind: output, shape index: {}]
  %s4 = sld [smem:[#allocation0]]
  $region22: #{vit_feature_extractor.17} parent=0
    _
  %s6 = ssub.s32 1, %s4
  %s7 = scalar_select 0, %s6, %s4
  // Predicated region
  $region2: #{vit_feature_extractor.17} parent=0 // pred_check
    _
  $region3: #{vit_feature_extractor.17} parent=0 // pred_check_branch
    %9 = sbr.rel (0) target = $region5
  $region4: #{vit_feature_extractor.17} parent=0 // pred_region
    _
  $region5: #{vit_feature_extractor.17} parent=0 // pred_fallthru
    _
  // Predicated region
  $region6: #{vit_feature_extractor.17} parent=0 // pred_check
    _
  $region7: #{vit_feature_extractor.17} parent=0 // pred_check_branch
    %11 = sbr.rel (0) target = $region9
  $region8: #{vit_feature_extractor.17} parent=0 // pred_region
    _
  $region9: #{vit_feature_extractor.17} parent=0 // pred_fallthru
    _
  // Predicated region
  $region10: #{vit_feature_extractor.17} parent=0 // pred_check
    _
  $region11: #{vit_feature_extractor.17} parent=0 // pred_check_branch
    %13 = sbr.rel (0) target = $region13
  $region12: #{vit_feature_extractor.17} parent=0 // pred_region
    _
  $region13: #{vit_feature_extractor.17} parent=0 // pred_fallthru
    _
  %v15 = vld [vmem:[%s0] sm:$0xf]
  %v16 = vld [vmem:[%s0 + $0x4] sm:$0xf]
  %v17 = vld [vmem:[%s0 + $0x8] sm:$0xf]
  %v18 = vld [vmem:[%s0 + $0xc] sm:$0xf]
  %v19 = vld [vmem:[%s0 + $0x10] sm:$0xf]
  %v20 = vld [vmem:[%s0 + $0x14] sm:$0xf]
  %v21 = vld [vmem:[%s1] sm:$0xf]
  %v22 = vld [vmem:[%s1 + $0x4] sm:$0xf]
  %v23 = vld [vmem:[%s1 + $0x8] sm:$0xf]
  %v24 = vld [vmem:[%s1 + $0xc] sm:$0xf]
  %v25 = vld [vmem:[%s2] sm:$0x1]
  %v27 = vlaneseq
  %v28 = vshrl.u32 %v27, 7
  %v29 = vsub.s32 0, %v28
  %v30 = vrot.slane %v25, %v29
  %v38 = vunpack.c.l.b16 %v15
  %v39 = vunpack.c.l.b16 %v16
  %v40 = vunpack.c.l.b16 %v17
  %v41 = vunpack.c.l.b16 %v18
  %v42 = vunpack.c.l.b16 %v19
  %v43 = vunpack.c.l.b16 %v20
  %v44 = vpack.c.b16 %v39, %v38
  %v45 = vpack.c.b16 %v41, %v40
  %v46 = vpack.c.b16 %v43, %v42
  %v51 = vunpack.c.l.b16 %v21
  %v52 = vunpack.c.l.b16 %v22
  %v53 = vunpack.c.l.b16 %v23
  %v54 = vunpack.c.l.b16 %v24
  %v55 = vpack.c.b16 %v52, %v51
  %v56 = vpack.c.b16 %v54, %v53
  %vm59 = vcmask 261120
  %v61 = vsel %vm59, %v44, 0
  %v64 = vsel %vm59, %v45, 0
  %v67 = vsel %vm59, %v46, 0
  %69 = vmatprep.subr.bf16.mxu0 0
  %70 = vmatpush1.bf16.msra.mxu0 %v55
  %71 = vmatprep.subr.bf16.mxu0 0
  %72 = vmatpush1.bf16.msra.mxu0 %v56
  %73 = vmatprep.subr.bf16.mxu0 0
  %74 = vmatpush1.bf16.msra.mxu0 0
  %75 = vmatprep.subr.bf16.mxu0 0
  %76 = vmatpush1.bf16.msra.mxu0 0
  %77 = vmatprep.subr.bf16.mxu0 0
  %78 = vmatpush1.bf16.msra.mxu0 0
  %79 = vmatprep.subr.bf16.mxu0 0
  %80 = vmatpush1.bf16.msra.mxu0 0
  %81 = vmatprep.subr.bf16.mxu0 0
  %82 = vmatpush1.bf16.msra.mxu0 0
  %83 = vmatprep.subr.bf16.mxu0 0
  %84 = vmatpush1.bf16.msra.mxu0 0
  %85 = vmatprep.subr.bf16.mxu0 0
  %86 = vmatpush1.bf16.msra.mxu0 0
  %87 = vmatprep.subr.bf16.mxu0 0
  %88 = vmatpush1.bf16.msra.mxu0 0
  %89 = vmatprep.subr.bf16.mxu0 0
  %90 = vmatpush1.bf16.msra.mxu0 0
  %91 = vmatprep.subr.bf16.mxu0 0
  %92 = vmatpush1.bf16.msra.mxu0 0
  %93 = vmatprep.subr.bf16.mxu0 0
  %94 = vmatpush1.bf16.msra.mxu0 0
  %95 = vmatprep.subr.bf16.mxu0 0
  %96 = vmatpush1.bf16.msra.mxu0 0
  %97 = vmatprep.subr.bf16.mxu0 0
  %98 = vmatpush1.bf16.msra.mxu0 0
  %99 = vmatprep.subr.bf16.mxu0 0
  %100 = vmatpush1.bf16.msra.mxu0 0
  %101 = vmatprep.mubr.bf16.mxu0 0
  %102 = vmatmul.mubr.bf16.gmra.mrb[0].mxu0 %v61
  %v103 = vpop.f32.mrb[0].mxu0
  %v104 = vadd.f32 %v30, %v103
  %v105 = vpop.f32.mrb[0].mxu0
  %v106 = vpop.f32.mrb[0].mxu0
  %v107 = vadd.f32 %v30, %v106
  %v108 = vpop.f32.mrb[0].mxu0
  %109 = vmatprep.mubr.bf16.mxu0 0
  %110 = vmatmul.mubr.bf16.gmra.mrb[0].mxu0 %v64
  %v111 = vpop.f32.mrb[0].mxu0
  %v112 = vadd.f32 %v30, %v111
  %v113 = vpop.f32.mrb[0].mxu0
  %v114 = vpop.f32.mrb[0].mxu0
  %v115 = vadd.f32 %v30, %v114
  %v116 = vpop.f32.mrb[0].mxu0
  %117 = vmatprep.mubr.bf16.mxu0 0
  %118 = vmatmul.mubr.bf16.gmra.mrb[0].mxu0 %v67
  %v119 = vpop.f32.mrb[0].mxu0
  %v120 = vadd.f32 %v30, %v119
  %v121 = vpop.f32.mrb[0].mxu0
  %v122 = vpop.f32.mrb[0].mxu0
  %v123 = vadd.f32 %v30, %v122
  %v124 = vpop.f32.mrb[0].mxu0
  %125 = vdwg.mxu0
  %v126 = vmul.f32 %v104, %v104
  %v127 = vmul.f32 %v107, %v107
  %v128 = vmul.f32 %v112, %v112
  %v129 = vmul.f32 %v115, %v115
  %v130 = vmul.f32 %v120, %v120
  %v131 = vmul.f32 %v123, %v123
  %v132 = vmul.f32 %v104, %v126
  %v133 = vmul.f32 %v107, %v127
  %v134 = vmul.f32 %v112, %v128
  %v135 = vmul.f32 %v115, %v129
  %v136 = vmul.f32 %v120, %v130
  %v137 = vmul.f32 %v123, %v131
  %v138 = vmul.f32 %v132, 0.044715
  %v139 = vmul.f32 %v133, 0.044715
  %v140 = vmul.f32 %v134, 0.044715
  %v141 = vmul.f32 %v135, 0.044715
  %v142 = vmul.f32 %v136, 0.044715
  %v143 = vmul.f32 %v137, 0.044715
  %v144 = vadd.f32 %v104, %v138
  %v145 = vadd.f32 %v107, %v139
  %v146 = vadd.f32 %v112, %v140
  %v147 = vadd.f32 %v115, %v141
  %v148 = vadd.f32 %v120, %v142
  %v149 = vadd.f32 %v123, %v143
  %v150 = vmul.f32 %v144, 0.7978846
  %v151 = vmul.f32 %v145, 0.7978846
  %v152 = vmul.f32 %v146, 0.7978846
  %v153 = vmul.f32 %v147, 0.7978846
  %v154 = vmul.f32 %v148, 0.7978846
  %v155 = vmul.f32 %v149, 0.7978846
  %v156 = vtanh.pop %v150
  %v157 = vtanh.pop %v151
  %v158 = vtanh.pop %v152
  %v159 = vtanh.pop %v153
  %v160 = vtanh.pop %v154
  %v161 = vtanh.pop %v155
  %v162 = vadd.f32 %v156, 1.0
  %v163 = vadd.f32 %v157, 1.0
  %v164 = vadd.f32 %v158, 1.0
  %v165 = vadd.f32 %v159, 1.0
  %v166 = vadd.f32 %v160, 1.0
  %v167 = vadd.f32 %v161, 1.0
  %v168 = vmul.f32 %v162, 0.5
  %v169 = vmul.f32 %v163, 0.5
  %v170 = vmul.f32 %v164, 0.5
  %v171 = vmul.f32 %v165, 0.5
  %v172 = vmul.f32 %v166, 0.5
  %v173 = vmul.f32 %v167, 0.5
  %v174 = vmul.f32 %v104, %v168
  %v175 = vmul.f32 %v107, %v169
  %v176 = vmul.f32 %v112, %v170
  %v177 = vmul.f32 %v115, %v171
  %v178 = vmul.f32 %v120, %v172
  %v179 = vmul.f32 %v123, %v173
  %v180 = vpack.c.bf16 %v175, %v174
  %v181 = vpack.c.bf16 %v177, %v176
  %v182 = vpack.c.bf16 %v179, %v178
  %v186 = vunpack.c.l.b16 %v180
  %v187 = vunpack.c.h.b16 %v180
  %v188 = vunpack.c.l.b16 %v181
  %v189 = vunpack.c.h.b16 %v181
  %v190 = vunpack.c.l.b16 %v182
  %v191 = vunpack.c.h.b16 %v182
  %v192 = vpack.c.b16 %v186, %v186
  %v193 = vpack.c.b16 %v187, %v187
  %v194 = vpack.c.b16 %v188, %v188
  %v195 = vpack.c.b16 %v189, %v189
  %v196 = vpack.c.b16 %v190, %v190
  %v197 = vpack.c.b16 %v191, %v191
  %204 = vst [vmem:[%s3] sm:$0xf] %v192
  %205 = vst [vmem:[%s3 + $0x4] sm:$0xf] %v193
  %206 = vst [vmem:[%s3 + $0x8] sm:$0xf] %v194
  %207 = vst [vmem:[%s3 + $0xc] sm:$0xf] %v195
  %208 = vst [vmem:[%s3 + $0x10] sm:$0xf] %v196
  %209 = vst [vmem:[%s3 + $0x14] sm:$0xf] %v197
  // Predicated region
  $region14: #{vit_feature_extractor.17} parent=0 // pred_check
    _
  $region15: #{vit_feature_extractor.17} parent=0 // pred_check_branch
    %211 = sbr.rel (0) target = $region17
  $region16: #{vit_feature_extractor.17} parent=0 // pred_region
    _
  $region17: #{vit_feature_extractor.17} parent=0 // pred_fallthru
    _
  // Predicated region
  $region18: #{vit_feature_extractor.17} parent=0 // pred_check
    _
  $region19: #{vit_feature_extractor.17} parent=0 // pred_check_branch
    %213 = sbr.rel (0) target = $region21
  $region20: #{vit_feature_extractor.17} parent=0 // pred_region
    _
  $region21: #{vit_feature_extractor.17} parent=0 // pred_fallthru
    _

// kernel: vit_feature_extractor.16
$region0: #{vit_feature_extractor.16}
  #allocation0 [shape = 'u32[]', space=smem, size = 0x4, offset = 0x4, fixed_abs, tag = 'smem constant byte address 0x4 - core index']
  #allocation1 [shape = 'u32[144,128]{1,0:T(1,128)}', space=vmem, size = 0x12000, scoped, tag = 'internal scratch']
  %s0 = inlined_call_operand.vmem [shape: bf16[48,32], index: 0, kind: input, shape index: {}]
  %s1 = inlined_call_operand.vmem [shape: bf16[32,32], index: 1, kind: input, shape index: {}]
  %s2 = inlined_call_operand.vmem [shape: f32[1,32], index: 2, kind: input, shape index: {}]
  %s3 = inlined_call_operand.vmem [shape: f32[48,32], index: 3, kind: input, shape index: {}, may-alias: {3,6}]
  %s4 = inlined_call_operand.vmem [shape: f32[1,32], index: 4, kind: input, shape index: {}]
  %s5 = inlined_call_operand.vmem [shape: f32[1,32], index: 5, kind: input, shape index: {}]
  %s6 = inlined_call_operand.vmem [shape: f32[48,32], index: 6, kind: output, shape index: {0}, may-alias: {3,6}]
  %s7 = inlined_call_operand.vmem [shape: bf16[48,32], index: 7, kind: output, shape index: {1}]
  %8 = xla_tuple %s6, %s7
  %s9 = sld [smem:[#allocation0]]
  $region42: #{vit_feature_extractor.16} parent=0
    _
  %s11 = ssub.s32 1, %s9
  %s12 = scalar_select 0, %s11, %s9
  // Predicated region
  $region2: #{vit_feature_extractor.16} parent=0 // pred_check
    _
  $region3: #{vit_feature_extractor.16} parent=0 // pred_check_branch
    %14 = sbr.rel (0) target = $region5
  $region4: #{vit_feature_extractor.16} parent=0 // pred_region
    _
  $region5: #{vit_feature_extractor.16} parent=0 // pred_fallthru
    _
  // Predicated region
  $region6: #{vit_feature_extractor.16} parent=0 // pred_check
    _
  $region7: #{vit_feature_extractor.16} parent=0 // pred_check_branch
    %16 = sbr.rel (0) target = $region9
  $region8: #{vit_feature_extractor.16} parent=0 // pred_region
    _
  $region9: #{vit_feature_extractor.16} parent=0 // pred_fallthru
    _
  // Predicated region
  $region10: #{vit_feature_extractor.16} parent=0 // pred_check
    _
  $region11: #{vit_feature_extractor.16} parent=0 // pred_check_branch
    %18 = sbr.rel (0) target = $region13
  $region12: #{vit_feature_extractor.16} parent=0 // pred_region
    _
  $region13: #{vit_feature_extractor.16} parent=0 // pred_fallthru
    _
  // Predicated region
  $region14: #{vit_feature_extractor.16} parent=0 // pred_check
    _
  $region15: #{vit_feature_extractor.16} parent=0 // pred_check_branch
    %20 = sbr.rel (0) target = $region17
  $region16: #{vit_feature_extractor.16} parent=0 // pred_region
    _
  $region17: #{vit_feature_extractor.16} parent=0 // pred_fallthru
    _
  // Predicated region
  $region18: #{vit_feature_extractor.16} parent=0 // pred_check
    _
  $region19: #{vit_feature_extractor.16} parent=0 // pred_check_branch
    %22 = sbr.rel (0) target = $region21
  $region20: #{vit_feature_extractor.16} parent=0 // pred_region
    _
  $region21: #{vit_feature_extractor.16} parent=0 // pred_fallthru
    _
  // Predicated region
  $region22: #{vit_feature_extractor.16} parent=0 // pred_check
    _
  $region23: #{vit_feature_extractor.16} parent=0 // pred_check_branch
    %24 = sbr.rel (0) target = $region25
  $region24: #{vit_feature_extractor.16} parent=0 // pred_region
    _
  $region25: #{vit_feature_extractor.16} parent=0 // pred_fallthru
    _
  %v26 = vld [vmem:[%s0] sm:$0xf]
  %v27 = vld [vmem:[%s0 + $0x4] sm:$0xf]
  %v28 = vld [vmem:[%s0 + $0x8] sm:$0xf]
  %v29 = vld [vmem:[%s0 + $0xc] sm:$0xf]
  %v30 = vld [vmem:[%s0 + $0x10] sm:$0xf]
  %v31 = vld [vmem:[%s0 + $0x14] sm:$0xf]
  %v32 = vld [vmem:[%s1] sm:$0xf]
  %v33 = vld [vmem:[%s1 + $0x4] sm:$0xf]
  %v34 = vld [vmem:[%s1 + $0x8] sm:$0xf]
  %v35 = vld [vmem:[%s1 + $0xc] sm:$0xf]
  %v36 = vld [vmem:[%s2] sm:$0x1]
  %v38 = vlaneseq
  %v39 = vshrl.u32 %v38, 7
  %v40 = vsub.s32 0, %v39
  %v41 = vrot.slane %v36, %v40
  %v49 = vunpack.c.l.b16 %v26
  %v50 = vunpack.c.l.b16 %v27
  %v51 = vunpack.c.l.b16 %v28
  %v52 = vunpack.c.l.b16 %v29
  %v53 = vunpack.c.l.b16 %v30
  %v54 = vunpack.c.l.b16 %v31
  %v55 = vpack.c.b16 %v50, %v49
  %v56 = vpack.c.b16 %v52, %v51
  %v57 = vpack.c.b16 %v54, %v53
  %v62 = vunpack.c.l.b16 %v32
  %v63 = vunpack.c.l.b16 %v33
  %v64 = vunpack.c.l.b16 %v34
  %v65 = vunpack.c.l.b16 %v35
  %v66 = vpack.c.b16 %v63, %v62
  %v67 = vpack.c.b16 %v65, %v64
  %vm70 = vcmask 261120
  %v72 = vsel %vm70, %v55, 0
  %v75 = vsel %vm70, %v56, 0
  %v78 = vsel %vm70, %v57, 0
  %80 = vmatprep.subr.bf16.mxu0 0
  %81 = vmatpush1.bf16.msra.mxu0 %v66
  %82 = vmatprep.subr.bf16.mxu0 0
  %83 = vmatpush1.bf16.msra.mxu0 %v67
  %84 = vmatprep.subr.bf16.mxu0 0
  %85 = vmatpush1.bf16.msra.mxu0 0
  %86 = vmatprep.subr.bf16.mxu0 0
  %87 = vmatpush1.bf16.msra.mxu0 0
  %88 = vmatprep.subr.bf16.mxu0 0
  %89 = vmatpush1.bf16.msra.mxu0 0
  %90 = vmatprep.subr.bf16.mxu0 0
  %91 = vmatpush1.bf16.msra.mxu0 0
  %92 = vmatprep.subr.bf16.mxu0 0
  %93 = vmatpush1.bf16.msra.mxu0 0
  %94 = vmatprep.subr.bf16.mxu0 0
  %95 = vmatpush1.bf16.msra.mxu0 0
  %96 = vmatprep.subr.bf16.mxu0 0
  %97 = vmatpush1.bf16.msra.mxu0 0
  %98 = vmatprep.subr.bf16.mxu0 0
  %99 = vmatpush1.bf16.msra.mxu0 0
  %100 = vmatprep.subr.bf16.mxu0 0
  %101 = vmatpush1.bf16.msra.mxu0 0
  %102 = vmatprep.subr.bf16.mxu0 0
  %103 = vmatpush1.bf16.msra.mxu0 0
  %104 = vmatprep.subr.bf16.mxu0 0
  %105 = vmatpush1.bf16.msra.mxu0 0
  %106 = vmatprep.subr.bf16.mxu0 0
  %107 = vmatpush1.bf16.msra.mxu0 0
  %108 = vmatprep.subr.bf16.mxu0 0
  %109 = vmatpush1.bf16.msra.mxu0 0
  %110 = vmatprep.subr.bf16.mxu0 0
  %111 = vmatpush1.bf16.msra.mxu0 0
  %112 = vmatprep.mubr.bf16.mxu0 0
  %113 = vmatmul.mubr.bf16.gmra.mrb[0].mxu0 %v72
  %v114 = vpop.f32.mrb[0].mxu0
  %v115 = vadd.f32 %v41, %v114
  %v116 = vpop.f32.mrb[0].mxu0
  %v117 = vpop.f32.mrb[0].mxu0
  %v118 = vadd.f32 %v41, %v117
  %v119 = vpop.f32.mrb[0].mxu0
  %120 = vmatprep.mubr.bf16.mxu0 0
  %121 = vmatmul.mubr.bf16.gmra.mrb[0].mxu0 %v75
  %v122 = vpop.f32.mrb[0].mxu0
  %v123 = vadd.f32 %v41, %v122
  %v124 = vpop.f32.mrb[0].mxu0
  %v125 = vpop.f32.mrb[0].mxu0
  %v126 = vadd.f32 %v41, %v125
  %v127 = vpop.f32.mrb[0].mxu0
  %128 = vmatprep.mubr.bf16.mxu0 0
  %129 = vmatmul.mubr.bf16.gmra.mrb[0].mxu0 %v78
  %v130 = vpop.f32.mrb[0].mxu0
  %v131 = vadd.f32 %v41, %v130
  %v132 = vpop.f32.mrb[0].mxu0
  %v133 = vpop.f32.mrb[0].mxu0
  %v134 = vadd.f32 %v41, %v133
  %v135 = vpop.f32.mrb[0].mxu0
  %136 = vdwg.mxu0
  %v137 = vld [vmem:[%s3] sm:$0xff]
  %v138 = vld [vmem:[%s3 + $0x8] sm:$0xff]
  %v139 = vld [vmem:[%s3 + $0x10] sm:$0xff]
  %v140 = vld [vmem:[%s3 + $0x18] sm:$0xff]
  %v141 = vld [vmem:[%s3 + $0x20] sm:$0xff]
  %v142 = vld [vmem:[%s3 + $0x28] sm:$0xff]
  %v143 = vadd.f32 %v115, %v137
  %v144 = vadd.f32 %v118, %v138
  %v145 = vadd.f32 %v123, %v139
  %v146 = vadd.f32 %v126, %v140
  %v147 = vadd.f32 %v131, %v141
  %v148 = vadd.f32 %v134, %v142
  %149 = vst.msk [vmem:[%s6] sm:$0xff] %vm70, %v143
  %150 = vst.msk [vmem:[%s6 + $0x8] sm:$0xff] %vm70, %v144
  %151 = vst.msk [vmem:[%s6 + $0x10] sm:$0xff] %vm70, %v145
  %152 = vst.msk [vmem:[%s6 + $0x18] sm:$0xff] %vm70, %v146
  %153 = vst.msk [vmem:[%s6 + $0x20] sm:$0xff] %vm70, %v147
  %154 = vst.msk [vmem:[%s6 + $0x28] sm:$0xff] %vm70, %v148
  %v155 = vsel %vm70, %v143, 0.0
  %156 = vadd.xlane.f32.xlu0 %v155
  %v157 = vpop.xlane.xlu0 %156
  %v158 = vsel %vm70, %v144, 0.0
  %159 = vadd.xlane.f32.xlu0 %v158
  %v160 = vpop.xlane.xlu0 %159
  %v161 = vsel %vm70, %v145, 0.0
  %162 = vadd.xlane.f32.xlu0 %v161
  %v163 = vpop.xlane.xlu0 %162
  %v164 = vsel %vm70, %v146, 0.0
  %165 = vadd.xlane.f32.xlu0 %v164
  %v166 = vpop.xlane.xlu0 %165
  %v167 = vsel %vm70, %v147, 0.0
  %168 = vadd.xlane.f32.xlu0 %v167
  %v169 = vpop.xlane.xlu0 %168
  %v170 = vsel %vm70, %v148, 0.0
  %171 = vadd.xlane.f32.xlu0 %v170
  %v172 = vpop.xlane.xlu0 %171
  %v173 = vrcp.pop 32.0
  %v174 = vmul.f32 %v157, %v173
  %v175 = vmul.f32 %v160, %v173
  %v176 = vmul.f32 %v163, %v173
  %v177 = vmul.f32 %v166, %v173
  %v178 = vmul.f32 %v169, %v173
  %v179 = vmul.f32 %v172, %v173
  %v180 = vsub.f32 %v143, %v174
  %v181 = vsub.f32 %v144, %v175
  %v182 = vsub.f32 %v145, %v176
  %v183 = vsub.f32 %v146, %v177
  %v184 = vsub.f32 %v147, %v178
  %v185 = vsub.f32 %v148, %v179
  %v186 = vmul.f32 %v180, %v180
  %v187 = vmul.f32 %v181, %v181
  %v188 = vmul.f32 %v182, %v182
  %v189 = vmul.f32 %v183, %v183
  %v190 = vmul.f32 %v184, %v184
  %v191 = vmul.f32 %v185, %v185
  %v192 = vsel %vm70, %v186, 0.0
  %193 = vadd.xlane.f32.xlu0 %v192
  %v194 = vpop.xlane.xlu0 %193
  %v195 = vsel %vm70, %v187, 0.0
  %196 = vadd.xlane.f32.xlu0 %v195
  %v197 = vpop.xlane.xlu0 %196
  %v198 = vsel %vm70, %v188, 0.0
  %199 = vadd.xlane.f32.xlu0 %v198
  %v200 = vpop.xlane.xlu0 %199
  %v201 = vsel %vm70, %v189, 0.0
  %202 = vadd.xlane.f32.xlu0 %v201
  %v203 = vpop.xlane.xlu0 %202
  %v204 = vsel %vm70, %v190, 0.0
  %205 = vadd.xlane.f32.xlu0 %v204
  %v206 = vpop.xlane.xlu0 %205
  %v207 = vsel %vm70, %v191, 0.0
  %208 = vadd.xlane.f32.xlu0 %v207
  %v209 = vpop.xlane.xlu0 %208
  %v210 = vmul.f32 %v194, %v173
  %v211 = vmul.f32 %v197, %v173
  %v212 = vmul.f32 %v200, %v173
  %v213 = vmul.f32 %v203, %v173
  %v214 = vmul.f32 %v206, %v173
  %v215 = vmul.f32 %v209, %v173
  %v216 = vadd.f32 %v210, 1e-06
  %v217 = vadd.f32 %v211, 1e-06
  %v218 = vadd.f32 %v212, 1e-06
  %v219 = vadd.f32 %v213, 1e-06
  %v220 = vadd.f32 %v214, 1e-06
  %v221 = vadd.f32 %v215, 1e-06
  %v222 = vrsqrt.pop %v216
  %v223 = vrsqrt.pop %v217
  %v224 = vrsqrt.pop %v218
  %v225 = vrsqrt.pop %v219
  %v226 = vrsqrt.pop %v220
  %v227 = vrsqrt.pop %v221
  %v228 = vmul.f32 %v180, %v222
  %v229 = vmul.f32 %v181, %v223
  %v230 = vmul.f32 %v182, %v224
  %v231 = vmul.f32 %v183, %v225
  %v232 = vmul.f32 %v184, %v226
  %v233 = vmul.f32 %v185, %v227
  %v234 = vld [vmem:[%s4] sm:$0x1]
  %v236 = vlaneseq
  %v237 = vshrl.u32 %v236, 7
  %v238 = vsub.s32 0, %v237
  %v239 = vrot.slane %v234, %v238
  %v241 = vmul.f32 %v228, %v239
  %v242 = vmul.f32 %v229, %v239
  %v243 = vmul.f32 %v230, %v239
  %v244 = vmul.f32 %v231, %v239
  %v245 = vmul.f32 %v232, %v239
  %v246 = vmul.f32 %v233, %v239
  %v247 = vld [vmem:[%s5] sm:$0x1]
  %v249 = vlaneseq
  %v250 = vshrl.u32 %v249, 7
  %v251 = vsub.s32 0, %v250
  %v252 = vrot.slane %v247, %v251
  %v254 = vadd.f32 %v241, %v252
  %v255 = vadd.f32 %v242, %v252
  %v256 = vadd.f32 %v243, %v252
  %v257 = vadd.f32 %v244, %v252
  %v258 = vadd.f32 %v245, %v252
  %v259 = vadd.f32 %v246, %v252
  %v260 = vpack.c.bf16 %v255, %v254
  %v261 = vpack.c.bf16 %v257, %v256
  %v262 = vpack.c.bf16 %v259, %v258
  %v266 = vunpack.c.l.b16 %v260
  %v267 = vunpack.c.h.b16 %v260
  %v268 = vunpack.c.l.b16 %v261
  %v269 = vunpack.c.h.b16 %v261
  %v270 = vunpack.c.l.b16 %v262
  %v271 = vunpack.c.h.b16 %v262
  %v272 = vpack.c.b16 %v266, %v266
  %v273 = vpack.c.b16 %v267, %v267
  %v274 = vpack.c.b16 %v268, %v268
  %v275 = vpack.c.b16 %v269, %v269
  %v276 = vpack.c.b16 %v270, %v270
  %v277 = vpack.c.b16 %v271, %v271
  %vm284 = vcmask 257024
  %285 = vst.msk [vmem:[%s7] sm:$0xf] %vm284, %v272
  %286 = vst.msk [vmem:[%s7 + $0x4] sm:$0xf] %vm284, %v273
  %287 = vst.msk [vmem:[%s7 + $0x8] sm:$0xf] %vm284, %v274
  %288 = vst.msk [vmem:[%s7 + $0xc] sm:$0xf] %vm284, %v275
  %289 = vst.msk [vmem:[%s7 + $0x10] sm:$0xf] %vm284, %v276
  %290 = vst.msk [vmem:[%s7 + $0x14] sm:$0xf] %vm284, %v277
  // Predicated region
  $region26: #{vit_feature_extractor.16} parent=0 // pred_check
    _
  $region27: #{vit_feature_extractor.16} parent=0 // pred_check_branch
    %292 = sbr.rel (0) target = $region29
  $region28: #{vit_feature_extractor.16} parent=0 // pred_region
    _
  $region29: #{vit_feature_extractor.16} parent=0 // pred_fallthru
    _
  // Predicated region
  $region30: #{vit_feature_extractor.16} parent=0 // pred_check
    _
  $region31: #{vit_feature_extractor.16} parent=0 // pred_check_branch
    %294 = sbr.rel (0) target = $region33
  $region32: #{vit_feature_extractor.16} parent=0 // pred_region
    _
  $region33: #{vit_feature_extractor.16} parent=0 // pred_fallthru
    _
  // Predicated region
  $region34: #{vit_feature_extractor.16} parent=0 // pred_check
    _
  $region35: #{vit_feature_extractor.16} parent=0 // pred_check_branch
    %296 = sbr.rel (0) target = $region37
  $region36: #{vit_feature_extractor.16} parent=0 // pred_region
    _
  $region37: #{vit_feature_extractor.16} parent=0 // pred_fallthru
    _
  // Predicated region
  $region38: #{vit_feature_extractor.16} parent=0 // pred_check
    _
  $region39: #{vit_feature_extractor.16} parent=0 // pred_check_branch
    %298 = sbr.rel (0) target = $region41
  $region40: #{vit_feature_extractor.16} parent=0 // pred_region
    _
  $region41: #{vit_feature_extractor.16} parent=0 // pred_fallthru
    _

// kernel: vit_feature_extractor.18
$region0: #{vit_feature_extractor.18}
  #allocation0 [shape = 'u32[]', space=smem, size = 0x4, offset = 0x4, fixed_abs, tag = 'smem constant byte address 0x4 - core index']
  #allocation1 [shape = 'u32[144,128]{1,0:T(1,128)}', space=vmem, size = 0x12000, scoped, tag = 'internal scratch']
  %s0 = inlined_call_operand.vmem [shape: bf16[48,128], index: 0, kind: input, shape index: {}]
  %s1 = inlined_call_operand.vmem [shape: bf16[128,32], index: 1, kind: input, shape index: {}]
  %s2 = inlined_call_operand.vmem [shape: f32[1,32], index: 2, kind: input, shape index: {}]
  %s3 = inlined_call_operand.vmem [shape: f32[48,32], index: 3, kind: input, shape index: {}, may-alias: {3,6}]
  %s4 = inlined_call_operand.vmem [shape: f32[1,32], index: 4, kind: input, shape index: {}]
  %s5 = inlined_call_operand.vmem [shape: f32[1,32], index: 5, kind: input, shape index: {}]
  %s6 = inlined_call_operand.vmem [shape: f32[48,32], index: 6, kind: output, shape index: {0}, may-alias: {3,6}]
  %s7 = inlined_call_operand.vmem [shape: bf16[48,32], index: 7, kind: output, shape index: {1}]
  %8 = xla_tuple %s6, %s7
  %s9 = sld [smem:[#allocation0]]
  $region42: #{vit_feature_extractor.18} parent=0
    _
  %s11 = ssub.s32 1, %s9
  %s12 = scalar_select 0, %s11, %s9
  // Predicated region
  $region2: #{vit_feature_extractor.18} parent=0 // pred_check
    _
  $region3: #{vit_feature_extractor.18} parent=0 // pred_check_branch
    %14 = sbr.rel (0) target = $region5
  $region4: #{vit_feature_extractor.18} parent=0 // pred_region
    _
  $region5: #{vit_feature_extractor.18} parent=0 // pred_fallthru
    _
  // Predicated region
  $region6: #{vit_feature_extractor.18} parent=0 // pred_check
    _
  $region7: #{vit_feature_extractor.18} parent=0 // pred_check_branch
    %16 = sbr.rel (0) target = $region9
  $region8: #{vit_feature_extractor.18} parent=0 // pred_region
    _
  $region9: #{vit_feature_extractor.18} parent=0 // pred_fallthru
    _
  // Predicated region
  $region10: #{vit_feature_extractor.18} parent=0 // pred_check
    _
  $region11: #{vit_feature_extractor.18} parent=0 // pred_check_branch
    %18 = sbr.rel (0) target = $region13
  $region12: #{vit_feature_extractor.18} parent=0 // pred_region
    _
  $region13: #{vit_feature_extractor.18} parent=0 // pred_fallthru
    _
  // Predicated region
  $region14: #{vit_feature_extractor.18} parent=0 // pred_check
    _
  $region15: #{vit_feature_extractor.18} parent=0 // pred_check_branch
    %20 = sbr.rel (0) target = $region17
  $region16: #{vit_feature_extractor.18} parent=0 // pred_region
    _
  $region17: #{vit_feature_extractor.18} parent=0 // pred_fallthru
    _
  // Predicated region
  $region18: #{vit_feature_extractor.18} parent=0 // pred_check
    _
  $region19: #{vit_feature_extractor.18} parent=0 // pred_check_branch
    %22 = sbr.rel (0) target = $region21
  $region20: #{vit_feature_extractor.18} parent=0 // pred_region
    _
  $region21: #{vit_feature_extractor.18} parent=0 // pred_fallthru
    _
  // Predicated region
  $region22: #{vit_feature_extractor.18} parent=0 // pred_check
    _
  $region23: #{vit_feature_extractor.18} parent=0 // pred_check_branch
    %24 = sbr.rel (0) target = $region25
  $region24: #{vit_feature_extractor.18} parent=0 // pred_region
    _
  $region25: #{vit_feature_extractor.18} parent=0 // pred_fallthru
    _
  %v26 = vld [vmem:[%s0] sm:$0xf]
  %v27 = vld [vmem:[%s0 + $0x4] sm:$0xf]
  %v28 = vld [vmem:[%s0 + $0x8] sm:$0xf]
  %v29 = vld [vmem:[%s0 + $0xc] sm:$0xf]
  %v30 = vld [vmem:[%s0 + $0x10] sm:$0xf]
  %v31 = vld [vmem:[%s0 + $0x14] sm:$0xf]
  %v32 = vld [vmem:[%s1] sm:$0xf]
  %v33 = vld [vmem:[%s1 + $0x4] sm:$0xf]
  %v34 = vld [vmem:[%s1 + $0x8] sm:$0xf]
  %v35 = vld [vmem:[%s1 + $0xc] sm:$0xf]
  %v36 = vld [vmem:[%s1 + $0x10] sm:$0xf]
  %v37 = vld [vmem:[%s1 + $0x14] sm:$0xf]
  %v38 = vld [vmem:[%s1 + $0x18] sm:$0xf]
  %v39 = vld [vmem:[%s1 + $0x1c] sm:$0xf]
  %v40 = vld [vmem:[%s1 + $0x20] sm:$0xf]
  %v41 = vld [vmem:[%s1 + $0x24] sm:$0xf]
  %v42 = vld [vmem:[%s1 + $0x28] sm:$0xf]
  %v43 = vld [vmem:[%s1 + $0x2c] sm:$0xf]
  %v44 = vld [vmem:[%s1 + $0x30] sm:$0xf]
  %v45 = vld [vmem:[%s1 + $0x34] sm:$0xf]
  %v46 = vld [vmem:[%s1 + $0x38] sm:$0xf]
  %v47 = vld [vmem:[%s1 + $0x3c] sm:$0xf]
  %v48 = vld [vmem:[%s2] sm:$0x1]
  %v50 = vlaneseq
  %v51 = vshrl.u32 %v50, 7
  %v52 = vsub.s32 0, %v51
  %v53 = vrot.slane %v48, %v52
  %v61 = vunpack.c.l.b16 %v26
  %v62 = vunpack.c.l.b16 %v27
  %v63 = vunpack.c.l.b16 %v28
  %v64 = vunpack.c.l.b16 %v29
  %v65 = vunpack.c.l.b16 %v30
  %v66 = vunpack.c.l.b16 %v31
  %v67 = vpack.c.b16 %v62, %v61
  %v68 = vpack.c.b16 %v64, %v63
  %v69 = vpack.c.b16 %v66, %v65
  %v89 = vunpack.c.l.b16 %v32
  %v90 = vunpack.c.l.b16 %v33
  %v91 = vunpack.c.l.b16 %v34
  %v92 = vunpack.c.l.b16 %v35
  %v93 = vunpack.c.l.b16 %v36
  %v94 = vunpack.c.l.b16 %v37
  %v95 = vunpack.c.l.b16 %v38
  %v96 = vunpack.c.l.b16 %v39
  %v97 = vunpack.c.l.b16 %v40
  %v98 = vunpack.c.l.b16 %v41
  %v99 = vunpack.c.l.b16 %v42
  %v100 = vunpack.c.l.b16 %v43
  %v101 = vunpack.c.l.b16 %v44
  %v102 = vunpack.c.l.b16 %v45
  %v103 = vunpack.c.l.b16 %v46
  %v104 = vunpack.c.l.b16 %v47
  %v105 = vpack.c.b16 %v90, %v89
  %v106 = vpack.c.b16 %v92, %v91
  %v107 = vpack.c.b16 %v94, %v93
  %v108 = vpack.c.b16 %v96, %v95
  %v109 = vpack.c.b16 %v98, %v97
  %v110 = vpack.c.b16 %v100, %v99
  %v111 = vpack.c.b16 %v102, %v101
  %v112 = vpack.c.b16 %v104, %v103
  %121 = vmatprep.subr.bf16.mxu0 0
  %122 = vmatpush1.bf16.msra.mxu0 %v105
  %123 = vmatprep.subr.bf16.mxu0 0
  %124 = vmatpush1.bf16.msra.mxu0 %v106
  %125 = vmatprep.subr.bf16.mxu0 0
  %126 = vmatpush1.bf16.msra.mxu0 %v107
  %127 = vmatprep.subr.bf16.mxu0 0
  %128 = vmatpush1.bf16.msra.mxu0 %v108
  %129 = vmatprep.subr.bf16.mxu0 0
  %130 = vmatpush1.bf16.msra.mxu0 %v109
  %131 = vmatprep.subr.bf16.mxu0 0
  %132 = vmatpush1.bf16.msra.mxu0 %v110
  %133 = vmatprep.subr.bf16.mxu0 0
  %134 = vmatpush1.bf16.msra.mxu0 %v111
  %135 = vmatprep.subr.bf16.mxu0 0
  %136 = vmatpush1.bf16.msra.mxu0 %v112
  %137 = vmatprep.subr.bf16.mxu0 0
  %138 = vmatpush1.bf16.msra.mxu0 0
  %139 = vmatprep.subr.bf16.mxu0 0
  %140 = vmatpush1.bf16.msra.mxu0 0
  %141 = vmatprep.subr.bf16.mxu0 0
  %142 = vmatpush1.bf16.msra.mxu0 0
  %143 = vmatprep.subr.bf16.mxu0 0
  %144 = vmatpush1.bf16.msra.mxu0 0
  %145 = vmatprep.subr.bf16.mxu0 0
  %146 = vmatpush1.bf16.msra.mxu0 0
  %147 = vmatprep.subr.bf16.mxu0 0
  %148 = vmatpush1.bf16.msra.mxu0 0
  %149 = vmatprep.subr.bf16.mxu0 0
  %150 = vmatpush1.bf16.msra.mxu0 0
  %151 = vmatprep.subr.bf16.mxu0 0
  %152 = vmatpush1.bf16.msra.mxu0 0
  %153 = vmatprep.mubr.bf16.mxu0 0
  %154 = vmatmul.mubr.bf16.gmra.mrb[0].mxu0 %v67
  %v155 = vpop.f32.mrb[0].mxu0
  %v156 = vadd.f32 %v53, %v155
  %v157 = vpop.f32.mrb[0].mxu0
  %v158 = vpop.f32.mrb[0].mxu0
  %v159 = vadd.f32 %v53, %v158
  %v160 = vpop.f32.mrb[0].mxu0
  %161 = vmatprep.mubr.bf16.mxu0 0
  %162 = vmatmul.mubr.bf16.gmra.mrb[0].mxu0 %v68
  %v163 = vpop.f32.mrb[0].mxu0
  %v164 = vadd.f32 %v53, %v163
  %v165 = vpop.f32.mrb[0].mxu0
  %v166 = vpop.f32.mrb[0].mxu0
  %v167 = vadd.f32 %v53, %v166
  %v168 = vpop.f32.mrb[0].mxu0
  %169 = vmatprep.mubr.bf16.mxu0 0
  %170 = vmatmul.mubr.bf16.gmra.mrb[0].mxu0 %v69
  %v171 = vpop.f32.mrb[0].mxu0
  %v172 = vadd.f32 %v53, %v171
  %v173 = vpop.f32.mrb[0].mxu0
  %v174 = vpop.f32.mrb[0].mxu0
  %v175 = vadd.f32 %v53, %v174
  %v176 = vpop.f32.mrb[0].mxu0
  %177 = vdwg.mxu0
  %v178 = vld [vmem:[%s3] sm:$0xff]
  %v179 = vld [vmem:[%s3 + $0x8] sm:$0xff]
  %v180 = vld [vmem:[%s3 + $0x10] sm:$0xff]
  %v181 = vld [vmem:[%s3 + $0x18] sm:$0xff]
  %v182 = vld [vmem:[%s3 + $0x20] sm:$0xff]
  %v183 = vld [vmem:[%s3 + $0x28] sm:$0xff]
  %v184 = vadd.f32 %v156, %v178
  %v185 = vadd.f32 %v159, %v179
  %v186 = vadd.f32 %v164, %v180
  %v187 = vadd.f32 %v167, %v181
  %v188 = vadd.f32 %v172, %v182
  %v189 = vadd.f32 %v175, %v183
  %vm190 = vcmask 261120
  %191 = vst.msk [vmem:[%s6] sm:$0xff] %vm190, %v184
  %192 = vst.msk [vmem:[%s6 + $0x8] sm:$0xff] %vm190, %v185
  %193 = vst.msk [vmem:[%s6 + $0x10] sm:$0xff] %vm190, %v186
  %194 = vst.msk [vmem:[%s6 + $0x18] sm:$0xff] %vm190, %v187
  %195 = vst.msk [vmem:[%s6 + $0x20] sm:$0xff] %vm190, %v188
  %196 = vst.msk [vmem:[%s6 + $0x28] sm:$0xff] %vm190, %v189
  %v197 = vsel %vm190, %v184, 0.0
  %198 = vadd.xlane.f32.xlu0 %v197
  %v199 = vpop.xlane.xlu0 %198
  %v200 = vsel %vm190, %v185, 0.0
  %201 = vadd.xlane.f32.xlu0 %v200
  %v202 = vpop.xlane.xlu0 %201
  %v203 = vsel %vm190, %v186, 0.0
  %204 = vadd.xlane.f32.xlu0 %v203
  %v205 = vpop.xlane.xlu0 %204
  %v206 = vsel %vm190, %v187, 0.0
  %207 = vadd.xlane.f32.xlu0 %v206
  %v208 = vpop.xlane.xlu0 %207
  %v209 = vsel %vm190, %v188, 0.0
  %210 = vadd.xlane.f32.xlu0 %v209
  %v211 = vpop.xlane.xlu0 %210
  %v212 = vsel %vm190, %v189, 0.0
  %213 = vadd.xlane.f32.xlu0 %v212
  %v214 = vpop.xlane.xlu0 %213
  %v215 = vrcp.pop 32.0
  %v216 = vmul.f32 %v199, %v215
  %v217 = vmul.f32 %v202, %v215
  %v218 = vmul.f32 %v205, %v215
  %v219 = vmul.f32 %v208, %v215
  %v220 = vmul.f32 %v211, %v215
  %v221 = vmul.f32 %v214, %v215
  %v222 = vsub.f32 %v184, %v216
  %v223 = vsub.f32 %v185, %v217
  %v224 = vsub.f32 %v186, %v218
  %v225 = vsub.f32 %v187, %v219
  %v226 = vsub.f32 %v188, %v220
  %v227 = vsub.f32 %v189, %v221
  %v228 = vmul.f32 %v222, %v222
  %v229 = vmul.f32 %v223, %v223
  %v230 = vmul.f32 %v224, %v224
  %v231 = vmul.f32 %v225, %v225
  %v232 = vmul.f32 %v226, %v226
  %v233 = vmul.f32 %v227, %v227
  %v234 = vsel %vm190, %v228, 0.0
  %235 = vadd.xlane.f32.xlu0 %v234
  %v236 = vpop.xlane.xlu0 %235
  %v237 = vsel %vm190, %v229, 0.0
  %238 = vadd.xlane.f32.xlu0 %v237
  %v239 = vpop.xlane.xlu0 %238
  %v240 = vsel %vm190, %v230, 0.0
  %241 = vadd.xlane.f32.xlu0 %v240
  %v242 = vpop.xlane.xlu0 %241
  %v243 = vsel %vm190, %v231, 0.0
  %244 = vadd.xlane.f32.xlu0 %v243
  %v245 = vpop.xlane.xlu0 %244
  %v246 = vsel %vm190, %v232, 0.0
  %247 = vadd.xlane.f32.xlu0 %v246
  %v248 = vpop.xlane.xlu0 %247
  %v249 = vsel %vm190, %v233, 0.0
  %250 = vadd.xlane.f32.xlu0 %v249
  %v251 = vpop.xlane.xlu0 %250
  %v252 = vmul.f32 %v236, %v215
  %v253 = vmul.f32 %v239, %v215
  %v254 = vmul.f32 %v242, %v215
  %v255 = vmul.f32 %v245, %v215
  %v256 = vmul.f32 %v248, %v215
  %v257 = vmul.f32 %v251, %v215
  %v258 = vadd.f32 %v252, 1e-06
  %v259 = vadd.f32 %v253, 1e-06
  %v260 = vadd.f32 %v254, 1e-06
  %v261 = vadd.f32 %v255, 1e-06
  %v262 = vadd.f32 %v256, 1e-06
  %v263 = vadd.f32 %v257, 1e-06
  %v264 = vrsqrt.pop %v258
  %v265 = vrsqrt.pop %v259
  %v266 = vrsqrt.pop %v260
  %v267 = vrsqrt.pop %v261
  %v268 = vrsqrt.pop %v262
  %v269 = vrsqrt.pop %v263
  %v270 = vmul.f32 %v222, %v264
  %v271 = vmul.f32 %v223, %v265
  %v272 = vmul.f32 %v224, %v266
  %v273 = vmul.f32 %v225, %v267
  %v274 = vmul.f32 %v226, %v268
  %v275 = vmul.f32 %v227, %v269
  %v276 = vld [vmem:[%s4] sm:$0x1]
  %v278 = vlaneseq
  %v279 = vshrl.u32 %v278, 7
  %v280 = vsub.s32 0, %v279
  %v281 = vrot.slane %v276, %v280
  %v283 = vmul.f32 %v270, %v281
  %v284 = vmul.f32 %v271, %v281
  %v285 = vmul.f32 %v272, %v281
  %v286 = vmul.f32 %v273, %v281
  %v287 = vmul.f32 %v274, %v281
  %v288 = vmul.f32 %v275, %v281
  %v289 = vld [vmem:[%s5] sm:$0x1]
  %v291 = vlaneseq
  %v292 = vshrl.u32 %v291, 7
  %v293 = vsub.s32 0, %v292
  %v294 = vrot.slane %v289, %v293
  %v296 = vadd.f32 %v283, %v294
  %v297 = vadd.f32 %v284, %v294
  %v298 = vadd.f32 %v285, %v294
  %v299 = vadd.f32 %v286, %v294
  %v300 = vadd.f32 %v287, %v294
  %v301 = vadd.f32 %v288, %v294
  %v302 = vpack.c.bf16 %v297, %v296
  %v303 = vpack.c.bf16 %v299, %v298
  %v304 = vpack.c.bf16 %v301, %v300
  %v308 = vunpack.c.l.b16 %v302
  %v309 = vunpack.c.h.b16 %v302
  %v310 = vunpack.c.l.b16 %v303
  %v311 = vunpack.c.h.b16 %v303
  %v312 = vunpack.c.l.b16 %v304
  %v313 = vunpack.c.h.b16 %v304
  %v314 = vpack.c.b16 %v308, %v308
  %v315 = vpack.c.b16 %v309, %v309
  %v316 = vpack.c.b16 %v310, %v310
  %v317 = vpack.c.b16 %v311, %v311
  %v318 = vpack.c.b16 %v312, %v312
  %v319 = vpack.c.b16 %v313, %v313
  %vm326 = vcmask 257024
  %327 = vst.msk [vmem:[%s7] sm:$0xf] %vm326, %v314
  %328 = vst.msk [vmem:[%s7 + $0x4] sm:$0xf] %vm326, %v315
  %329 = vst.msk [vmem:[%s7 + $0x8] sm:$0xf] %vm326, %v316
  %330 = vst.msk [vmem:[%s7 + $0xc] sm:$0xf] %vm326, %v317
  %331 = vst.msk [vmem:[%s7 + $0x10] sm:$0xf] %vm326, %v318
  %332 = vst.msk [vmem:[%s7 + $0x14] sm:$0xf] %vm326, %v319
  // Predicated region
  $region26: #{vit_feature_extractor.18} parent=0 // pred_check
    _
  $region27: #{vit_feature_extractor.18} parent=0 // pred_check_branch
    %334 = sbr.rel (0) target = $region29
  $region28: #{vit_feature_extractor.18} parent=0 // pred_region
    _
  $region29: #{vit_feature_extractor.18} parent=0 // pred_fallthru
    _
  // Predicated region
  $region30: #{vit_feature_extractor.18} parent=0 // pred_check
    _
  $region31: #{vit_feature_extractor.18} parent=0 // pred_check_branch
    %336 = sbr.rel (0) target = $region33
  $region32: #{vit_feature_extractor.18} parent=0 // pred_region
    _
  $region33: #{vit_feature_extractor.18} parent=0 // pred_fallthru
    _
  // Predicated region
  $region34: #{vit_feature_extractor.18} parent=0 // pred_check
    _
  $region35: #{vit_feature_extractor.18} parent=0 // pred_check_branch
    %338 = sbr.rel (0) target = $region37
  $region36: #{vit_feature_extractor.18} parent=0 // pred_region
    _
  $region37: #{vit_feature_extractor.18} parent=0 // pred_fallthru
    _
  // Predicated region
  $region38: #{vit_feature_extractor.18} parent=0 // pred_check
    _
  $region39: #{vit_feature_extractor.18} parent=0 // pred_check_branch
    %340 = sbr.rel (0) target = $region41
  $region40: #{vit_feature_extractor.18} parent=0 // pred_region
    _
  $region41: #{vit_feature_extractor.18} parent=0 // pred_fallthru
    _

// kernel: vit_feature_extractor.23
$region0: #{vit_feature_extractor.23}
  #allocation0 [shape = 'u32[]', space=smem, size = 0x4, offset = 0x4, fixed_abs, tag = 'smem constant byte address 0x4 - core index']
  #allocation1 [shape = 'u32[144,128]{1,0:T(1,128)}', space=vmem, size = 0x12000, scoped, tag = 'internal scratch']
  %s0 = inlined_call_operand.vmem [shape: bf16[48,128], index: 0, kind: input, shape index: {}]
  %s1 = inlined_call_operand.vmem [shape: bf16[128,32], index: 1, kind: input, shape index: {}]
  %s2 = inlined_call_operand.vmem [shape: f32[1,32], index: 2, kind: input, shape index: {}]
  %s3 = inlined_call_operand.vmem [shape: f32[48,32], index: 3, kind: input, shape index: {}, may-alias: {3,6}]
  %s4 = inlined_call_operand.vmem [shape: f32[1,32], index: 4, kind: input, shape index: {}]
  %s5 = inlined_call_operand.vmem [shape: f32[1,32], index: 5, kind: input, shape index: {}]
  %s6 = inlined_call_operand.vmem [shape: f32[48,32], index: 6, kind: output, shape index: {0}, may-alias: {3,6}]
  %s7 = inlined_call_operand.vmem [shape: f32[48,32], index: 7, kind: output, shape index: {1}]
  %8 = xla_tuple %s6, %s7
  %s9 = sld [smem:[#allocation0]]
  $region42: #{vit_feature_extractor.23} parent=0
    _
  %s11 = ssub.s32 1, %s9
  %s12 = scalar_select 0, %s11, %s9
  // Predicated region
  $region2: #{vit_feature_extractor.23} parent=0 // pred_check
    _
  $region3: #{vit_feature_extractor.23} parent=0 // pred_check_branch
    %14 = sbr.rel (0) target = $region5
  $region4: #{vit_feature_extractor.23} parent=0 // pred_region
    _
  $region5: #{vit_feature_extractor.23} parent=0 // pred_fallthru
    _
  // Predicated region
  $region6: #{vit_feature_extractor.23} parent=0 // pred_check
    _
  $region7: #{vit_feature_extractor.23} parent=0 // pred_check_branch
    %16 = sbr.rel (0) target = $region9
  $region8: #{vit_feature_extractor.23} parent=0 // pred_region
    _
  $region9: #{vit_feature_extractor.23} parent=0 // pred_fallthru
    _
  // Predicated region
  $region10: #{vit_feature_extractor.23} parent=0 // pred_check
    _
  $region11: #{vit_feature_extractor.23} parent=0 // pred_check_branch
    %18 = sbr.rel (0) target = $region13
  $region12: #{vit_feature_extractor.23} parent=0 // pred_region
    _
  $region13: #{vit_feature_extractor.23} parent=0 // pred_fallthru
    _
  // Predicated region
  $region14: #{vit_feature_extractor.23} parent=0 // pred_check
    _
  $region15: #{vit_feature_extractor.23} parent=0 // pred_check_branch
    %20 = sbr.rel (0) target = $region17
  $region16: #{vit_feature_extractor.23} parent=0 // pred_region
    _
  $region17: #{vit_feature_extractor.23} parent=0 // pred_fallthru
    _
  // Predicated region
  $region18: #{vit_feature_extractor.23} parent=0 // pred_check
    _
  $region19: #{vit_feature_extractor.23} parent=0 // pred_check_branch
    %22 = sbr.rel (0) target = $region21
  $region20: #{vit_feature_extractor.23} parent=0 // pred_region
    _
  $region21: #{vit_feature_extractor.23} parent=0 // pred_fallthru
    _
  // Predicated region
  $region22: #{vit_feature_extractor.23} parent=0 // pred_check
    _
  $region23: #{vit_feature_extractor.23} parent=0 // pred_check_branch
    %24 = sbr.rel (0) target = $region25
  $region24: #{vit_feature_extractor.23} parent=0 // pred_region
    _
  $region25: #{vit_feature_extractor.23} parent=0 // pred_fallthru
    _
  %v26 = vld [vmem:[%s0] sm:$0xf]
  %v27 = vld [vmem:[%s0 + $0x4] sm:$0xf]
  %v28 = vld [vmem:[%s0 + $0x8] sm:$0xf]
  %v29 = vld [vmem:[%s0 + $0xc] sm:$0xf]
  %v30 = vld [vmem:[%s0 + $0x10] sm:$0xf]
  %v31 = vld [vmem:[%s0 + $0x14] sm:$0xf]
  %v32 = vld [vmem:[%s1] sm:$0xf]
  %v33 = vld [vmem:[%s1 + $0x4] sm:$0xf]
  %v34 = vld [vmem:[%s1 + $0x8] sm:$0xf]
  %v35 = vld [vmem:[%s1 + $0xc] sm:$0xf]
  %v36 = vld [vmem:[%s1 + $0x10] sm:$0xf]
  %v37 = vld [vmem:[%s1 + $0x14] sm:$0xf]
  %v38 = vld [vmem:[%s1 + $0x18] sm:$0xf]
  %v39 = vld [vmem:[%s1 + $0x1c] sm:$0xf]
  %v40 = vld [vmem:[%s1 + $0x20] sm:$0xf]
  %v41 = vld [vmem:[%s1 + $0x24] sm:$0xf]
  %v42 = vld [vmem:[%s1 + $0x28] sm:$0xf]
  %v43 = vld [vmem:[%s1 + $0x2c] sm:$0xf]
  %v44 = vld [vmem:[%s1 + $0x30] sm:$0xf]
  %v45 = vld [vmem:[%s1 + $0x34] sm:$0xf]
  %v46 = vld [vmem:[%s1 + $0x38] sm:$0xf]
  %v47 = vld [vmem:[%s1 + $0x3c] sm:$0xf]
  %v48 = vld [vmem:[%s2] sm:$0x1]
  %v50 = vlaneseq
  %v51 = vshrl.u32 %v50, 7
  %v52 = vsub.s32 0, %v51
  %v53 = vrot.slane %v48, %v52
  %v61 = vunpack.c.l.b16 %v26
  %v62 = vunpack.c.l.b16 %v27
  %v63 = vunpack.c.l.b16 %v28
  %v64 = vunpack.c.l.b16 %v29
  %v65 = vunpack.c.l.b16 %v30
  %v66 = vunpack.c.l.b16 %v31
  %v67 = vpack.c.b16 %v62, %v61
  %v68 = vpack.c.b16 %v64, %v63
  %v69 = vpack.c.b16 %v66, %v65
  %v89 = vunpack.c.l.b16 %v32
  %v90 = vunpack.c.l.b16 %v33
  %v91 = vunpack.c.l.b16 %v34
  %v92 = vunpack.c.l.b16 %v35
  %v93 = vunpack.c.l.b16 %v36
  %v94 = vunpack.c.l.b16 %v37
  %v95 = vunpack.c.l.b16 %v38
  %v96 = vunpack.c.l.b16 %v39
  %v97 = vunpack.c.l.b16 %v40
  %v98 = vunpack.c.l.b16 %v41
  %v99 = vunpack.c.l.b16 %v42
  %v100 = vunpack.c.l.b16 %v43
  %v101 = vunpack.c.l.b16 %v44
  %v102 = vunpack.c.l.b16 %v45
  %v103 = vunpack.c.l.b16 %v46
  %v104 = vunpack.c.l.b16 %v47
  %v105 = vpack.c.b16 %v90, %v89
  %v106 = vpack.c.b16 %v92, %v91
  %v107 = vpack.c.b16 %v94, %v93
  %v108 = vpack.c.b16 %v96, %v95
  %v109 = vpack.c.b16 %v98, %v97
  %v110 = vpack.c.b16 %v100, %v99
  %v111 = vpack.c.b16 %v102, %v101
  %v112 = vpack.c.b16 %v104, %v103
  %121 = vmatprep.subr.bf16.mxu0 0
  %122 = vmatpush1.bf16.msra.mxu0 %v105
  %123 = vmatprep.subr.bf16.mxu0 0
  %124 = vmatpush1.bf16.msra.mxu0 %v106
  %125 = vmatprep.subr.bf16.mxu0 0
  %126 = vmatpush1.bf16.msra.mxu0 %v107
  %127 = vmatprep.subr.bf16.mxu0 0
  %128 = vmatpush1.bf16.msra.mxu0 %v108
  %129 = vmatprep.subr.bf16.mxu0 0
  %130 = vmatpush1.bf16.msra.mxu0 %v109
  %131 = vmatprep.subr.bf16.mxu0 0
  %132 = vmatpush1.bf16.msra.mxu0 %v110
  %133 = vmatprep.subr.bf16.mxu0 0
  %134 = vmatpush1.bf16.msra.mxu0 %v111
  %135 = vmatprep.subr.bf16.mxu0 0
  %136 = vmatpush1.bf16.msra.mxu0 %v112
  %137 = vmatprep.subr.bf16.mxu0 0
  %138 = vmatpush1.bf16.msra.mxu0 0
  %139 = vmatprep.subr.bf16.mxu0 0
  %140 = vmatpush1.bf16.msra.mxu0 0
  %141 = vmatprep.subr.bf16.mxu0 0
  %142 = vmatpush1.bf16.msra.mxu0 0
  %143 = vmatprep.subr.bf16.mxu0 0
  %144 = vmatpush1.bf16.msra.mxu0 0
  %145 = vmatprep.subr.bf16.mxu0 0
  %146 = vmatpush1.bf16.msra.mxu0 0
  %147 = vmatprep.subr.bf16.mxu0 0
  %148 = vmatpush1.bf16.msra.mxu0 0
  %149 = vmatprep.subr.bf16.mxu0 0
  %150 = vmatpush1.bf16.msra.mxu0 0
  %151 = vmatprep.subr.bf16.mxu0 0
  %152 = vmatpush1.bf16.msra.mxu0 0
  %153 = vmatprep.mubr.bf16.mxu0 0
  %154 = vmatmul.mubr.bf16.gmra.mrb[0].mxu0 %v67
  %v155 = vpop.f32.mrb[0].mxu0
  %v156 = vadd.f32 %v53, %v155
  %v157 = vpop.f32.mrb[0].mxu0
  %v158 = vpop.f32.mrb[0].mxu0
  %v159 = vadd.f32 %v53, %v158
  %v160 = vpop.f32.mrb[0].mxu0
  %161 = vmatprep.mubr.bf16.mxu0 0
  %162 = vmatmul.mubr.bf16.gmra.mrb[0].mxu0 %v68
  %v163 = vpop.f32.mrb[0].mxu0
  %v164 = vadd.f32 %v53, %v163
  %v165 = vpop.f32.mrb[0].mxu0
  %v166 = vpop.f32.mrb[0].mxu0
  %v167 = vadd.f32 %v53, %v166
  %v168 = vpop.f32.mrb[0].mxu0
  %169 = vmatprep.mubr.bf16.mxu0 0
  %170 = vmatmul.mubr.bf16.gmra.mrb[0].mxu0 %v69
  %v171 = vpop.f32.mrb[0].mxu0
  %v172 = vadd.f32 %v53, %v171
  %v173 = vpop.f32.mrb[0].mxu0
  %v174 = vpop.f32.mrb[0].mxu0
  %v175 = vadd.f32 %v53, %v174
  %v176 = vpop.f32.mrb[0].mxu0
  %177 = vdwg.mxu0
  %v178 = vld [vmem:[%s3] sm:$0xff]
  %v179 = vld [vmem:[%s3 + $0x8] sm:$0xff]
  %v180 = vld [vmem:[%s3 + $0x10] sm:$0xff]
  %v181 = vld [vmem:[%s3 + $0x18] sm:$0xff]
  %v182 = vld [vmem:[%s3 + $0x20] sm:$0xff]
  %v183 = vld [vmem:[%s3 + $0x28] sm:$0xff]
  %v184 = vadd.f32 %v156, %v178
  %v185 = vadd.f32 %v159, %v179
  %v186 = vadd.f32 %v164, %v180
  %v187 = vadd.f32 %v167, %v181
  %v188 = vadd.f32 %v172, %v182
  %v189 = vadd.f32 %v175, %v183
  %vm190 = vcmask 261120
  %191 = vst.msk [vmem:[%s6] sm:$0xff] %vm190, %v184
  %192 = vst.msk [vmem:[%s6 + $0x8] sm:$0xff] %vm190, %v185
  %193 = vst.msk [vmem:[%s6 + $0x10] sm:$0xff] %vm190, %v186
  %194 = vst.msk [vmem:[%s6 + $0x18] sm:$0xff] %vm190, %v187
  %195 = vst.msk [vmem:[%s6 + $0x20] sm:$0xff] %vm190, %v188
  %196 = vst.msk [vmem:[%s6 + $0x28] sm:$0xff] %vm190, %v189
  %v197 = vsel %vm190, %v184, 0.0
  %198 = vadd.xlane.f32.xlu0 %v197
  %v199 = vpop.xlane.xlu0 %198
  %v200 = vsel %vm190, %v185, 0.0
  %201 = vadd.xlane.f32.xlu0 %v200
  %v202 = vpop.xlane.xlu0 %201
  %v203 = vsel %vm190, %v186, 0.0
  %204 = vadd.xlane.f32.xlu0 %v203
  %v205 = vpop.xlane.xlu0 %204
  %v206 = vsel %vm190, %v187, 0.0
  %207 = vadd.xlane.f32.xlu0 %v206
  %v208 = vpop.xlane.xlu0 %207
  %v209 = vsel %vm190, %v188, 0.0
  %210 = vadd.xlane.f32.xlu0 %v209
  %v211 = vpop.xlane.xlu0 %210
  %v212 = vsel %vm190, %v189, 0.0
  %213 = vadd.xlane.f32.xlu0 %v212
  %v214 = vpop.xlane.xlu0 %213
  %v215 = vrcp.pop 32.0
  %v216 = vmul.f32 %v199, %v215
  %v217 = vmul.f32 %v202, %v215
  %v218 = vmul.f32 %v205, %v215
  %v219 = vmul.f32 %v208, %v215
  %v220 = vmul.f32 %v211, %v215
  %v221 = vmul.f32 %v214, %v215
  %v222 = vsub.f32 %v184, %v216
  %v223 = vsub.f32 %v185, %v217
  %v224 = vsub.f32 %v186, %v218
  %v225 = vsub.f32 %v187, %v219
  %v226 = vsub.f32 %v188, %v220
  %v227 = vsub.f32 %v189, %v221
  %v228 = vmul.f32 %v222, %v222
  %v229 = vmul.f32 %v223, %v223
  %v230 = vmul.f32 %v224, %v224
  %v231 = vmul.f32 %v225, %v225
  %v232 = vmul.f32 %v226, %v226
  %v233 = vmul.f32 %v227, %v227
  %v234 = vsel %vm190, %v228, 0.0
  %235 = vadd.xlane.f32.xlu0 %v234
  %v236 = vpop.xlane.xlu0 %235
  %v237 = vsel %vm190, %v229, 0.0
  %238 = vadd.xlane.f32.xlu0 %v237
  %v239 = vpop.xlane.xlu0 %238
  %v240 = vsel %vm190, %v230, 0.0
  %241 = vadd.xlane.f32.xlu0 %v240
  %v242 = vpop.xlane.xlu0 %241
  %v243 = vsel %vm190, %v231, 0.0
  %244 = vadd.xlane.f32.xlu0 %v243
  %v245 = vpop.xlane.xlu0 %244
  %v246 = vsel %vm190, %v232, 0.0
  %247 = vadd.xlane.f32.xlu0 %v246
  %v248 = vpop.xlane.xlu0 %247
  %v249 = vsel %vm190, %v233, 0.0
  %250 = vadd.xlane.f32.xlu0 %v249
  %v251 = vpop.xlane.xlu0 %250
  %v252 = vmul.f32 %v236, %v215
  %v253 = vmul.f32 %v239, %v215
  %v254 = vmul.f32 %v242, %v215
  %v255 = vmul.f32 %v245, %v215
  %v256 = vmul.f32 %v248, %v215
  %v257 = vmul.f32 %v251, %v215
  %v258 = vadd.f32 %v252, 1e-06
  %v259 = vadd.f32 %v253, 1e-06
  %v260 = vadd.f32 %v254, 1e-06
  %v261 = vadd.f32 %v255, 1e-06
  %v262 = vadd.f32 %v256, 1e-06
  %v263 = vadd.f32 %v257, 1e-06
  %v264 = vrsqrt.pop %v258
  %v265 = vrsqrt.pop %v259
  %v266 = vrsqrt.pop %v260
  %v267 = vrsqrt.pop %v261
  %v268 = vrsqrt.pop %v262
  %v269 = vrsqrt.pop %v263
  %v270 = vmul.f32 %v222, %v264
  %v271 = vmul.f32 %v223, %v265
  %v272 = vmul.f32 %v224, %v266
  %v273 = vmul.f32 %v225, %v267
  %v274 = vmul.f32 %v226, %v268
  %v275 = vmul.f32 %v227, %v269
  %v276 = vld [vmem:[%s4] sm:$0x1]
  %v278 = vlaneseq
  %v279 = vshrl.u32 %v278, 7
  %v280 = vsub.s32 0, %v279
  %v281 = vrot.slane %v276, %v280
  %v283 = vmul.f32 %v270, %v281
  %v284 = vmul.f32 %v271, %v281
  %v285 = vmul.f32 %v272, %v281
  %v286 = vmul.f32 %v273, %v281
  %v287 = vmul.f32 %v274, %v281
  %v288 = vmul.f32 %v275, %v281
  %v289 = vld [vmem:[%s5] sm:$0x1]
  %v291 = vlaneseq
  %v292 = vshrl.u32 %v291, 7
  %v293 = vsub.s32 0, %v292
  %v294 = vrot.slane %v289, %v293
  %v296 = vadd.f32 %v283, %v294
  %v297 = vadd.f32 %v284, %v294
  %v298 = vadd.f32 %v285, %v294
  %v299 = vadd.f32 %v286, %v294
  %v300 = vadd.f32 %v287, %v294
  %v301 = vadd.f32 %v288, %v294
  %302 = vst.msk [vmem:[%s7] sm:$0xff] %vm190, %v296
  %303 = vst.msk [vmem:[%s7 + $0x8] sm:$0xff] %vm190, %v297
  %304 = vst.msk [vmem:[%s7 + $0x10] sm:$0xff] %vm190, %v298
  %305 = vst.msk [vmem:[%s7 + $0x18] sm:$0xff] %vm190, %v299
  %306 = vst.msk [vmem:[%s7 + $0x20] sm:$0xff] %vm190, %v300
  %307 = vst.msk [vmem:[%s7 + $0x28] sm:$0xff] %vm190, %v301
  // Predicated region
  $region26: #{vit_feature_extractor.23} parent=0 // pred_check
    _
  $region27: #{vit_feature_extractor.23} parent=0 // pred_check_branch
    %309 = sbr.rel (0) target = $region29
  $region28: #{vit_feature_extractor.23} parent=0 // pred_region
    _
  $region29: #{vit_feature_extractor.23} parent=0 // pred_fallthru
    _
  // Predicated region
  $region30: #{vit_feature_extractor.23} parent=0 // pred_check
    _
  $region31: #{vit_feature_extractor.23} parent=0 // pred_check_branch
    %311 = sbr.rel (0) target = $region33
  $region32: #{vit_feature_extractor.23} parent=0 // pred_region
    _
  $region33: #{vit_feature_extractor.23} parent=0 // pred_fallthru
    _
  // Predicated region
  $region34: #{vit_feature_extractor.23} parent=0 // pred_check
    _
  $region35: #{vit_feature_extractor.23} parent=0 // pred_check_branch
    %313 = sbr.rel (0) target = $region37
  $region36: #{vit_feature_extractor.23} parent=0 // pred_region
    _
  $region37: #{vit_feature_extractor.23} parent=0 // pred_fallthru
    _
  // Predicated region
  $region38: #{vit_feature_extractor.23} parent=0 // pred_check
    _
  $region39: #{vit_feature_extractor.23} parent=0 // pred_check_branch
    %315 = sbr.rel (0) target = $region41
  $region40: #{vit_feature_extractor.23} parent=0 // pred_region
    _
  $region41: #{vit_feature_extractor.23} parent=0 // pred_fallthru
    _

</llo_original>
